<compile_context>
chip_gen: v5e
topology: v5e:2x2
jax: 0.10.0
libtpu: 0.0.40
codegen_flags: <defaults>
</compile_context>

<pallas_src>
import jax
import jax.numpy as jnp
from jax.experimental import pallas as pl
from jax.experimental.pallas import tpu as pltpu


_LANE = 128           # lane width (last-dim tiling unit)
_PREF_TILE = 512      # preferred tile edge (multiple of 128)


def _round_up(x, m):
    return ((x + m - 1) // m) * m


def _pick_tile(n, pref=_PREF_TILE):
    """Largest useful tile: whole (128-padded) axis if small, else `pref`."""
    n128 = _round_up(n, _LANE)
    return n128 if n128 <= pref else pref


def _vmem_limit_bytes():
    """Generation-aware scoped-VMEM limit (~75% of physical, capped)."""
    try:
        cap = int(pltpu.get_tpu_info().vmem_capacity_bytes)
    except Exception:
        cap = 64 * 1024 * 1024
    return int(max(32 * 1024 * 1024, min((cap * 3) // 4, 96 * 1024 * 1024)))


_VMEM_LIMIT = _vmem_limit_bytes()


# ----------------------------------------------------------------------------
# Kernel 1: normalized bipartite operator
#   S[u, i] = sum_r adj_r[u, i] / (deg_u_r[u] * deg_i_r[i])
# built tile-by-tile from a bf16 adjacency; the (R, U, I) normalized temp
# never touches HBM.
# ----------------------------------------------------------------------------
def _norm_s_kernel(adj_ref, inv_du_ref, inv_di_ref, s_ref):
    a = adj_ref[...].astype(jnp.float32)                 # (R, tu, ti) upcast in-reg
    scaled = a * inv_du_ref[...] * inv_di_ref[...]       # rank-1 scaling per type
    s_ref[...] = jnp.sum(scaled, axis=0).astype(s_ref.dtype)


def build_norm_operator(adj_p, *, tu, ti):
    """adj_p: (R, U_pad, I_pad) bf16 (zero padded). Returns S (U_pad, I_pad) bf16."""
    r, u_pad, i_pad = adj_p.shape
    # Degree reductions on the bf16 copy with f32 accumulation (exact for 0/1).
    # TODO(synk): fold the degree pass into a Pallas pre-pass so adj is read
    # from HBM only once total (partial-degree accumulation + normalize).
    inv_du = (1.0 / jnp.maximum(jnp.sum(adj_p, axis=2, dtype=jnp.float32), 1.0)
              )[:, :, None]                                            # (R,U,1)
    inv_di = (1.0 / jnp.maximum(jnp.sum(adj_p, axis=1, dtype=jnp.float32), 1.0)
              )[:, None, :]                                            # (R,1,I)
    return pl.pallas_call(
        _norm_s_kernel,
        out_shape=jax.ShapeDtypeStruct((u_pad, i_pad), jnp.bfloat16),
        grid_spec=pltpu.PrefetchScalarGridSpec(
            num_scalar_prefetch=0,
            grid=(u_pad // tu, i_pad // ti),
            in_specs=[
                pl.BlockSpec((r, tu, ti), lambda i, j: (0, i, j)),
                pl.BlockSpec((r, tu, 1), lambda i, j: (0, i, 0)),
                pl.BlockSpec((r, 1, ti), lambda i, j: (0, 0, j)),
            ],
            out_specs=pl.BlockSpec((tu, ti), lambda i, j: (i, j)),
        ),
        compiler_params=pltpu.CompilerParams(
            dimension_semantics=("parallel", "parallel"),
            vmem_limit_bytes=_VMEM_LIMIT,
        ),
    )(adj_p, inv_du, inv_di)


# ----------------------------------------------------------------------------
# Kernel 2a / 2b: the two encoder matmuls, each a canonical tiled matmul with a
# VMEM f32 accumulator, reduction axis innermost, outer axis "parallel"
# (megacore-shardable on v7x).  Each output block is written to HBM exactly
# once.
# ----------------------------------------------------------------------------
def _matmul_nn_kernel(s_ref, f_ref, o_ref, acc_ref):
    # o[u, :] += S[u, k] @ f[k, :]   (contraction on S's lane dim)
    @pl.when(pl.program_id(1) == 0)
    def _():
        acc_ref[...] = jnp.zeros_like(acc_ref)

    acc_ref[...] += jnp.dot(s_ref[...], f_ref[...],
                            preferred_element_type=jnp.float32)

    @pl.when(pl.program_id(1) == pl.num_programs(1) - 1)
    def _():
        o_ref[...] = acc_ref[...].astype(o_ref.dtype)


def _matmul_tn_kernel(s_ref, f_ref, o_ref, acc_ref):
    # o[i, :] += S[k, i]^T @ f[k, :]  (contraction on S's sublane dim; this is
    # the pl.dot(..., trans_a=True) form — no S^T is ever materialized in HBM).
    @pl.when(pl.program_id(1) == 0)
    def _():
        acc_ref[...] = jnp.zeros_like(acc_ref)

    acc_ref[...] += jax.lax.dot_general(
        s_ref[...], f_ref[...],
        dimension_numbers=(((0,), (0,)), ((), ())),
        preferred_element_type=jnp.float32)

    @pl.when(pl.program_id(1) == pl.num_programs(1) - 1)
    def _():
        o_ref[...] = acc_ref[...].astype(o_ref.dtype)


def encoder_layer(s, ufeats, ifeats, *, tu, ti):
    """One LightGCN layer: (S @ ifeats, S^T @ ufeats)."""
    u_pad, i_pad = s.shape
    d_pad = ufeats.shape[1]

    u_new = pl.pallas_call(
        _matmul_nn_kernel,
        out_shape=jax.ShapeDtypeStruct((u_pad, d_pad), jnp.bfloat16),
        grid_spec=pltpu.PrefetchScalarGridSpec(
            num_scalar_prefetch=0,
            grid=(u_pad // tu, i_pad // ti),
            in_specs=[
                pl.BlockSpec((tu, ti), lambda u, k: (u, k)),       # S tile
                pl.BlockSpec((ti, d_pad), lambda u, k: (k, 0)),    # ifeats tile
            ],
            out_specs=pl.BlockSpec((tu, d_pad), lambda u, k: (u, 0)),
            scratch_shapes=[pltpu.VMEM((tu, d_pad), jnp.float32)],
        ),
        compiler_params=pltpu.CompilerParams(
            dimension_semantics=("parallel", "arbitrary"),
            vmem_limit_bytes=_VMEM_LIMIT,
        ),
    )(s, ifeats)

    i_new = pl.pallas_call(
        _matmul_tn_kernel,
        out_shape=jax.ShapeDtypeStruct((i_pad, d_pad), jnp.bfloat16),
        grid_spec=pltpu.PrefetchScalarGridSpec(
            num_scalar_prefetch=0,
            grid=(i_pad // ti, u_pad // tu),
            in_specs=[
                pl.BlockSpec((tu, ti), lambda i, k: (k, i)),       # S tile
                pl.BlockSpec((tu, d_pad), lambda i, k: (k, 0)),    # ufeats tile
            ],
            out_specs=pl.BlockSpec((ti, d_pad), lambda i, k: (i, 0)),
            scratch_shapes=[pltpu.VMEM((ti, d_pad), jnp.float32)],
        ),
        compiler_params=pltpu.CompilerParams(
            dimension_semantics=("parallel", "arbitrary"),
            vmem_limit_bytes=_VMEM_LIMIT,
        ),
    )(s, ufeats)

    return u_new, i_new


# ----------------------------------------------------------------------------
# Kernel 3: basis-decomposed bilinear decoder, tiled over edges.
#   logits[e, c] = sum_b W[b, c] * (u_e[e] @ P_b @ i_e[e])
# ----------------------------------------------------------------------------
def _decoder_kernel(u_ref, i_ref, p_ref, w_ref, o_ref):
    d_pad = u_ref.shape[1]
    n_basis = p_ref.shape[1] // d_pad

    # One wide MXU matmul covering every basis matrix: (tE, D) @ (D, B*D).
    t = jnp.dot(u_ref[...], p_ref[...],
                preferred_element_type=jnp.float32)        # (tE, B*D) f32
    iv = i_ref[...].astype(jnp.float32)                    # (tE, D)
    w = w_ref[...]                                         # (B, C_pad) f32

    acc = jnp.zeros((u_ref.shape[0], w_ref.shape[1]), jnp.float32)
    for b in range(n_basis):                               # static, tiny unroll
        s_b = jnp.sum(t[:, b * d_pad:(b + 1) * d_pad] * iv,
                      axis=-1, keepdims=True)              # (tE, 1) XLU lane-reduce
        acc = acc + s_b * w[b:b + 1, :]                    # VPU broadcast combine
    o_ref[...] = acc                                       # lane-dense (tE, 128)


def bilinear_decode(u_e, i_e, pflat, wpad, *, te):
    e_pad, d_pad = u_e.shape
    n_basis, c_pad = wpad.shape
    return pl.pallas_call(
        _decoder_kernel,
        out_shape=jax.ShapeDtypeStruct((e_pad, c_pad), jnp.float32),
        grid_spec=pltpu.PrefetchScalarGridSpec(
            num_scalar_prefetch=0,
            grid=(e_pad // te,),
            in_specs=[
                pl.BlockSpec((te, d_pad), lambda e: (e, 0)),
                pl.BlockSpec((te, d_pad), lambda e: (e, 0)),
                pl.BlockSpec((d_pad, n_basis * d_pad), lambda e: (0, 0)),  # resident
                pl.BlockSpec((n_basis, c_pad), lambda e: (0, 0)),          # resident
            ],
            out_specs=pl.BlockSpec((te, c_pad), lambda e: (e, 0)),
        ),
        compiler_params=pltpu.CompilerParams(
            dimension_semantics=("parallel",),
            vmem_limit_bytes=_VMEM_LIMIT,
        ),
    )(u_e, i_e, pflat, wpad)


# ----------------------------------------------------------------------------
# LightGCN forward (glue in plain JAX, hot paths in Pallas)
# ----------------------------------------------------------------------------
def lightgcn_forward(adj, ufeats, ifeats, edge_u, edge_i, basis, combine,
                     n_layers):
    r, n_users, n_items = adj.shape
    feats_dim = ufeats.shape[1]
    n_basis = basis.shape[0]
    n_classes = combine.shape[1]
    n_edges = edge_u.shape[0]

    # Tile choice: whole axis when small, else 512 (multiple of 128).
    tu = _pick_tile(n_users)
    ti = _pick_tile(n_items)
    te = _pick_tile(n_edges)

    d_pad = _round_up(feats_dim, _LANE)
    c_pad = _round_up(n_classes, _LANE)
    u_pad = _round_up(n_users, tu)
    i_pad = _round_up(n_items, ti)
    e_pad = _round_up(n_edges, te)

    # Zero padding is mathematically inert (zero rows/cols/classes).
    # Adjacency carried in bf16 (largest HBM tensor; norm kernel is mem-bound).
    adj_p = jnp.pad(adj, ((0, 0), (0, u_pad - n_users), (0, i_pad - n_items))
                    ).astype(jnp.bfloat16)
    uf = jnp.pad(ufeats, ((0, u_pad - n_users), (0, d_pad - feats_dim))
                 ).astype(jnp.bfloat16)
    itf = jnp.pad(ifeats, ((0, i_pad - n_items), (0, d_pad - feats_dim))
                  ).astype(jnp.bfloat16)
    basis_p = jnp.pad(basis,
                      ((0, 0), (0, d_pad - feats_dim), (0, d_pad - feats_dim)))
    pflat = jnp.transpose(basis_p, (1, 0, 2)).reshape(
        d_pad, n_basis * d_pad).astype(jnp.bfloat16)
    wpad = jnp.pad(combine.astype(jnp.float32), ((0, 0), (0, c_pad - n_classes)))

    # (1) normalized operator, tile-built, bf16 in HBM.
    s = build_norm_operator(adj_p, tu=tu, ti=ti)

    # (2) encoder stack (the reference's `encode` returns the LAST layer).
    for _ in range(n_layers):
        uf, itf = encoder_layer(s, uf, itf, tu=tu, ti=ti)

    # (3) gather decode-graph endpoints.
    # TODO(synk): fuse this gather into the decoder pipeline (scalar-prefetch
    # driven row DMA) instead of materializing (E, D) tensors via XLA.
    eu = jnp.pad(edge_u, (0, e_pad - n_edges))
    ei = jnp.pad(edge_i, (0, e_pad - n_edges))
    u_e = jnp.take(uf, eu, axis=0)
    i_e = jnp.take(itf, ei, axis=0)

    logits = bilinear_decode(u_e, i_e, pflat, wpad, te=te)
    return logits[:n_edges, :n_classes]


# ----------------------------------------------------------------------------
# Plain-JAX reference (same bf16 operands / f32 accumulation) for sanity check
# ----------------------------------------------------------------------------
def reference_forward(adj, ufeats, ifeats, edge_u, edge_i, basis, combine,
                      n_layers):
    inv_du = 1.0 / jnp.maximum(adj.sum(axis=2), 1.0)
    inv_di = 1.0 / jnp.maximum(adj.sum(axis=1), 1.0)
    s = jnp.sum(adj * inv_du[:, :, None] * inv_di[:, None, :], axis=0
                ).astype(jnp.bfloat16)
    uf = ufeats.astype(jnp.bfloat16)
    itf = ifeats.astype(jnp.bfloat16)
    for _ in range(n_layers):
        u_new = jnp.dot(s, itf, preferred_element_type=jnp.float32
                        ).astype(jnp.bfloat16)
        i_new = jnp.dot(s.T, uf, preferred_element_type=jnp.float32
                        ).astype(jnp.bfloat16)
        uf, itf = u_new, i_new
    ue = jnp.take(uf, edge_u, axis=0).astype(jnp.float32)
    ie = jnp.take(itf, edge_i, axis=0).astype(jnp.float32)
    b_bf = basis.astype(jnp.bfloat16).astype(jnp.float32)
    scores = jnp.einsum("ed,bdf,ef->eb", ue, b_bf, ie)
    return scores @ combine


# ----------------------------------------------------------------------------
# Example
# ----------------------------------------------------------------------------
if __name__ == "__main__":
    key = jax.random.PRNGKey(0)
    k_adj, k_u, k_i, k_eu, k_ei, k_p, k_w = jax.random.split(key, 7)

    n_layers = 2
    n_edge_types = 3          # == n_classes
    feats_dim = 32
    n_basis = 2
    n_users, n_items = 256, 384
    n_dec_edges = 500

    # Dense per-edge-type adjacency (bipartite), ~30% density.
    adj = (jax.random.uniform(k_adj, (n_edge_types, n_users, n_items)) < 0.3
           ).astype(jnp.float32)
    ufeats = jax.random.normal(k_u, (n_users, feats_dim), dtype=jnp.float32)
    ifeats = jax.random.normal(k_i, (n_items, feats_dim), dtype=jnp.float32)

    # Decode-graph edges (user index, item index) per edge.
    edge_u = jax.random.randint(k_eu, (n_dec_edges,), 0, n_users)
    edge_i = jax.random.randint(k_ei, (n_dec_edges,), 0, n_items)

    # Bilinear decoder parameters (deterministic init).
    basis = 0.1 * jax.random.normal(
        k_p, (n_basis, feats_dim, feats_dim), dtype=jnp.float32)
    combine = 0.1 * jax.random.normal(
        k_w, (n_basis, n_edge_types), dtype=jnp.float32)

    fwd = jax.jit(lightgcn_forward, static_argnames=("n_layers",))
    pred = fwd(adj, ufeats, ifeats, edge_u, edge_i, basis, combine,
               n_layers=n_layers)
    pred = jax.block_until_ready(pred)
    assert pred.shape == (n_dec_edges, n_edge_types)

    # Numerical sanity check against the same-precision plain-JAX reference.
    ref = reference_forward(adj, ufeats, ifeats, edge_u, edge_i, basis,
                            combine, n_layers)
    err = float(jnp.max(jnp.abs(pred - ref)))
    scale = float(jnp.max(jnp.abs(ref))) + 1e-12
    assert err <= 0.1 * scale, f"max|err|={err:.3e} vs scale={scale:.3e}"
    print("KERNEL_OK")
</pallas_src>

<mosaic_0001>
module attributes {stable_mosaic.version = 11 : i64} {
  func.func @_matmul_nn_kernel(%arg0: i32, %arg1: i32, %arg2: memref<256x384xbf16, #tpu.memory_space<vmem>>, %arg3: memref<384x128xbf16, #tpu.memory_space<vmem>>, %arg4: memref<256x128xbf16, #tpu.memory_space<vmem>>, %arg5: memref<256x128xf32, #tpu.memory_space<vmem>>) attributes {dimension_semantics = [#tpu.dimension_semantics<parallel>, #tpu.dimension_semantics<arbitrary>], iteration_bounds = array<i64: 1, 1>, scalar_prefetch = 0 : i64, scratch_operands = 1 : i64, tpu.core_type = #tpu.core_type<tc>, window_params = [{transform_indices = @transform_0, window_bounds = array<i64: 256, 384>}, {transform_indices = @transform_1, window_bounds = array<i64: 384, 128>}, {transform_indices = @transform_2, window_bounds = array<i64: 256, 128>}]} {
    %c0_i32 = arith.constant 0 : i32
    %0 = arith.cmpi eq, %arg1, %c0_i32 : i32
    %1 = arith.extui %0 : i1 to i32
    %c0_i32_0 = arith.constant 0 : i32
    %2 = arith.cmpi ne, %1, %c0_i32_0 : i32
    scf.if %2 {
      %cst_10 = arith.constant 0.000000e+00 : f32
      %12 = vector.broadcast %cst_10 : f32 to vector<256x128xf32>
      %c0_11 = arith.constant 0 : index
      %c0_12 = arith.constant 0 : index
      %13 = vector.load %arg5[%c0_11, %c0_12] : memref<256x128xf32, #tpu.memory_space<vmem>>, vector<256x128xf32>
      tpu.vector_store %arg5[%c0_11, %c0_12], %12 {strides = array<i32>} : memref<256x128xf32, #tpu.memory_space<vmem>>, vector<256x128xf32>,
    } else {
    }
    %c0 = arith.constant 0 : index
    %c0_1 = arith.constant 0 : index
    %3 = vector.load %arg5[%c0, %c0_1] : memref<256x128xf32, #tpu.memory_space<vmem>>, vector<256x128xf32>
    %c0_2 = arith.constant 0 : index
    %c0_3 = arith.constant 0 : index
    %4 = vector.load %arg2[%c0_2, %c0_3] : memref<256x384xbf16, #tpu.memory_space<vmem>>, vector<256x384xbf16>
    %c0_4 = arith.constant 0 : index
    %c0_5 = arith.constant 0 : index
    %5 = vector.load %arg3[%c0_4, %c0_5] : memref<384x128xbf16, #tpu.memory_space<vmem>>, vector<384x128xbf16>
    %cst = arith.constant dense<0.000000e+00> : vector<256x128xf32>
    %6 = tpu.matmul %4, %5, %cst {dimension_numbers = #tpu.dot_dimension_numbers<[1], [0], [0], [1], [0, 0, 1, 1], [], []>} : vector<256x384xbf16>, vector<384x128xbf16>, vector<256x128xf32> -> vector<256x128xf32>
    %7 = arith.addf %3, %6 : vector<256x128xf32>
    %c0_6 = arith.constant 0 : index
    %c0_7 = arith.constant 0 : index
    %8 = vector.load %arg5[%c0_6, %c0_7] : memref<256x128xf32, #tpu.memory_space<vmem>>, vector<256x128xf32>
    tpu.vector_store %arg5[%c0_6, %c0_7], %7 {strides = array<i32>} : memref<256x128xf32, #tpu.memory_space<vmem>>, vector<256x128xf32>,
    %c0_i32_8 = arith.constant 0 : i32
    %9 = arith.cmpi eq, %arg1, %c0_i32_8 : i32
    %10 = arith.extui %9 : i1 to i32
    %c0_i32_9 = arith.constant 0 : i32
    %11 = arith.cmpi ne, %10, %c0_i32_9 : i32
    scf.if %11 {
      %c0_10 = arith.constant 0 : index
      %c0_11 = arith.constant 0 : index
      %12 = vector.load %arg5[%c0_10, %c0_11] : memref<256x128xf32, #tpu.memory_space<vmem>>, vector<256x128xf32>
      %13 = arith.truncf %12 : vector<256x128xf32> to vector<256x128xbf16>
      %c0_12 = arith.constant 0 : index
      %c0_13 = arith.constant 0 : index
      %14 = vector.load %arg4[%c0_12, %c0_13] : memref<256x128xbf16, #tpu.memory_space<vmem>>, vector<256x128xbf16>
      tpu.vector_store %arg4[%c0_12, %c0_13], %13 {strides = array<i32>} : memref<256x128xbf16, #tpu.memory_space<vmem>>, vector<256x128xbf16>,
    } else {
    }
    return
  }
  func.func @transform_0(%arg0: i32, %arg1: i32) -> (i32, i32) {
    %c0_i32 = arith.constant 0 : i32
    return %arg0, %arg1 : i32, i32
  }
  func.func @transform_1(%arg0: i32, %arg1: i32) -> (i32, i32) {
    %c0_i32 = arith.constant 0 : i32
    %c0_i32_0 = arith.constant 0 : i32
    return %arg1, %c0_i32 : i32, i32
  }
  func.func @transform_2(%arg0: i32, %arg1: i32) -> (i32, i32) {
    %c0_i32 = arith.constant 0 : i32
    %c0_i32_0 = arith.constant 0 : i32
    return %arg0, %c0_i32 : i32, i32
  }
}

module attributes {stable_mosaic.version = 11 : i64} {
  func.func @_norm_s_kernel(%arg0: i32, %arg1: i32, %arg2: memref<3x256x384xbf16, #tpu.memory_space<vmem>>, %arg3: memref<3x256x1xf32, #tpu.memory_space<vmem>>, %arg4: memref<3x1x384xf32, #tpu.memory_space<vmem>>, %arg5: memref<256x384xbf16, #tpu.memory_space<vmem>>) attributes {dimension_semantics = [#tpu.dimension_semantics<parallel>, #tpu.dimension_semantics<parallel>], iteration_bounds = array<i64: 1, 1>, scalar_prefetch = 0 : i64, scratch_operands = 0 : i64, tpu.core_type = #tpu.core_type<tc>, window_params = [{transform_indices = @transform_0, window_bounds = array<i64: 3, 256, 384>}, {transform_indices = @transform_1, window_bounds = array<i64: 3, 256, 1>}, {transform_indices = @transform_2, window_bounds = array<i64: 3, 1, 384>}, {transform_indices = @transform_3, window_bounds = array<i64: 256, 384>}]} {
    %c0 = arith.constant 0 : index
    %c0_0 = arith.constant 0 : index
    %c0_1 = arith.constant 0 : index
    %0 = vector.load %arg2[%c0, %c0_0, %c0_1] : memref<3x256x384xbf16, #tpu.memory_space<vmem>>, vector<3x256x384xbf16>
    %1 = arith.extf %0 : vector<3x256x384xbf16> to vector<3x256x384xf32>
    %c0_2 = arith.constant 0 : index
    %c0_3 = arith.constant 0 : index
    %c0_4 = arith.constant 0 : index
    %2 = vector.load %arg3[%c0_2, %c0_3, %c0_4] : memref<3x256x1xf32, #tpu.memory_space<vmem>>, vector<3x256x1xf32>
    %3 = vector.broadcast %2 : vector<3x256x1xf32> to vector<3x256x384xf32>
    %4 = arith.mulf %1, %3 : vector<3x256x384xf32>
    %c0_5 = arith.constant 0 : index
    %c0_6 = arith.constant 0 : index
    %c0_7 = arith.constant 0 : index
    %5 = vector.load %arg4[%c0_5, %c0_6, %c0_7] : memref<3x1x384xf32, #tpu.memory_space<vmem>>, vector<3x1x384xf32>
    %6 = vector.broadcast %5 : vector<3x1x384xf32> to vector<3x256x384xf32>
    %7 = arith.mulf %4, %6 : vector<3x256x384xf32>
    %cst = arith.constant dense<0.000000e+00> : vector<256x384xf32>
    %8 = vector.multi_reduction <add>, %7, %cst [0] : vector<3x256x384xf32> to vector<256x384xf32>
    %9 = arith.truncf %8 : vector<256x384xf32> to vector<256x384xbf16>
    %c0_8 = arith.constant 0 : index
    %c0_9 = arith.constant 0 : index
    %10 = vector.load %arg5[%c0_8, %c0_9] : memref<256x384xbf16, #tpu.memory_space<vmem>>, vector<256x384xbf16>
    tpu.vector_store %arg5[%c0_8, %c0_9], %9 {strides = array<i32>} : memref<256x384xbf16, #tpu.memory_space<vmem>>, vector<256x384xbf16>,
    return
  }
  func.func @transform_0(%arg0: i32, %arg1: i32) -> (i32, i32, i32) {
    %c0_i32 = arith.constant 0 : i32
    %c0_i32_0 = arith.constant 0 : i32
    return %c0_i32, %arg0, %arg1 : i32, i32, i32
  }
  func.func @transform_1(%arg0: i32, %arg1: i32) -> (i32, i32, i32) {
    %c0_i32 = arith.constant 0 : i32
    %c0_i32_0 = arith.constant 0 : i32
    %c0_i32_1 = arith.constant 0 : i32
    return %c0_i32, %arg0, %c0_i32_0 : i32, i32, i32
  }
  func.func @transform_2(%arg0: i32, %arg1: i32) -> (i32, i32, i32) {
    %c0_i32 = arith.constant 0 : i32
    %c0_i32_0 = arith.constant 0 : i32
    %c0_i32_1 = arith.constant 0 : i32
    return %c0_i32, %c0_i32_0, %arg1 : i32, i32, i32
  }
  func.func @transform_3(%arg0: i32, %arg1: i32) -> (i32, i32) {
    %c0_i32 = arith.constant 0 : i32
    return %arg0, %arg1 : i32, i32
  }
}

module attributes {stable_mosaic.version = 11 : i64} {
  func.func @_matmul_tn_kernel(%arg0: i32, %arg1: i32, %arg2: memref<256x384xbf16, #tpu.memory_space<vmem>>, %arg3: memref<256x128xbf16, #tpu.memory_space<vmem>>, %arg4: memref<384x128xbf16, #tpu.memory_space<vmem>>, %arg5: memref<384x128xf32, #tpu.memory_space<vmem>>) attributes {dimension_semantics = [#tpu.dimension_semantics<parallel>, #tpu.dimension_semantics<arbitrary>], iteration_bounds = array<i64: 1, 1>, scalar_prefetch = 0 : i64, scratch_operands = 1 : i64, tpu.core_type = #tpu.core_type<tc>, window_params = [{transform_indices = @transform_0, window_bounds = array<i64: 256, 384>}, {transform_indices = @transform_1, window_bounds = array<i64: 256, 128>}, {transform_indices = @transform_2, window_bounds = array<i64: 384, 128>}]} {
    %c0_i32 = arith.constant 0 : i32
    %0 = arith.cmpi eq, %arg1, %c0_i32 : i32
    %1 = arith.extui %0 : i1 to i32
    %c0_i32_0 = arith.constant 0 : i32
    %2 = arith.cmpi ne, %1, %c0_i32_0 : i32
    scf.if %2 {
      %cst_10 = arith.constant 0.000000e+00 : f32
      %12 = vector.broadcast %cst_10 : f32 to vector<384x128xf32>
      %c0_11 = arith.constant 0 : index
      %c0_12 = arith.constant 0 : index
      %13 = vector.load %arg5[%c0_11, %c0_12] : memref<384x128xf32, #tpu.memory_space<vmem>>, vector<384x128xf32>
      tpu.vector_store %arg5[%c0_11, %c0_12], %12 {strides = array<i32>} : memref<384x128xf32, #tpu.memory_space<vmem>>, vector<384x128xf32>,
    } else {
    }
    %c0 = arith.constant 0 : index
    %c0_1 = arith.constant 0 : index
    %3 = vector.load %arg5[%c0, %c0_1] : memref<384x128xf32, #tpu.memory_space<vmem>>, vector<384x128xf32>
    %c0_2 = arith.constant 0 : index
    %c0_3 = arith.constant 0 : index
    %4 = vector.load %arg2[%c0_2, %c0_3] : memref<256x384xbf16, #tpu.memory_space<vmem>>, vector<256x384xbf16>
    %c0_4 = arith.constant 0 : index
    %c0_5 = arith.constant 0 : index
    %5 = vector.load %arg3[%c0_4, %c0_5] : memref<256x128xbf16, #tpu.memory_space<vmem>>, vector<256x128xbf16>
    %cst = arith.constant dense<0.000000e+00> : vector<384x128xf32>
    %6 = tpu.matmul %4, %5, %cst {dimension_numbers = #tpu.dot_dimension_numbers<[0], [0], [1], [1], [0, 1, 1, 1], [], []>} : vector<256x384xbf16>, vector<256x128xbf16>, vector<384x128xf32> -> vector<384x128xf32>
    %7 = arith.addf %3, %6 : vector<384x128xf32>
    %c0_6 = arith.constant 0 : index
    %c0_7 = arith.constant 0 : index
    %8 = vector.load %arg5[%c0_6, %c0_7] : memref<384x128xf32, #tpu.memory_space<vmem>>, vector<384x128xf32>
    tpu.vector_store %arg5[%c0_6, %c0_7], %7 {strides = array<i32>} : memref<384x128xf32, #tpu.memory_space<vmem>>, vector<384x128xf32>,
    %c0_i32_8 = arith.constant 0 : i32
    %9 = arith.cmpi eq, %arg1, %c0_i32_8 : i32
    %10 = arith.extui %9 : i1 to i32
    %c0_i32_9 = arith.constant 0 : i32
    %11 = arith.cmpi ne, %10, %c0_i32_9 : i32
    scf.if %11 {
      %c0_10 = arith.constant 0 : index
      %c0_11 = arith.constant 0 : index
      %12 = vector.load %arg5[%c0_10, %c0_11] : memref<384x128xf32, #tpu.memory_space<vmem>>, vector<384x128xf32>
      %13 = arith.truncf %12 : vector<384x128xf32> to vector<384x128xbf16>
      %c0_12 = arith.constant 0 : index
      %c0_13 = arith.constant 0 : index
      %14 = vector.load %arg4[%c0_12, %c0_13] : memref<384x128xbf16, #tpu.memory_space<vmem>>, vector<384x128xbf16>
      tpu.vector_store %arg4[%c0_12, %c0_13], %13 {strides = array<i32>} : memref<384x128xbf16, #tpu.memory_space<vmem>>, vector<384x128xbf16>,
    } else {
    }
    return
  }
  func.func @transform_0(%arg0: i32, %arg1: i32) -> (i32, i32) {
    %c0_i32 = arith.constant 0 : i32
    return %arg1, %arg0 : i32, i32
  }
  func.func @transform_1(%arg0: i32, %arg1: i32) -> (i32, i32) {
    %c0_i32 = arith.constant 0 : i32
    %c0_i32_0 = arith.constant 0 : i32
    return %arg1, %c0_i32 : i32, i32
  }
  func.func @transform_2(%arg0: i32, %arg1: i32) -> (i32, i32) {
    %c0_i32 = arith.constant 0 : i32
    %c0_i32_0 = arith.constant 0 : i32
    return %arg0, %c0_i32 : i32, i32
  }
}

module attributes {stable_mosaic.version = 11 : i64} {
  func.func @_decoder_kernel(%arg0: i32, %arg1: memref<512x128xbf16, #tpu.memory_space<vmem>>, %arg2: memref<512x128xbf16, #tpu.memory_space<vmem>>, %arg3: memref<128x256xbf16, #tpu.memory_space<vmem>>, %arg4: memref<2x128xf32, #tpu.memory_space<vmem>>, %arg5: memref<512x128xf32, #tpu.memory_space<vmem>>) attributes {dimension_semantics = [#tpu.dimension_semantics<parallel>], iteration_bounds = array<i64: 1>, scalar_prefetch = 0 : i64, scratch_operands = 0 : i64, tpu.core_type = #tpu.core_type<tc>, window_params = [{transform_indices = @transform_0, window_bounds = array<i64: 512, 128>}, {transform_indices = @transform_1, window_bounds = array<i64: 512, 128>}, {pipeline_mode = #tpu.pipeline_mode<synchronous>, transform_indices = @transform_2, window_bounds = array<i64: 128, 256>}, {pipeline_mode = #tpu.pipeline_mode<synchronous>, transform_indices = @transform_3, window_bounds = array<i64: 2, 128>}, {transform_indices = @transform_4, window_bounds = array<i64: 512, 128>}]} {
    %c0 = arith.constant 0 : index
    %c0_0 = arith.constant 0 : index
    %0 = vector.load %arg1[%c0, %c0_0] : memref<512x128xbf16, #tpu.memory_space<vmem>>, vector<512x128xbf16>
    %c0_1 = arith.constant 0 : index
    %c0_2 = arith.constant 0 : index
    %1 = vector.load %arg3[%c0_1, %c0_2] : memref<128x256xbf16, #tpu.memory_space<vmem>>, vector<128x256xbf16>
    %cst = arith.constant dense<0.000000e+00> : vector<512x256xf32>
    %2 = tpu.matmul %0, %1, %cst {dimension_numbers = #tpu.dot_dimension_numbers<[1], [0], [0], [1], [0, 0, 1, 1], [], []>} : vector<512x128xbf16>, vector<128x256xbf16>, vector<512x256xf32> -> vector<512x256xf32>
    %c0_3 = arith.constant 0 : index
    %c0_4 = arith.constant 0 : index
    %3 = vector.load %arg2[%c0_3, %c0_4] : memref<512x128xbf16, #tpu.memory_space<vmem>>, vector<512x128xbf16>
    %4 = arith.extf %3 : vector<512x128xbf16> to vector<512x128xf32>
    %c0_5 = arith.constant 0 : index
    %c0_6 = arith.constant 0 : index
    %5 = vector.load %arg4[%c0_5, %c0_6] : memref<2x128xf32, #tpu.memory_space<vmem>>, vector<2x128xf32>
    %cst_7 = arith.constant 0.000000e+00 : f32
    %6 = vector.broadcast %cst_7 : f32 to vector<512x128xf32>
    %7 = vector.extract_strided_slice %2 {offsets = [0, 0], sizes = [512, 128], strides = [1, 1]} : vector<512x256xf32> to vector<512x128xf32>
    %8 = arith.mulf %7, %4 : vector<512x128xf32>
    %cst_8 = arith.constant dense<0.000000e+00> : vector<512xf32>
    %9 = vector.multi_reduction <add>, %8, %cst_8 [1] : vector<512x128xf32> to vector<512xf32>
    %10 = vector.shape_cast %9 : vector<512xf32> to vector<512x1xf32>
    %11 = vector.extract_strided_slice %5 {offsets = [0, 0], sizes = [1, 128], strides = [1, 1]} : vector<2x128xf32> to vector<1x128xf32>
    %12 = vector.broadcast %10 : vector<512x1xf32> to vector<512x128xf32>
    %13 = vector.broadcast %11 : vector<1x128xf32> to vector<512x128xf32>
    %14 = arith.mulf %12, %13 : vector<512x128xf32>
    %15 = arith.addf %6, %14 : vector<512x128xf32>
    %16 = vector.extract_strided_slice %2 {offsets = [0, 128], sizes = [512, 128], strides = [1, 1]} : vector<512x256xf32> to vector<512x128xf32>
    %17 = arith.mulf %16, %4 : vector<512x128xf32>
    %cst_9 = arith.constant dense<0.000000e+00> : vector<512xf32>
    %18 = vector.multi_reduction <add>, %17, %cst_9 [1] : vector<512x128xf32> to vector<512xf32>
    %19 = vector.shape_cast %18 : vector<512xf32> to vector<512x1xf32>
    %20 = vector.extract_strided_slice %5 {offsets = [1, 0], sizes = [1, 128], strides = [1, 1]} : vector<2x128xf32> to vector<1x128xf32>
    %21 = vector.broadcast %19 : vector<512x1xf32> to vector<512x128xf32>
    %22 = vector.broadcast %20 : vector<1x128xf32> to vector<512x128xf32>
    %23 = arith.mulf %21, %22 : vector<512x128xf32>
    %24 = arith.addf %15, %23 : vector<512x128xf32>
    %c0_10 = arith.constant 0 : index
    %c0_11 = arith.constant 0 : index
    %25 = vector.load %arg5[%c0_10, %c0_11] : memref<512x128xf32, #tpu.memory_space<vmem>>, vector<512x128xf32>
    tpu.vector_store %arg5[%c0_10, %c0_11], %24 {strides = array<i32>} : memref<512x128xf32, #tpu.memory_space<vmem>>, vector<512x128xf32>,
    return
  }
  func.func @transform_0(%arg0: i32) -> (i32, i32) {
    %c0_i32 = arith.constant 0 : i32
    %c0_i32_0 = arith.constant 0 : i32
    return %arg0, %c0_i32 : i32, i32
  }
  func.func @transform_1(%arg0: i32) -> (i32, i32) {
    %c0_i32 = arith.constant 0 : i32
    %c0_i32_0 = arith.constant 0 : i32
    return %arg0, %c0_i32 : i32, i32
  }
  func.func @transform_2(%arg0: i32) -> (i32, i32) {
    %c0_i32 = arith.constant 0 : i32
    %c0_i32_0 = arith.constant 0 : i32
    %c0_i32_1 = arith.constant 0 : i32
    return %c0_i32, %c0_i32_0 : i32, i32
  }
  func.func @transform_3(%arg0: i32) -> (i32, i32) {
    %c0_i32 = arith.constant 0 : i32
    %c0_i32_0 = arith.constant 0 : i32
    %c0_i32_1 = arith.constant 0 : i32
    return %c0_i32, %c0_i32_0 : i32, i32
  }
  func.func @transform_4(%arg0: i32) -> (i32, i32) {
    %c0_i32 = arith.constant 0 : i32
    %c0_i32_0 = arith.constant 0 : i32
    return %arg0, %c0_i32 : i32, i32
  }
}

</mosaic_0001>

<llo_original>
// kernel: lightgcn_forward.7
$region0: #{lightgcn_forward.7}
  #allocation0 [shape = 'u32[]', space=smem, size = 0x4, offset = 0x4, fixed_abs, tag = 'smem constant byte address 0x4 - core index']
  #allocation1 [shape = 'u32[72,128]{1,0:T(1,128)}', space=vmem, size = 0x9000, scoped, tag = 'internal scratch']
  #allocation2 [shape = 'f32[256,128]{1,0:T(8,128)}', space=vmem, size = 0x20000, scoped, tag = 'scratch operand']
  %s0 = inlined_call_operand.vmem [shape: bf16[256,384], index: 0, kind: input, shape index: {}]
  %s1 = inlined_call_operand.vmem [shape: bf16[384,128], index: 1, kind: input, shape index: {}]
  %s2 = inlined_call_operand.vmem [shape: bf16[256,128], index: 2, kind: output, shape index: {}]
  %s3 = sld [smem:[#allocation0]]
  $region26: #{lightgcn_forward.7} parent=0
    _
  %s5 = ssub.s32 1, %s3
  %s6 = scalar_select 0, %s5, %s3
  // Predicated region
  $region2: #{lightgcn_forward.7} parent=0 // pred_check
    _
  $region3: #{lightgcn_forward.7} parent=0 // pred_check_branch
    %8 = sbr.rel (0) target = $region5
  $region4: #{lightgcn_forward.7} parent=0 // pred_region
    _
  $region5: #{lightgcn_forward.7} parent=0 // pred_fallthru
    _
  // Predicated region
  $region6: #{lightgcn_forward.7} parent=0 // pred_check
    _
  $region7: #{lightgcn_forward.7} parent=0 // pred_check_branch
    %10 = sbr.rel (0) target = $region9
  $region8: #{lightgcn_forward.7} parent=0 // pred_region
    _
  $region9: #{lightgcn_forward.7} parent=0 // pred_fallthru
    _
  %p11 = scmp.eq.s32.totalorder 0, 0
  // Predicated region
  $region10: #{lightgcn_forward.7} parent=0 // pred_check
    %p12 = pneg %p11
  $region11: #{lightgcn_forward.7} parent=0 // pred_check_branch
    %14 = sbr.rel (%p12) target = $region13
  $region12: #{lightgcn_forward.7} parent=0 // pred_region
    %15 = vst [vmem:[#allocation2] sm:$0xff] 0.0
    %16 = vst [vmem:[#allocation2 + $0x8] sm:$0xff] 0.0
    %17 = vst [vmem:[#allocation2 + $0x10] sm:$0xff] 0.0
    %18 = vst [vmem:[#allocation2 + $0x18] sm:$0xff] 0.0
    %19 = vst [vmem:[#allocation2 + $0x20] sm:$0xff] 0.0
    %20 = vst [vmem:[#allocation2 + $0x28] sm:$0xff] 0.0
    %21 = vst [vmem:[#allocation2 + $0x30] sm:$0xff] 0.0
    %22 = vst [vmem:[#allocation2 + $0x38] sm:$0xff] 0.0
    %23 = vst [vmem:[#allocation2 + $0x40] sm:$0xff] 0.0
    %24 = vst [vmem:[#allocation2 + $0x48] sm:$0xff] 0.0
    %25 = vst [vmem:[#allocation2 + $0x50] sm:$0xff] 0.0
    %26 = vst [vmem:[#allocation2 + $0x58] sm:$0xff] 0.0
    %27 = vst [vmem:[#allocation2 + $0x60] sm:$0xff] 0.0
    %28 = vst [vmem:[#allocation2 + $0x68] sm:$0xff] 0.0
    %29 = vst [vmem:[#allocation2 + $0x70] sm:$0xff] 0.0
    %30 = vst [vmem:[#allocation2 + $0x78] sm:$0xff] 0.0
    %31 = vst [vmem:[#allocation2 + $0x80] sm:$0xff] 0.0
    %32 = vst [vmem:[#allocation2 + $0x88] sm:$0xff] 0.0
    %33 = vst [vmem:[#allocation2 + $0x90] sm:$0xff] 0.0
    %34 = vst [vmem:[#allocation2 + $0x98] sm:$0xff] 0.0
    %35 = vst [vmem:[#allocation2 + $0xa0] sm:$0xff] 0.0
    %36 = vst [vmem:[#allocation2 + $0xa8] sm:$0xff] 0.0
    %37 = vst [vmem:[#allocation2 + $0xb0] sm:$0xff] 0.0
    %38 = vst [vmem:[#allocation2 + $0xb8] sm:$0xff] 0.0
    %39 = vst [vmem:[#allocation2 + $0xc0] sm:$0xff] 0.0
    %40 = vst [vmem:[#allocation2 + $0xc8] sm:$0xff] 0.0
    %41 = vst [vmem:[#allocation2 + $0xd0] sm:$0xff] 0.0
    %42 = vst [vmem:[#allocation2 + $0xd8] sm:$0xff] 0.0
    %43 = vst [vmem:[#allocation2 + $0xe0] sm:$0xff] 0.0
    %44 = vst [vmem:[#allocation2 + $0xe8] sm:$0xff] 0.0
    %45 = vst [vmem:[#allocation2 + $0xf0] sm:$0xff] 0.0
    %46 = vst [vmem:[#allocation2 + $0xf8] sm:$0xff] 0.0
  $region13: #{lightgcn_forward.7} parent=0 // pred_fallthru
    _
  %v47 = vld [vmem:[#allocation2] sm:$0xff]
  %v48 = vld [vmem:[#allocation2 + $0x8] sm:$0xff]
  %v49 = vld [vmem:[#allocation2 + $0x10] sm:$0xff]
  %v50 = vld [vmem:[#allocation2 + $0x18] sm:$0xff]
  %v51 = vld [vmem:[#allocation2 + $0x20] sm:$0xff]
  %v52 = vld [vmem:[#allocation2 + $0x28] sm:$0xff]
  %v53 = vld [vmem:[#allocation2 + $0x30] sm:$0xff]
  %v54 = vld [vmem:[#allocation2 + $0x38] sm:$0xff]
  %v55 = vld [vmem:[#allocation2 + $0x40] sm:$0xff]
  %v56 = vld [vmem:[#allocation2 + $0x48] sm:$0xff]
  %v57 = vld [vmem:[#allocation2 + $0x50] sm:$0xff]
  %v58 = vld [vmem:[#allocation2 + $0x58] sm:$0xff]
  %v59 = vld [vmem:[#allocation2 + $0x60] sm:$0xff]
  %v60 = vld [vmem:[#allocation2 + $0x68] sm:$0xff]
  %v61 = vld [vmem:[#allocation2 + $0x70] sm:$0xff]
  %v62 = vld [vmem:[#allocation2 + $0x78] sm:$0xff]
  %v63 = vld [vmem:[#allocation2 + $0x80] sm:$0xff]
  %v64 = vld [vmem:[#allocation2 + $0x88] sm:$0xff]
  %v65 = vld [vmem:[#allocation2 + $0x90] sm:$0xff]
  %v66 = vld [vmem:[#allocation2 + $0x98] sm:$0xff]
  %v67 = vld [vmem:[#allocation2 + $0xa0] sm:$0xff]
  %v68 = vld [vmem:[#allocation2 + $0xa8] sm:$0xff]
  %v69 = vld [vmem:[#allocation2 + $0xb0] sm:$0xff]
  %v70 = vld [vmem:[#allocation2 + $0xb8] sm:$0xff]
  %v71 = vld [vmem:[#allocation2 + $0xc0] sm:$0xff]
  %v72 = vld [vmem:[#allocation2 + $0xc8] sm:$0xff]
  %v73 = vld [vmem:[#allocation2 + $0xd0] sm:$0xff]
  %v74 = vld [vmem:[#allocation2 + $0xd8] sm:$0xff]
  %v75 = vld [vmem:[#allocation2 + $0xe0] sm:$0xff]
  %v76 = vld [vmem:[#allocation2 + $0xe8] sm:$0xff]
  %v77 = vld [vmem:[#allocation2 + $0xf0] sm:$0xff]
  %v78 = vld [vmem:[#allocation2 + $0xf8] sm:$0xff]
  %v79 = vld [vmem:[%s0] sm:$0xff]
  %v80 = vld [vmem:[%s0 + $0x8] sm:$0xf]
  %v81 = vld [vmem:[%s0 + $0xc] sm:$0xff]
  %v82 = vld [vmem:[%s0 + $0x14] sm:$0xf]
  %v83 = vld [vmem:[%s0 + $0x18] sm:$0xff]
  %v84 = vld [vmem:[%s0 + $0x20] sm:$0xf]
  %v85 = vld [vmem:[%s0 + $0x24] sm:$0xff]
  %v86 = vld [vmem:[%s0 + $0x2c] sm:$0xf]
  %v87 = vld [vmem:[%s0 + $0x30] sm:$0xff]
  %v88 = vld [vmem:[%s0 + $0x38] sm:$0xf]
  %v89 = vld [vmem:[%s0 + $0x3c] sm:$0xff]
  %v90 = vld [vmem:[%s0 + $0x44] sm:$0xf]
  %v91 = vld [vmem:[%s0 + $0x48] sm:$0xff]
  %v92 = vld [vmem:[%s0 + $0x50] sm:$0xf]
  %v93 = vld [vmem:[%s0 + $0x54] sm:$0xff]
  %v94 = vld [vmem:[%s0 + $0x5c] sm:$0xf]
  %v95 = vld [vmem:[%s0 + $0x60] sm:$0xff]
  %v96 = vld [vmem:[%s0 + $0x68] sm:$0xf]
  %v97 = vld [vmem:[%s0 + $0x6c] sm:$0xff]
  %v98 = vld [vmem:[%s0 + $0x74] sm:$0xf]
  %v99 = vld [vmem:[%s0 + $0x78] sm:$0xff]
  %v100 = vld [vmem:[%s0 + $0x80] sm:$0xf]
  %v101 = vld [vmem:[%s0 + $0x84] sm:$0xff]
  %v102 = vld [vmem:[%s0 + $0x8c] sm:$0xf]
  %v103 = vld [vmem:[%s0 + $0x90] sm:$0xff]
  %v104 = vld [vmem:[%s0 + $0x98] sm:$0xf]
  %v105 = vld [vmem:[%s0 + $0x9c] sm:$0xff]
  %v106 = vld [vmem:[%s0 + $0xa4] sm:$0xf]
  %v107 = vld [vmem:[%s0 + $0xa8] sm:$0xff]
  %v108 = vld [vmem:[%s0 + $0xb0] sm:$0xf]
  %v109 = vld [vmem:[%s0 + $0xb4] sm:$0xff]
  %v110 = vld [vmem:[%s0 + $0xbc] sm:$0xf]
  %v111 = vld [vmem:[%s0 + $0xc0] sm:$0xff]
  %v112 = vld [vmem:[%s0 + $0xc8] sm:$0xf]
  %v113 = vld [vmem:[%s0 + $0xcc] sm:$0xff]
  %v114 = vld [vmem:[%s0 + $0xd4] sm:$0xf]
  %v115 = vld [vmem:[%s0 + $0xd8] sm:$0xff]
  %v116 = vld [vmem:[%s0 + $0xe0] sm:$0xf]
  %v117 = vld [vmem:[%s0 + $0xe4] sm:$0xff]
  %v118 = vld [vmem:[%s0 + $0xec] sm:$0xf]
  %v119 = vld [vmem:[%s0 + $0xf0] sm:$0xff]
  %v120 = vld [vmem:[%s0 + $0xf8] sm:$0xf]
  %v121 = vld [vmem:[%s0 + $0xfc] sm:$0xff]
  %v122 = vld [vmem:[%s0 + $0x104] sm:$0xf]
  %v123 = vld [vmem:[%s0 + $0x108] sm:$0xff]
  %v124 = vld [vmem:[%s0 + $0x110] sm:$0xf]
  %v125 = vld [vmem:[%s0 + $0x114] sm:$0xff]
  %v126 = vld [vmem:[%s0 + $0x11c] sm:$0xf]
  %v127 = vld [vmem:[%s0 + $0x120] sm:$0xff]
  %v128 = vld [vmem:[%s0 + $0x128] sm:$0xf]
  %v129 = vld [vmem:[%s0 + $0x12c] sm:$0xff]
  %v130 = vld [vmem:[%s0 + $0x134] sm:$0xf]
  %v131 = vld [vmem:[%s0 + $0x138] sm:$0xff]
  %v132 = vld [vmem:[%s0 + $0x140] sm:$0xf]
  %v133 = vld [vmem:[%s0 + $0x144] sm:$0xff]
  %v134 = vld [vmem:[%s0 + $0x14c] sm:$0xf]
  %v135 = vld [vmem:[%s0 + $0x150] sm:$0xff]
  %v136 = vld [vmem:[%s0 + $0x158] sm:$0xf]
  %v137 = vld [vmem:[%s0 + $0x15c] sm:$0xff]
  %v138 = vld [vmem:[%s0 + $0x164] sm:$0xf]
  %v139 = vld [vmem:[%s0 + $0x168] sm:$0xff]
  %v140 = vld [vmem:[%s0 + $0x170] sm:$0xf]
  %v141 = vld [vmem:[%s0 + $0x174] sm:$0xff]
  %v142 = vld [vmem:[%s0 + $0x17c] sm:$0xf]
  %v143 = vld [vmem:[%s1] sm:$0xf]
  %v144 = vld [vmem:[%s1 + $0x4] sm:$0xf]
  %v145 = vld [vmem:[%s1 + $0x8] sm:$0xf]
  %v146 = vld [vmem:[%s1 + $0xc] sm:$0xf]
  %v147 = vld [vmem:[%s1 + $0x10] sm:$0xf]
  %v148 = vld [vmem:[%s1 + $0x14] sm:$0xf]
  %v149 = vld [vmem:[%s1 + $0x18] sm:$0xf]
  %v150 = vld [vmem:[%s1 + $0x1c] sm:$0xf]
  %v151 = vld [vmem:[%s1 + $0x20] sm:$0xf]
  %v152 = vld [vmem:[%s1 + $0x24] sm:$0xf]
  %v153 = vld [vmem:[%s1 + $0x28] sm:$0xf]
  %v154 = vld [vmem:[%s1 + $0x2c] sm:$0xf]
  %v155 = vld [vmem:[%s1 + $0x30] sm:$0xf]
  %v156 = vld [vmem:[%s1 + $0x34] sm:$0xf]
  %v157 = vld [vmem:[%s1 + $0x38] sm:$0xf]
  %v158 = vld [vmem:[%s1 + $0x3c] sm:$0xf]
  %v159 = vld [vmem:[%s1 + $0x40] sm:$0xf]
  %v160 = vld [vmem:[%s1 + $0x44] sm:$0xf]
  %v161 = vld [vmem:[%s1 + $0x48] sm:$0xf]
  %v162 = vld [vmem:[%s1 + $0x4c] sm:$0xf]
  %v163 = vld [vmem:[%s1 + $0x50] sm:$0xf]
  %v164 = vld [vmem:[%s1 + $0x54] sm:$0xf]
  %v165 = vld [vmem:[%s1 + $0x58] sm:$0xf]
  %v166 = vld [vmem:[%s1 + $0x5c] sm:$0xf]
  %v167 = vld [vmem:[%s1 + $0x60] sm:$0xf]
  %v168 = vld [vmem:[%s1 + $0x64] sm:$0xf]
  %v169 = vld [vmem:[%s1 + $0x68] sm:$0xf]
  %v170 = vld [vmem:[%s1 + $0x6c] sm:$0xf]
  %v171 = vld [vmem:[%s1 + $0x70] sm:$0xf]
  %v172 = vld [vmem:[%s1 + $0x74] sm:$0xf]
  %v173 = vld [vmem:[%s1 + $0x78] sm:$0xf]
  %v174 = vld [vmem:[%s1 + $0x7c] sm:$0xf]
  %v175 = vld [vmem:[%s1 + $0x80] sm:$0xf]
  %v176 = vld [vmem:[%s1 + $0x84] sm:$0xf]
  %v177 = vld [vmem:[%s1 + $0x88] sm:$0xf]
  %v178 = vld [vmem:[%s1 + $0x8c] sm:$0xf]
  %v179 = vld [vmem:[%s1 + $0x90] sm:$0xf]
  %v180 = vld [vmem:[%s1 + $0x94] sm:$0xf]
  %v181 = vld [vmem:[%s1 + $0x98] sm:$0xf]
  %v182 = vld [vmem:[%s1 + $0x9c] sm:$0xf]
  %v183 = vld [vmem:[%s1 + $0xa0] sm:$0xf]
  %v184 = vld [vmem:[%s1 + $0xa4] sm:$0xf]
  %v185 = vld [vmem:[%s1 + $0xa8] sm:$0xf]
  %v186 = vld [vmem:[%s1 + $0xac] sm:$0xf]
  %v187 = vld [vmem:[%s1 + $0xb0] sm:$0xf]
  %v188 = vld [vmem:[%s1 + $0xb4] sm:$0xf]
  %v189 = vld [vmem:[%s1 + $0xb8] sm:$0xf]
  %v190 = vld [vmem:[%s1 + $0xbc] sm:$0xf]
  %v255 = vunpack.c.l.b16 %v79
  %v256 = vunpack.c.h.b16 %v79
  %v257 = vunpack.c.l.b16 %v80
  %v258 = vunpack.c.l.b16 %v81
  %v259 = vunpack.c.h.b16 %v81
  %v260 = vunpack.c.l.b16 %v82
  %v261 = vunpack.c.l.b16 %v83
  %v262 = vunpack.c.h.b16 %v83
  %v263 = vunpack.c.l.b16 %v84
  %v264 = vunpack.c.l.b16 %v85
  %v265 = vunpack.c.h.b16 %v85
  %v266 = vunpack.c.l.b16 %v86
  %v267 = vunpack.c.l.b16 %v87
  %v268 = vunpack.c.h.b16 %v87
  %v269 = vunpack.c.l.b16 %v88
  %v270 = vunpack.c.l.b16 %v89
  %v271 = vunpack.c.h.b16 %v89
  %v272 = vunpack.c.l.b16 %v90
  %v273 = vunpack.c.l.b16 %v91
  %v274 = vunpack.c.h.b16 %v91
  %v275 = vunpack.c.l.b16 %v92
  %v276 = vunpack.c.l.b16 %v93
  %v277 = vunpack.c.h.b16 %v93
  %v278 = vunpack.c.l.b16 %v94
  %v279 = vunpack.c.l.b16 %v95
  %v280 = vunpack.c.h.b16 %v95
  %v281 = vunpack.c.l.b16 %v96
  %v282 = vunpack.c.l.b16 %v97
  %v283 = vunpack.c.h.b16 %v97
  %v284 = vunpack.c.l.b16 %v98
  %v285 = vunpack.c.l.b16 %v99
  %v286 = vunpack.c.h.b16 %v99
  %v287 = vunpack.c.l.b16 %v100
  %v288 = vunpack.c.l.b16 %v101
  %v289 = vunpack.c.h.b16 %v101
  %v290 = vunpack.c.l.b16 %v102
  %v291 = vunpack.c.l.b16 %v103
  %v292 = vunpack.c.h.b16 %v103
  %v293 = vunpack.c.l.b16 %v104
  %v294 = vunpack.c.l.b16 %v105
  %v295 = vunpack.c.h.b16 %v105
  %v296 = vunpack.c.l.b16 %v106
  %v297 = vunpack.c.l.b16 %v107
  %v298 = vunpack.c.h.b16 %v107
  %v299 = vunpack.c.l.b16 %v108
  %v300 = vunpack.c.l.b16 %v109
  %v301 = vunpack.c.h.b16 %v109
  %v302 = vunpack.c.l.b16 %v110
  %v303 = vunpack.c.l.b16 %v111
  %v304 = vunpack.c.h.b16 %v111
  %v305 = vunpack.c.l.b16 %v112
  %v306 = vunpack.c.l.b16 %v113
  %v307 = vunpack.c.h.b16 %v113
  %v308 = vunpack.c.l.b16 %v114
  %v309 = vunpack.c.l.b16 %v115
  %v310 = vunpack.c.h.b16 %v115
  %v311 = vunpack.c.l.b16 %v116
  %v312 = vunpack.c.l.b16 %v117
  %v313 = vunpack.c.h.b16 %v117
  %v314 = vunpack.c.l.b16 %v118
  %v315 = vunpack.c.l.b16 %v119
  %v316 = vunpack.c.h.b16 %v119
  %v317 = vunpack.c.l.b16 %v120
  %v318 = vunpack.c.l.b16 %v121
  %v319 = vunpack.c.h.b16 %v121
  %v320 = vunpack.c.l.b16 %v122
  %v321 = vunpack.c.l.b16 %v123
  %v322 = vunpack.c.h.b16 %v123
  %v323 = vunpack.c.l.b16 %v124
  %v324 = vunpack.c.l.b16 %v125
  %v325 = vunpack.c.h.b16 %v125
  %v326 = vunpack.c.l.b16 %v126
  %v327 = vunpack.c.l.b16 %v127
  %v328 = vunpack.c.h.b16 %v127
  %v329 = vunpack.c.l.b16 %v128
  %v330 = vunpack.c.l.b16 %v129
  %v331 = vunpack.c.h.b16 %v129
  %v332 = vunpack.c.l.b16 %v130
  %v333 = vunpack.c.l.b16 %v131
  %v334 = vunpack.c.h.b16 %v131
  %v335 = vunpack.c.l.b16 %v132
  %v336 = vunpack.c.l.b16 %v133
  %v337 = vunpack.c.h.b16 %v133
  %v338 = vunpack.c.l.b16 %v134
  %v339 = vunpack.c.l.b16 %v135
  %v340 = vunpack.c.h.b16 %v135
  %v341 = vunpack.c.l.b16 %v136
  %v342 = vunpack.c.l.b16 %v137
  %v343 = vunpack.c.h.b16 %v137
  %v344 = vunpack.c.l.b16 %v138
  %v345 = vunpack.c.l.b16 %v139
  %v346 = vunpack.c.h.b16 %v139
  %v347 = vunpack.c.l.b16 %v140
  %v348 = vunpack.c.l.b16 %v141
  %v349 = vunpack.c.h.b16 %v141
  %v350 = vunpack.c.l.b16 %v142
  %v351 = vpack.c.b16 %v258, %v255
  %v352 = vpack.c.b16 %v259, %v256
  %v353 = vpack.c.b16 %v260, %v257
  %v354 = vpack.c.b16 %v264, %v261
  %v355 = vpack.c.b16 %v265, %v262
  %v356 = vpack.c.b16 %v266, %v263
  %v357 = vpack.c.b16 %v270, %v267
  %v358 = vpack.c.b16 %v271, %v268
  %v359 = vpack.c.b16 %v272, %v269
  %v360 = vpack.c.b16 %v276, %v273
  %v361 = vpack.c.b16 %v277, %v274
  %v362 = vpack.c.b16 %v278, %v275
  %v363 = vpack.c.b16 %v282, %v279
  %v364 = vpack.c.b16 %v283, %v280
  %v365 = vpack.c.b16 %v284, %v281
  %v366 = vpack.c.b16 %v288, %v285
  %v367 = vpack.c.b16 %v289, %v286
  %v368 = vpack.c.b16 %v290, %v287
  %v369 = vpack.c.b16 %v294, %v291
  %v370 = vpack.c.b16 %v295, %v292
  %v371 = vpack.c.b16 %v296, %v293
  %v372 = vpack.c.b16 %v300, %v297
  %v373 = vpack.c.b16 %v301, %v298
  %v374 = vpack.c.b16 %v302, %v299
  %v375 = vpack.c.b16 %v306, %v303
  %v376 = vpack.c.b16 %v307, %v304
  %v377 = vpack.c.b16 %v308, %v305
  %v378 = vpack.c.b16 %v312, %v309
  %v379 = vpack.c.b16 %v313, %v310
  %v380 = vpack.c.b16 %v314, %v311
  %v381 = vpack.c.b16 %v318, %v315
  %v382 = vpack.c.b16 %v319, %v316
  %v383 = vpack.c.b16 %v320, %v317
  %v384 = vpack.c.b16 %v324, %v321
  %v385 = vpack.c.b16 %v325, %v322
  %v386 = vpack.c.b16 %v326, %v323
  %v387 = vpack.c.b16 %v330, %v327
  %v388 = vpack.c.b16 %v331, %v328
  %v389 = vpack.c.b16 %v332, %v329
  %v390 = vpack.c.b16 %v336, %v333
  %v391 = vpack.c.b16 %v337, %v334
  %v392 = vpack.c.b16 %v338, %v335
  %v393 = vpack.c.b16 %v342, %v339
  %v394 = vpack.c.b16 %v343, %v340
  %v395 = vpack.c.b16 %v344, %v341
  %v396 = vpack.c.b16 %v348, %v345
  %v397 = vpack.c.b16 %v349, %v346
  %v398 = vpack.c.b16 %v350, %v347
  %v495 = vunpack.c.l.b16 %v143
  %v496 = vunpack.c.l.b16 %v144
  %v497 = vunpack.c.l.b16 %v145
  %v498 = vunpack.c.l.b16 %v146
  %v499 = vunpack.c.l.b16 %v147
  %v500 = vunpack.c.l.b16 %v148
  %v501 = vunpack.c.l.b16 %v149
  %v502 = vunpack.c.l.b16 %v150
  %v503 = vunpack.c.l.b16 %v151
  %v504 = vunpack.c.l.b16 %v152
  %v505 = vunpack.c.l.b16 %v153
  %v506 = vunpack.c.l.b16 %v154
  %v507 = vunpack.c.l.b16 %v155
  %v508 = vunpack.c.l.b16 %v156
  %v509 = vunpack.c.l.b16 %v157
  %v510 = vunpack.c.l.b16 %v158
  %v511 = vunpack.c.l.b16 %v159
  %v512 = vunpack.c.l.b16 %v160
  %v513 = vunpack.c.l.b16 %v161
  %v514 = vunpack.c.l.b16 %v162
  %v515 = vunpack.c.l.b16 %v163
  %v516 = vunpack.c.l.b16 %v164
  %v517 = vunpack.c.l.b16 %v165
  %v518 = vunpack.c.l.b16 %v166
  %v519 = vunpack.c.l.b16 %v167
  %v520 = vunpack.c.l.b16 %v168
  %v521 = vunpack.c.l.b16 %v169
  %v522 = vunpack.c.l.b16 %v170
  %v523 = vunpack.c.l.b16 %v171
  %v524 = vunpack.c.l.b16 %v172
  %v525 = vunpack.c.l.b16 %v173
  %v526 = vunpack.c.l.b16 %v174
  %v527 = vunpack.c.l.b16 %v175
  %v528 = vunpack.c.l.b16 %v176
  %v529 = vunpack.c.l.b16 %v177
  %v530 = vunpack.c.l.b16 %v178
  %v531 = vunpack.c.l.b16 %v179
  %v532 = vunpack.c.l.b16 %v180
  %v533 = vunpack.c.l.b16 %v181
  %v534 = vunpack.c.l.b16 %v182
  %v535 = vunpack.c.l.b16 %v183
  %v536 = vunpack.c.l.b16 %v184
  %v537 = vunpack.c.l.b16 %v185
  %v538 = vunpack.c.l.b16 %v186
  %v539 = vunpack.c.l.b16 %v187
  %v540 = vunpack.c.l.b16 %v188
  %v541 = vunpack.c.l.b16 %v189
  %v542 = vunpack.c.l.b16 %v190
  %v543 = vpack.c.b16 %v496, %v495
  %v544 = vpack.c.b16 %v498, %v497
  %v545 = vpack.c.b16 %v500, %v499
  %v546 = vpack.c.b16 %v502, %v501
  %v547 = vpack.c.b16 %v504, %v503
  %v548 = vpack.c.b16 %v506, %v505
  %v549 = vpack.c.b16 %v508, %v507
  %v550 = vpack.c.b16 %v510, %v509
  %v551 = vpack.c.b16 %v512, %v511
  %v552 = vpack.c.b16 %v514, %v513
  %v553 = vpack.c.b16 %v516, %v515
  %v554 = vpack.c.b16 %v518, %v517
  %v555 = vpack.c.b16 %v520, %v519
  %v556 = vpack.c.b16 %v522, %v521
  %v557 = vpack.c.b16 %v524, %v523
  %v558 = vpack.c.b16 %v526, %v525
  %v559 = vpack.c.b16 %v528, %v527
  %v560 = vpack.c.b16 %v530, %v529
  %v561 = vpack.c.b16 %v532, %v531
  %v562 = vpack.c.b16 %v534, %v533
  %v563 = vpack.c.b16 %v536, %v535
  %v564 = vpack.c.b16 %v538, %v537
  %v565 = vpack.c.b16 %v540, %v539
  %v566 = vpack.c.b16 %v542, %v541
  %591 = vmatpush.bf16.msra.mxu0 %v550
  %592 = vmatpush.bf16.msra.mxu0 %v549
  %593 = vmatpush.bf16.msra.mxu0 %v548
  %594 = vmatpush.bf16.msra.mxu0 %v547
  %595 = vmatpush.bf16.msra.mxu0 %v546
  %596 = vmatpush.bf16.msra.mxu0 %v545
  %597 = vmatpush.bf16.msra.mxu0 %v544
  %598 = vmatpush.bf16.msra.mxu0 %v543
  %599 = vmatmul.bf16.gmra.mxu0 %v351
  %v600 = vpop.f32.mrf.mxu0
  %v601 = vadd.f32 0.0, %v600
  %v602 = vpop.f32.mrf.mxu0
  %v603 = vadd.f32 0.0, %v602
  %604 = vmatmul.bf16.gmra.mxu0 %v354
  %v605 = vpop.f32.mrf.mxu0
  %v606 = vadd.f32 0.0, %v605
  %v607 = vpop.f32.mrf.mxu0
  %v608 = vadd.f32 0.0, %v607
  %609 = vmatmul.bf16.gmra.mxu0 %v357
  %v610 = vpop.f32.mrf.mxu0
  %v611 = vadd.f32 0.0, %v610
  %v612 = vpop.f32.mrf.mxu0
  %v613 = vadd.f32 0.0, %v612
  %614 = vmatmul.bf16.gmra.mxu0 %v360
  %v615 = vpop.f32.mrf.mxu0
  %v616 = vadd.f32 0.0, %v615
  %v617 = vpop.f32.mrf.mxu0
  %v618 = vadd.f32 0.0, %v617
  %619 = vmatmul.bf16.gmra.mxu0 %v363
  %v620 = vpop.f32.mrf.mxu0
  %v621 = vadd.f32 0.0, %v620
  %v622 = vpop.f32.mrf.mxu0
  %v623 = vadd.f32 0.0, %v622
  %624 = vmatmul.bf16.gmra.mxu0 %v366
  %v625 = vpop.f32.mrf.mxu0
  %v626 = vadd.f32 0.0, %v625
  %v627 = vpop.f32.mrf.mxu0
  %v628 = vadd.f32 0.0, %v627
  %629 = vmatmul.bf16.gmra.mxu0 %v369
  %v630 = vpop.f32.mrf.mxu0
  %v631 = vadd.f32 0.0, %v630
  %v632 = vpop.f32.mrf.mxu0
  %v633 = vadd.f32 0.0, %v632
  %634 = vmatmul.bf16.gmra.mxu0 %v372
  %v635 = vpop.f32.mrf.mxu0
  %v636 = vadd.f32 0.0, %v635
  %v637 = vpop.f32.mrf.mxu0
  %v638 = vadd.f32 0.0, %v637
  %639 = vmatmul.bf16.gmra.mxu0 %v375
  %v640 = vpop.f32.mrf.mxu0
  %v641 = vadd.f32 0.0, %v640
  %v642 = vpop.f32.mrf.mxu0
  %v643 = vadd.f32 0.0, %v642
  %644 = vmatmul.bf16.gmra.mxu0 %v378
  %v645 = vpop.f32.mrf.mxu0
  %v646 = vadd.f32 0.0, %v645
  %v647 = vpop.f32.mrf.mxu0
  %v648 = vadd.f32 0.0, %v647
  %649 = vmatmul.bf16.gmra.mxu0 %v381
  %v650 = vpop.f32.mrf.mxu0
  %v651 = vadd.f32 0.0, %v650
  %v652 = vpop.f32.mrf.mxu0
  %v653 = vadd.f32 0.0, %v652
  %654 = vmatmul.bf16.gmra.mxu0 %v384
  %v655 = vpop.f32.mrf.mxu0
  %v656 = vadd.f32 0.0, %v655
  %v657 = vpop.f32.mrf.mxu0
  %v658 = vadd.f32 0.0, %v657
  %659 = vmatmul.bf16.gmra.mxu0 %v387
  %v660 = vpop.f32.mrf.mxu0
  %v661 = vadd.f32 0.0, %v660
  %v662 = vpop.f32.mrf.mxu0
  %v663 = vadd.f32 0.0, %v662
  %664 = vmatmul.bf16.gmra.mxu0 %v390
  %v665 = vpop.f32.mrf.mxu0
  %v666 = vadd.f32 0.0, %v665
  %v667 = vpop.f32.mrf.mxu0
  %v668 = vadd.f32 0.0, %v667
  %669 = vmatmul.bf16.gmra.mxu0 %v393
  %v670 = vpop.f32.mrf.mxu0
  %v671 = vadd.f32 0.0, %v670
  %v672 = vpop.f32.mrf.mxu0
  %v673 = vadd.f32 0.0, %v672
  %674 = vmatmul.bf16.gmra.mxu0 %v396
  %v675 = vpop.f32.mrf.mxu0
  %v676 = vadd.f32 0.0, %v675
  %v677 = vpop.f32.mrf.mxu0
  %v678 = vadd.f32 0.0, %v677
  %679 = vdwg.mxu0
  %680 = vmatpush.bf16.msra.mxu0 %v558
  %681 = vmatpush.bf16.msra.mxu0 %v557
  %682 = vmatpush.bf16.msra.mxu0 %v556
  %683 = vmatpush.bf16.msra.mxu0 %v555
  %684 = vmatpush.bf16.msra.mxu0 %v554
  %685 = vmatpush.bf16.msra.mxu0 %v553
  %686 = vmatpush.bf16.msra.mxu0 %v552
  %687 = vmatpush.bf16.msra.mxu0 %v551
  %688 = vmatmul.bf16.gmra.mxu0 %v352
  %v689 = vpop.f32.mrf.mxu0
  %v690 = vadd.f32 %v601, %v689
  %v691 = vpop.f32.mrf.mxu0
  %v692 = vadd.f32 %v603, %v691
  %693 = vmatmul.bf16.gmra.mxu0 %v355
  %v694 = vpop.f32.mrf.mxu0
  %v695 = vadd.f32 %v606, %v694
  %v696 = vpop.f32.mrf.mxu0
  %v697 = vadd.f32 %v608, %v696
  %698 = vmatmul.bf16.gmra.mxu0 %v358
  %v699 = vpop.f32.mrf.mxu0
  %v700 = vadd.f32 %v611, %v699
  %v701 = vpop.f32.mrf.mxu0
  %v702 = vadd.f32 %v613, %v701
  %703 = vmatmul.bf16.gmra.mxu0 %v361
  %v704 = vpop.f32.mrf.mxu0
  %v705 = vadd.f32 %v616, %v704
  %v706 = vpop.f32.mrf.mxu0
  %v707 = vadd.f32 %v618, %v706
  %708 = vmatmul.bf16.gmra.mxu0 %v364
  %v709 = vpop.f32.mrf.mxu0
  %v710 = vadd.f32 %v621, %v709
  %v711 = vpop.f32.mrf.mxu0
  %v712 = vadd.f32 %v623, %v711
  %713 = vmatmul.bf16.gmra.mxu0 %v367
  %v714 = vpop.f32.mrf.mxu0
  %v715 = vadd.f32 %v626, %v714
  %v716 = vpop.f32.mrf.mxu0
  %v717 = vadd.f32 %v628, %v716
  %718 = vmatmul.bf16.gmra.mxu0 %v370
  %v719 = vpop.f32.mrf.mxu0
  %v720 = vadd.f32 %v631, %v719
  %v721 = vpop.f32.mrf.mxu0
  %v722 = vadd.f32 %v633, %v721
  %723 = vmatmul.bf16.gmra.mxu0 %v373
  %v724 = vpop.f32.mrf.mxu0
  %v725 = vadd.f32 %v636, %v724
  %v726 = vpop.f32.mrf.mxu0
  %v727 = vadd.f32 %v638, %v726
  %728 = vmatmul.bf16.gmra.mxu0 %v376
  %v729 = vpop.f32.mrf.mxu0
  %v730 = vadd.f32 %v641, %v729
  %v731 = vpop.f32.mrf.mxu0
  %v732 = vadd.f32 %v643, %v731
  %733 = vmatmul.bf16.gmra.mxu0 %v379
  %v734 = vpop.f32.mrf.mxu0
  %v735 = vadd.f32 %v646, %v734
  %v736 = vpop.f32.mrf.mxu0
  %v737 = vadd.f32 %v648, %v736
  %738 = vmatmul.bf16.gmra.mxu0 %v382
  %v739 = vpop.f32.mrf.mxu0
  %v740 = vadd.f32 %v651, %v739
  %v741 = vpop.f32.mrf.mxu0
  %v742 = vadd.f32 %v653, %v741
  %743 = vmatmul.bf16.gmra.mxu0 %v385
  %v744 = vpop.f32.mrf.mxu0
  %v745 = vadd.f32 %v656, %v744
  %v746 = vpop.f32.mrf.mxu0
  %v747 = vadd.f32 %v658, %v746
  %748 = vmatmul.bf16.gmra.mxu0 %v388
  %v749 = vpop.f32.mrf.mxu0
  %v750 = vadd.f32 %v661, %v749
  %v751 = vpop.f32.mrf.mxu0
  %v752 = vadd.f32 %v663, %v751
  %753 = vmatmul.bf16.gmra.mxu0 %v391
  %v754 = vpop.f32.mrf.mxu0
  %v755 = vadd.f32 %v666, %v754
  %v756 = vpop.f32.mrf.mxu0
  %v757 = vadd.f32 %v668, %v756
  %758 = vmatmul.bf16.gmra.mxu0 %v394
  %v759 = vpop.f32.mrf.mxu0
  %v760 = vadd.f32 %v671, %v759
  %v761 = vpop.f32.mrf.mxu0
  %v762 = vadd.f32 %v673, %v761
  %763 = vmatmul.bf16.gmra.mxu0 %v397
  %v764 = vpop.f32.mrf.mxu0
  %v765 = vadd.f32 %v676, %v764
  %v766 = vpop.f32.mrf.mxu0
  %v767 = vadd.f32 %v678, %v766
  %768 = vdwg.mxu0
  %769 = vmatpush.bf16.msra.mxu0 %v566
  %770 = vmatpush.bf16.msra.mxu0 %v565
  %771 = vmatpush.bf16.msra.mxu0 %v564
  %772 = vmatpush.bf16.msra.mxu0 %v563
  %773 = vmatpush.bf16.msra.mxu0 %v562
  %774 = vmatpush.bf16.msra.mxu0 %v561
  %775 = vmatpush.bf16.msra.mxu0 %v560
  %776 = vmatpush.bf16.msra.mxu0 %v559
  %777 = vmatmul.bf16.gmra.mxu0 %v353
  %v778 = vpop.f32.mrf.mxu0
  %v779 = vadd.f32 %v690, %v778
  %v780 = vpop.f32.mrf.mxu0
  %v781 = vadd.f32 %v692, %v780
  %782 = vmatmul.bf16.gmra.mxu0 %v356
  %v783 = vpop.f32.mrf.mxu0
  %v784 = vadd.f32 %v695, %v783
  %v785 = vpop.f32.mrf.mxu0
  %v786 = vadd.f32 %v697, %v785
  %787 = vmatmul.bf16.gmra.mxu0 %v359
  %v788 = vpop.f32.mrf.mxu0
  %v789 = vadd.f32 %v700, %v788
  %v790 = vpop.f32.mrf.mxu0
  %v791 = vadd.f32 %v702, %v790
  %792 = vmatmul.bf16.gmra.mxu0 %v362
  %v793 = vpop.f32.mrf.mxu0
  %v794 = vadd.f32 %v705, %v793
  %v795 = vpop.f32.mrf.mxu0
  %v796 = vadd.f32 %v707, %v795
  %797 = vmatmul.bf16.gmra.mxu0 %v365
  %v798 = vpop.f32.mrf.mxu0
  %v799 = vadd.f32 %v710, %v798
  %v800 = vpop.f32.mrf.mxu0
  %v801 = vadd.f32 %v712, %v800
  %802 = vmatmul.bf16.gmra.mxu0 %v368
  %v803 = vpop.f32.mrf.mxu0
  %v804 = vadd.f32 %v715, %v803
  %v805 = vpop.f32.mrf.mxu0
  %v806 = vadd.f32 %v717, %v805
  %807 = vmatmul.bf16.gmra.mxu0 %v371
  %v808 = vpop.f32.mrf.mxu0
  %v809 = vadd.f32 %v720, %v808
  %v810 = vpop.f32.mrf.mxu0
  %v811 = vadd.f32 %v722, %v810
  %812 = vmatmul.bf16.gmra.mxu0 %v374
  %v813 = vpop.f32.mrf.mxu0
  %v814 = vadd.f32 %v725, %v813
  %v815 = vpop.f32.mrf.mxu0
  %v816 = vadd.f32 %v727, %v815
  %817 = vmatmul.bf16.gmra.mxu0 %v377
  %v818 = vpop.f32.mrf.mxu0
  %v819 = vadd.f32 %v730, %v818
  %v820 = vpop.f32.mrf.mxu0
  %v821 = vadd.f32 %v732, %v820
  %822 = vmatmul.bf16.gmra.mxu0 %v380
  %v823 = vpop.f32.mrf.mxu0
  %v824 = vadd.f32 %v735, %v823
  %v825 = vpop.f32.mrf.mxu0
  %v826 = vadd.f32 %v737, %v825
  %827 = vmatmul.bf16.gmra.mxu0 %v383
  %v828 = vpop.f32.mrf.mxu0
  %v829 = vadd.f32 %v740, %v828
  %v830 = vpop.f32.mrf.mxu0
  %v831 = vadd.f32 %v742, %v830
  %832 = vmatmul.bf16.gmra.mxu0 %v386
  %v833 = vpop.f32.mrf.mxu0
  %v834 = vadd.f32 %v745, %v833
  %v835 = vpop.f32.mrf.mxu0
  %v836 = vadd.f32 %v747, %v835
  %837 = vmatmul.bf16.gmra.mxu0 %v389
  %v838 = vpop.f32.mrf.mxu0
  %v839 = vadd.f32 %v750, %v838
  %v840 = vpop.f32.mrf.mxu0
  %v841 = vadd.f32 %v752, %v840
  %842 = vmatmul.bf16.gmra.mxu0 %v392
  %v843 = vpop.f32.mrf.mxu0
  %v844 = vadd.f32 %v755, %v843
  %v845 = vpop.f32.mrf.mxu0
  %v846 = vadd.f32 %v757, %v845
  %847 = vmatmul.bf16.gmra.mxu0 %v395
  %v848 = vpop.f32.mrf.mxu0
  %v849 = vadd.f32 %v760, %v848
  %v850 = vpop.f32.mrf.mxu0
  %v851 = vadd.f32 %v762, %v850
  %852 = vmatmul.bf16.gmra.mxu0 %v398
  %v853 = vpop.f32.mrf.mxu0
  %v854 = vadd.f32 %v765, %v853
  %v855 = vpop.f32.mrf.mxu0
  %v856 = vadd.f32 %v767, %v855
  %857 = vdwg.mxu0
  %v858 = vadd.f32 %v47, %v779
  %v859 = vadd.f32 %v48, %v781
  %v860 = vadd.f32 %v49, %v784
  %v861 = vadd.f32 %v50, %v786
  %v862 = vadd.f32 %v51, %v789
  %v863 = vadd.f32 %v52, %v791
  %v864 = vadd.f32 %v53, %v794
  %v865 = vadd.f32 %v54, %v796
  %v866 = vadd.f32 %v55, %v799
  %v867 = vadd.f32 %v56, %v801
  %v868 = vadd.f32 %v57, %v804
  %v869 = vadd.f32 %v58, %v806
  %v870 = vadd.f32 %v59, %v809
  %v871 = vadd.f32 %v60, %v811
  %v872 = vadd.f32 %v61, %v814
  %v873 = vadd.f32 %v62, %v816
  %v874 = vadd.f32 %v63, %v819
  %v875 = vadd.f32 %v64, %v821
  %v876 = vadd.f32 %v65, %v824
  %v877 = vadd.f32 %v66, %v826
  %v878 = vadd.f32 %v67, %v829
  %v879 = vadd.f32 %v68, %v831
  %v880 = vadd.f32 %v69, %v834
  %v881 = vadd.f32 %v70, %v836
  %v882 = vadd.f32 %v71, %v839
  %v883 = vadd.f32 %v72, %v841
  %v884 = vadd.f32 %v73, %v844
  %v885 = vadd.f32 %v74, %v846
  %v886 = vadd.f32 %v75, %v849
  %v887 = vadd.f32 %v76, %v851
  %v888 = vadd.f32 %v77, %v854
  %v889 = vadd.f32 %v78, %v856
  %890 = vst [vmem:[#allocation2] sm:$0xff] %v858
  %891 = vst [vmem:[#allocation2 + $0x8] sm:$0xff] %v859
  %892 = vst [vmem:[#allocation2 + $0x10] sm:$0xff] %v860
  %893 = vst [vmem:[#allocation2 + $0x18] sm:$0xff] %v861
  %894 = vst [vmem:[#allocation2 + $0x20] sm:$0xff] %v862
  %895 = vst [vmem:[#allocation2 + $0x28] sm:$0xff] %v863
  %896 = vst [vmem:[#allocation2 + $0x30] sm:$0xff] %v864
  %897 = vst [vmem:[#allocation2 + $0x38] sm:$0xff] %v865
  %898 = vst [vmem:[#allocation2 + $0x40] sm:$0xff] %v866
  %899 = vst [vmem:[#allocation2 + $0x48] sm:$0xff] %v867
  %900 = vst [vmem:[#allocation2 + $0x50] sm:$0xff] %v868
  %901 = vst [vmem:[#allocation2 + $0x58] sm:$0xff] %v869
  %902 = vst [vmem:[#allocation2 + $0x60] sm:$0xff] %v870
  %903 = vst [vmem:[#allocation2 + $0x68] sm:$0xff] %v871
  %904 = vst [vmem:[#allocation2 + $0x70] sm:$0xff] %v872
  %905 = vst [vmem:[#allocation2 + $0x78] sm:$0xff] %v873
  %906 = vst [vmem:[#allocation2 + $0x80] sm:$0xff] %v874
  %907 = vst [vmem:[#allocation2 + $0x88] sm:$0xff] %v875
  %908 = vst [vmem:[#allocation2 + $0x90] sm:$0xff] %v876
  %909 = vst [vmem:[#allocation2 + $0x98] sm:$0xff] %v877
  %910 = vst [vmem:[#allocation2 + $0xa0] sm:$0xff] %v878
  %911 = vst [vmem:[#allocation2 + $0xa8] sm:$0xff] %v879
  %912 = vst [vmem:[#allocation2 + $0xb0] sm:$0xff] %v880
  %913 = vst [vmem:[#allocation2 + $0xb8] sm:$0xff] %v881
  %914 = vst [vmem:[#allocation2 + $0xc0] sm:$0xff] %v882
  %915 = vst [vmem:[#allocation2 + $0xc8] sm:$0xff] %v883
  %916 = vst [vmem:[#allocation2 + $0xd0] sm:$0xff] %v884
  %917 = vst [vmem:[#allocation2 + $0xd8] sm:$0xff] %v885
  %918 = vst [vmem:[#allocation2 + $0xe0] sm:$0xff] %v886
  %919 = vst [vmem:[#allocation2 + $0xe8] sm:$0xff] %v887
  %920 = vst [vmem:[#allocation2 + $0xf0] sm:$0xff] %v888
  %921 = vst [vmem:[#allocation2 + $0xf8] sm:$0xff] %v889
  // Predicated region
  $region14: #{lightgcn_forward.7} parent=0 // pred_check
    %p922 = pneg %p11
  $region15: #{lightgcn_forward.7} parent=0 // pred_check_branch
    %924 = sbr.rel (%p922) target = $region17
  $region16: #{lightgcn_forward.7} parent=0 // pred_region
    %v925 = vld [vmem:[#allocation2] sm:$0xff]
    %v926 = vld [vmem:[#allocation2 + $0x8] sm:$0xff]
    %v927 = vld [vmem:[#allocation2 + $0x10] sm:$0xff]
    %v928 = vld [vmem:[#allocation2 + $0x18] sm:$0xff]
    %v929 = vld [vmem:[#allocation2 + $0x20] sm:$0xff]
    %v930 = vld [vmem:[#allocation2 + $0x28] sm:$0xff]
    %v931 = vld [vmem:[#allocation2 + $0x30] sm:$0xff]
    %v932 = vld [vmem:[#allocation2 + $0x38] sm:$0xff]
    %v933 = vld [vmem:[#allocation2 + $0x40] sm:$0xff]
    %v934 = vld [vmem:[#allocation2 + $0x48] sm:$0xff]
    %v935 = vld [vmem:[#allocation2 + $0x50] sm:$0xff]
    %v936 = vld [vmem:[#allocation2 + $0x58] sm:$0xff]
    %v937 = vld [vmem:[#allocation2 + $0x60] sm:$0xff]
    %v938 = vld [vmem:[#allocation2 + $0x68] sm:$0xff]
    %v939 = vld [vmem:[#allocation2 + $0x70] sm:$0xff]
    %v940 = vld [vmem:[#allocation2 + $0x78] sm:$0xff]
    %v941 = vld [vmem:[#allocation2 + $0x80] sm:$0xff]
    %v942 = vld [vmem:[#allocation2 + $0x88] sm:$0xff]
    %v943 = vld [vmem:[#allocation2 + $0x90] sm:$0xff]
    %v944 = vld [vmem:[#allocation2 + $0x98] sm:$0xff]
    %v945 = vld [vmem:[#allocation2 + $0xa0] sm:$0xff]
    %v946 = vld [vmem:[#allocation2 + $0xa8] sm:$0xff]
    %v947 = vld [vmem:[#allocation2 + $0xb0] sm:$0xff]
    %v948 = vld [vmem:[#allocation2 + $0xb8] sm:$0xff]
    %v949 = vld [vmem:[#allocation2 + $0xc0] sm:$0xff]
    %v950 = vld [vmem:[#allocation2 + $0xc8] sm:$0xff]
    %v951 = vld [vmem:[#allocation2 + $0xd0] sm:$0xff]
    %v952 = vld [vmem:[#allocation2 + $0xd8] sm:$0xff]
    %v953 = vld [vmem:[#allocation2 + $0xe0] sm:$0xff]
    %v954 = vld [vmem:[#allocation2 + $0xe8] sm:$0xff]
    %v955 = vld [vmem:[#allocation2 + $0xf0] sm:$0xff]
    %v956 = vld [vmem:[#allocation2 + $0xf8] sm:$0xff]
    %v957 = vpack.c.bf16 %v925, %v925
    %v958 = vpack.c.bf16 %v926, %v926
    %v959 = vpack.c.bf16 %v927, %v927
    %v960 = vpack.c.bf16 %v928, %v928
    %v961 = vpack.c.bf16 %v929, %v929
    %v962 = vpack.c.bf16 %v930, %v930
    %v963 = vpack.c.bf16 %v931, %v931
    %v964 = vpack.c.bf16 %v932, %v932
    %v965 = vpack.c.bf16 %v933, %v933
    %v966 = vpack.c.bf16 %v934, %v934
    %v967 = vpack.c.bf16 %v935, %v935
    %v968 = vpack.c.bf16 %v936, %v936
    %v969 = vpack.c.bf16 %v937, %v937
    %v970 = vpack.c.bf16 %v938, %v938
    %v971 = vpack.c.bf16 %v939, %v939
    %v972 = vpack.c.bf16 %v940, %v940
    %v973 = vpack.c.bf16 %v941, %v941
    %v974 = vpack.c.bf16 %v942, %v942
    %v975 = vpack.c.bf16 %v943, %v943
    %v976 = vpack.c.bf16 %v944, %v944
    %v977 = vpack.c.bf16 %v945, %v945
    %v978 = vpack.c.bf16 %v946, %v946
    %v979 = vpack.c.bf16 %v947, %v947
    %v980 = vpack.c.bf16 %v948, %v948
    %v981 = vpack.c.bf16 %v949, %v949
    %v982 = vpack.c.bf16 %v950, %v950
    %v983 = vpack.c.bf16 %v951, %v951
    %v984 = vpack.c.bf16 %v952, %v952
    %v985 = vpack.c.bf16 %v953, %v953
    %v986 = vpack.c.bf16 %v954, %v954
    %v987 = vpack.c.bf16 %v955, %v955
    %v988 = vpack.c.bf16 %v956, %v956
    %989 = vst [vmem:[%s2] sm:$0xf] %v957
    %990 = vst [vmem:[%s2 + $0x4] sm:$0xf] %v958
    %991 = vst [vmem:[%s2 + $0x8] sm:$0xf] %v959
    %992 = vst [vmem:[%s2 + $0xc] sm:$0xf] %v960
    %993 = vst [vmem:[%s2 + $0x10] sm:$0xf] %v961
    %994 = vst [vmem:[%s2 + $0x14] sm:$0xf] %v962
    %995 = vst [vmem:[%s2 + $0x18] sm:$0xf] %v963
    %996 = vst [vmem:[%s2 + $0x1c] sm:$0xf] %v964
    %997 = vst [vmem:[%s2 + $0x20] sm:$0xf] %v965
    %998 = vst [vmem:[%s2 + $0x24] sm:$0xf] %v966
    %999 = vst [vmem:[%s2 + $0x28] sm:$0xf] %v967
    %1000 = vst [vmem:[%s2 + $0x2c] sm:$0xf] %v968
    %1001 = vst [vmem:[%s2 + $0x30] sm:$0xf] %v969
    %1002 = vst [vmem:[%s2 + $0x34] sm:$0xf] %v970
    %1003 = vst [vmem:[%s2 + $0x38] sm:$0xf] %v971
    %1004 = vst [vmem:[%s2 + $0x3c] sm:$0xf] %v972
    %1005 = vst [vmem:[%s2 + $0x40] sm:$0xf] %v973
    %1006 = vst [vmem:[%s2 + $0x44] sm:$0xf] %v974
    %1007 = vst [vmem:[%s2 + $0x48] sm:$0xf] %v975
    %1008 = vst [vmem:[%s2 + $0x4c] sm:$0xf] %v976
    %1009 = vst [vmem:[%s2 + $0x50] sm:$0xf] %v977
    %1010 = vst [vmem:[%s2 + $0x54] sm:$0xf] %v978
    %1011 = vst [vmem:[%s2 + $0x58] sm:$0xf] %v979
    %1012 = vst [vmem:[%s2 + $0x5c] sm:$0xf] %v980
    %1013 = vst [vmem:[%s2 + $0x60] sm:$0xf] %v981
    %1014 = vst [vmem:[%s2 + $0x64] sm:$0xf] %v982
    %1015 = vst [vmem:[%s2 + $0x68] sm:$0xf] %v983
    %1016 = vst [vmem:[%s2 + $0x6c] sm:$0xf] %v984
    %1017 = vst [vmem:[%s2 + $0x70] sm:$0xf] %v985
    %1018 = vst [vmem:[%s2 + $0x74] sm:$0xf] %v986
    %1019 = vst [vmem:[%s2 + $0x78] sm:$0xf] %v987
    %1020 = vst [vmem:[%s2 + $0x7c] sm:$0xf] %v988
  $region17: #{lightgcn_forward.7} parent=0 // pred_fallthru
    _
  // Predicated region
  $region18: #{lightgcn_forward.7} parent=0 // pred_check
    _
  $region19: #{lightgcn_forward.7} parent=0 // pred_check_branch
    %1022 = sbr.rel (0) target = $region21
  $region20: #{lightgcn_forward.7} parent=0 // pred_region
    _
  $region21: #{lightgcn_forward.7} parent=0 // pred_fallthru
    _
  // Predicated region
  $region22: #{lightgcn_forward.7} parent=0 // pred_check
    _
  $region23: #{lightgcn_forward.7} parent=0 // pred_check_branch
    %1024 = sbr.rel (0) target = $region25
  $region24: #{lightgcn_forward.7} parent=0 // pred_region
    _
  $region25: #{lightgcn_forward.7} parent=0 // pred_fallthru
    _

// kernel: lightgcn_forward.10
$region0: #{lightgcn_forward.10}
  #allocation0 [shape = 'u32[]', space=smem, size = 0x4, offset = 0x4, fixed_abs, tag = 'smem constant byte address 0x4 - core index']
  #allocation1 [shape = 'u32[72,128]{1,0:T(1,128)}', space=vmem, size = 0x9000, scoped, tag = 'internal scratch']
  #allocation2 [shape = 'f32[384,128]{1,0:T(8,128)}', space=vmem, size = 0x30000, scoped, tag = 'scratch operand']
  %s0 = inlined_call_operand.vmem [shape: bf16[256,384], index: 0, kind: input, shape index: {}]
  %s1 = inlined_call_operand.vmem [shape: bf16[256,128], index: 1, kind: input, shape index: {}]
  %s2 = inlined_call_operand.vmem [shape: bf16[384,128], index: 2, kind: output, shape index: {}]
  %s3 = sld [smem:[#allocation0]]
  $region26: #{lightgcn_forward.10} parent=0
    _
  %s5 = ssub.s32 1, %s3
  %s6 = scalar_select 0, %s5, %s3
  // Predicated region
  $region2: #{lightgcn_forward.10} parent=0 // pred_check
    _
  $region3: #{lightgcn_forward.10} parent=0 // pred_check_branch
    %8 = sbr.rel (0) target = $region5
  $region4: #{lightgcn_forward.10} parent=0 // pred_region
    _
  $region5: #{lightgcn_forward.10} parent=0 // pred_fallthru
    _
  // Predicated region
  $region6: #{lightgcn_forward.10} parent=0 // pred_check
    _
  $region7: #{lightgcn_forward.10} parent=0 // pred_check_branch
    %10 = sbr.rel (0) target = $region9
  $region8: #{lightgcn_forward.10} parent=0 // pred_region
    _
  $region9: #{lightgcn_forward.10} parent=0 // pred_fallthru
    _
  %p11 = scmp.eq.s32.totalorder 0, 0
  // Predicated region
  $region10: #{lightgcn_forward.10} parent=0 // pred_check
    %p12 = pneg %p11
  $region11: #{lightgcn_forward.10} parent=0 // pred_check_branch
    %14 = sbr.rel (%p12) target = $region13
  $region12: #{lightgcn_forward.10} parent=0 // pred_region
    %15 = vst [vmem:[#allocation2] sm:$0xff] 0.0
    %16 = vst [vmem:[#allocation2 + $0x8] sm:$0xff] 0.0
    %17 = vst [vmem:[#allocation2 + $0x10] sm:$0xff] 0.0
    %18 = vst [vmem:[#allocation2 + $0x18] sm:$0xff] 0.0
    %19 = vst [vmem:[#allocation2 + $0x20] sm:$0xff] 0.0
    %20 = vst [vmem:[#allocation2 + $0x28] sm:$0xff] 0.0
    %21 = vst [vmem:[#allocation2 + $0x30] sm:$0xff] 0.0
    %22 = vst [vmem:[#allocation2 + $0x38] sm:$0xff] 0.0
    %23 = vst [vmem:[#allocation2 + $0x40] sm:$0xff] 0.0
    %24 = vst [vmem:[#allocation2 + $0x48] sm:$0xff] 0.0
    %25 = vst [vmem:[#allocation2 + $0x50] sm:$0xff] 0.0
    %26 = vst [vmem:[#allocation2 + $0x58] sm:$0xff] 0.0
    %27 = vst [vmem:[#allocation2 + $0x60] sm:$0xff] 0.0
    %28 = vst [vmem:[#allocation2 + $0x68] sm:$0xff] 0.0
    %29 = vst [vmem:[#allocation2 + $0x70] sm:$0xff] 0.0
    %30 = vst [vmem:[#allocation2 + $0x78] sm:$0xff] 0.0
    %31 = vst [vmem:[#allocation2 + $0x80] sm:$0xff] 0.0
    %32 = vst [vmem:[#allocation2 + $0x88] sm:$0xff] 0.0
    %33 = vst [vmem:[#allocation2 + $0x90] sm:$0xff] 0.0
    %34 = vst [vmem:[#allocation2 + $0x98] sm:$0xff] 0.0
    %35 = vst [vmem:[#allocation2 + $0xa0] sm:$0xff] 0.0
    %36 = vst [vmem:[#allocation2 + $0xa8] sm:$0xff] 0.0
    %37 = vst [vmem:[#allocation2 + $0xb0] sm:$0xff] 0.0
    %38 = vst [vmem:[#allocation2 + $0xb8] sm:$0xff] 0.0
    %39 = vst [vmem:[#allocation2 + $0xc0] sm:$0xff] 0.0
    %40 = vst [vmem:[#allocation2 + $0xc8] sm:$0xff] 0.0
    %41 = vst [vmem:[#allocation2 + $0xd0] sm:$0xff] 0.0
    %42 = vst [vmem:[#allocation2 + $0xd8] sm:$0xff] 0.0
    %43 = vst [vmem:[#allocation2 + $0xe0] sm:$0xff] 0.0
    %44 = vst [vmem:[#allocation2 + $0xe8] sm:$0xff] 0.0
    %45 = vst [vmem:[#allocation2 + $0xf0] sm:$0xff] 0.0
    %46 = vst [vmem:[#allocation2 + $0xf8] sm:$0xff] 0.0
    %47 = vst [vmem:[#allocation2 + $0x100] sm:$0xff] 0.0
    %48 = vst [vmem:[#allocation2 + $0x108] sm:$0xff] 0.0
    %49 = vst [vmem:[#allocation2 + $0x110] sm:$0xff] 0.0
    %50 = vst [vmem:[#allocation2 + $0x118] sm:$0xff] 0.0
    %51 = vst [vmem:[#allocation2 + $0x120] sm:$0xff] 0.0
    %52 = vst [vmem:[#allocation2 + $0x128] sm:$0xff] 0.0
    %53 = vst [vmem:[#allocation2 + $0x130] sm:$0xff] 0.0
    %54 = vst [vmem:[#allocation2 + $0x138] sm:$0xff] 0.0
    %55 = vst [vmem:[#allocation2 + $0x140] sm:$0xff] 0.0
    %56 = vst [vmem:[#allocation2 + $0x148] sm:$0xff] 0.0
    %57 = vst [vmem:[#allocation2 + $0x150] sm:$0xff] 0.0
    %58 = vst [vmem:[#allocation2 + $0x158] sm:$0xff] 0.0
    %59 = vst [vmem:[#allocation2 + $0x160] sm:$0xff] 0.0
    %60 = vst [vmem:[#allocation2 + $0x168] sm:$0xff] 0.0
    %61 = vst [vmem:[#allocation2 + $0x170] sm:$0xff] 0.0
    %62 = vst [vmem:[#allocation2 + $0x178] sm:$0xff] 0.0
  $region13: #{lightgcn_forward.10} parent=0 // pred_fallthru
    _
  %v63 = vld [vmem:[#allocation2] sm:$0xff]
  %v64 = vld [vmem:[#allocation2 + $0x8] sm:$0xff]
  %v65 = vld [vmem:[#allocation2 + $0x10] sm:$0xff]
  %v66 = vld [vmem:[#allocation2 + $0x18] sm:$0xff]
  %v67 = vld [vmem:[#allocation2 + $0x20] sm:$0xff]
  %v68 = vld [vmem:[#allocation2 + $0x28] sm:$0xff]
  %v69 = vld [vmem:[#allocation2 + $0x30] sm:$0xff]
  %v70 = vld [vmem:[#allocation2 + $0x38] sm:$0xff]
  %v71 = vld [vmem:[#allocation2 + $0x40] sm:$0xff]
  %v72 = vld [vmem:[#allocation2 + $0x48] sm:$0xff]
  %v73 = vld [vmem:[#allocation2 + $0x50] sm:$0xff]
  %v74 = vld [vmem:[#allocation2 + $0x58] sm:$0xff]
  %v75 = vld [vmem:[#allocation2 + $0x60] sm:$0xff]
  %v76 = vld [vmem:[#allocation2 + $0x68] sm:$0xff]
  %v77 = vld [vmem:[#allocation2 + $0x70] sm:$0xff]
  %v78 = vld [vmem:[#allocation2 + $0x78] sm:$0xff]
  %v79 = vld [vmem:[#allocation2 + $0x80] sm:$0xff]
  %v80 = vld [vmem:[#allocation2 + $0x88] sm:$0xff]
  %v81 = vld [vmem:[#allocation2 + $0x90] sm:$0xff]
  %v82 = vld [vmem:[#allocation2 + $0x98] sm:$0xff]
  %v83 = vld [vmem:[#allocation2 + $0xa0] sm:$0xff]
  %v84 = vld [vmem:[#allocation2 + $0xa8] sm:$0xff]
  %v85 = vld [vmem:[#allocation2 + $0xb0] sm:$0xff]
  %v86 = vld [vmem:[#allocation2 + $0xb8] sm:$0xff]
  %v87 = vld [vmem:[#allocation2 + $0xc0] sm:$0xff]
  %v88 = vld [vmem:[#allocation2 + $0xc8] sm:$0xff]
  %v89 = vld [vmem:[#allocation2 + $0xd0] sm:$0xff]
  %v90 = vld [vmem:[#allocation2 + $0xd8] sm:$0xff]
  %v91 = vld [vmem:[#allocation2 + $0xe0] sm:$0xff]
  %v92 = vld [vmem:[#allocation2 + $0xe8] sm:$0xff]
  %v93 = vld [vmem:[#allocation2 + $0xf0] sm:$0xff]
  %v94 = vld [vmem:[#allocation2 + $0xf8] sm:$0xff]
  %v95 = vld [vmem:[#allocation2 + $0x100] sm:$0xff]
  %v96 = vld [vmem:[#allocation2 + $0x108] sm:$0xff]
  %v97 = vld [vmem:[#allocation2 + $0x110] sm:$0xff]
  %v98 = vld [vmem:[#allocation2 + $0x118] sm:$0xff]
  %v99 = vld [vmem:[#allocation2 + $0x120] sm:$0xff]
  %v100 = vld [vmem:[#allocation2 + $0x128] sm:$0xff]
  %v101 = vld [vmem:[#allocation2 + $0x130] sm:$0xff]
  %v102 = vld [vmem:[#allocation2 + $0x138] sm:$0xff]
  %v103 = vld [vmem:[#allocation2 + $0x140] sm:$0xff]
  %v104 = vld [vmem:[#allocation2 + $0x148] sm:$0xff]
  %v105 = vld [vmem:[#allocation2 + $0x150] sm:$0xff]
  %v106 = vld [vmem:[#allocation2 + $0x158] sm:$0xff]
  %v107 = vld [vmem:[#allocation2 + $0x160] sm:$0xff]
  %v108 = vld [vmem:[#allocation2 + $0x168] sm:$0xff]
  %v109 = vld [vmem:[#allocation2 + $0x170] sm:$0xff]
  %v110 = vld [vmem:[#allocation2 + $0x178] sm:$0xff]
  %v111 = vld [vmem:[%s0] sm:$0xff]
  %v112 = vld [vmem:[%s0 + $0x8] sm:$0xf]
  %v113 = vld [vmem:[%s0 + $0xc] sm:$0xff]
  %v114 = vld [vmem:[%s0 + $0x14] sm:$0xf]
  %v115 = vld [vmem:[%s0 + $0x18] sm:$0xff]
  %v116 = vld [vmem:[%s0 + $0x20] sm:$0xf]
  %v117 = vld [vmem:[%s0 + $0x24] sm:$0xff]
  %v118 = vld [vmem:[%s0 + $0x2c] sm:$0xf]
  %v119 = vld [vmem:[%s0 + $0x30] sm:$0xff]
  %v120 = vld [vmem:[%s0 + $0x38] sm:$0xf]
  %v121 = vld [vmem:[%s0 + $0x3c] sm:$0xff]
  %v122 = vld [vmem:[%s0 + $0x44] sm:$0xf]
  %v123 = vld [vmem:[%s0 + $0x48] sm:$0xff]
  %v124 = vld [vmem:[%s0 + $0x50] sm:$0xf]
  %v125 = vld [vmem:[%s0 + $0x54] sm:$0xff]
  %v126 = vld [vmem:[%s0 + $0x5c] sm:$0xf]
  %v127 = vld [vmem:[%s0 + $0x60] sm:$0xff]
  %v128 = vld [vmem:[%s0 + $0x68] sm:$0xf]
  %v129 = vld [vmem:[%s0 + $0x6c] sm:$0xff]
  %v130 = vld [vmem:[%s0 + $0x74] sm:$0xf]
  %v131 = vld [vmem:[%s0 + $0x78] sm:$0xff]
  %v132 = vld [vmem:[%s0 + $0x80] sm:$0xf]
  %v133 = vld [vmem:[%s0 + $0x84] sm:$0xff]
  %v134 = vld [vmem:[%s0 + $0x8c] sm:$0xf]
  %v135 = vld [vmem:[%s0 + $0x90] sm:$0xff]
  %v136 = vld [vmem:[%s0 + $0x98] sm:$0xf]
  %v137 = vld [vmem:[%s0 + $0x9c] sm:$0xff]
  %v138 = vld [vmem:[%s0 + $0xa4] sm:$0xf]
  %v139 = vld [vmem:[%s0 + $0xa8] sm:$0xff]
  %v140 = vld [vmem:[%s0 + $0xb0] sm:$0xf]
  %v141 = vld [vmem:[%s0 + $0xb4] sm:$0xff]
  %v142 = vld [vmem:[%s0 + $0xbc] sm:$0xf]
  %v143 = vld [vmem:[%s0 + $0xc0] sm:$0xff]
  %v144 = vld [vmem:[%s0 + $0xc8] sm:$0xf]
  %v145 = vld [vmem:[%s0 + $0xcc] sm:$0xff]
  %v146 = vld [vmem:[%s0 + $0xd4] sm:$0xf]
  %v147 = vld [vmem:[%s0 + $0xd8] sm:$0xff]
  %v148 = vld [vmem:[%s0 + $0xe0] sm:$0xf]
  %v149 = vld [vmem:[%s0 + $0xe4] sm:$0xff]
  %v150 = vld [vmem:[%s0 + $0xec] sm:$0xf]
  %v151 = vld [vmem:[%s0 + $0xf0] sm:$0xff]
  %v152 = vld [vmem:[%s0 + $0xf8] sm:$0xf]
  %v153 = vld [vmem:[%s0 + $0xfc] sm:$0xff]
  %v154 = vld [vmem:[%s0 + $0x104] sm:$0xf]
  %v155 = vld [vmem:[%s0 + $0x108] sm:$0xff]
  %v156 = vld [vmem:[%s0 + $0x110] sm:$0xf]
  %v157 = vld [vmem:[%s0 + $0x114] sm:$0xff]
  %v158 = vld [vmem:[%s0 + $0x11c] sm:$0xf]
  %v159 = vld [vmem:[%s0 + $0x120] sm:$0xff]
  %v160 = vld [vmem:[%s0 + $0x128] sm:$0xf]
  %v161 = vld [vmem:[%s0 + $0x12c] sm:$0xff]
  %v162 = vld [vmem:[%s0 + $0x134] sm:$0xf]
  %v163 = vld [vmem:[%s0 + $0x138] sm:$0xff]
  %v164 = vld [vmem:[%s0 + $0x140] sm:$0xf]
  %v165 = vld [vmem:[%s0 + $0x144] sm:$0xff]
  %v166 = vld [vmem:[%s0 + $0x14c] sm:$0xf]
  %v167 = vld [vmem:[%s0 + $0x150] sm:$0xff]
  %v168 = vld [vmem:[%s0 + $0x158] sm:$0xf]
  %v169 = vld [vmem:[%s0 + $0x15c] sm:$0xff]
  %v170 = vld [vmem:[%s0 + $0x164] sm:$0xf]
  %v171 = vld [vmem:[%s0 + $0x168] sm:$0xff]
  %v172 = vld [vmem:[%s0 + $0x170] sm:$0xf]
  %v173 = vld [vmem:[%s0 + $0x174] sm:$0xff]
  %v174 = vld [vmem:[%s0 + $0x17c] sm:$0xf]
  %v175 = vld [vmem:[%s1] sm:$0xf]
  %v176 = vld [vmem:[%s1 + $0x4] sm:$0xf]
  %v177 = vld [vmem:[%s1 + $0x8] sm:$0xf]
  %v178 = vld [vmem:[%s1 + $0xc] sm:$0xf]
  %v179 = vld [vmem:[%s1 + $0x10] sm:$0xf]
  %v180 = vld [vmem:[%s1 + $0x14] sm:$0xf]
  %v181 = vld [vmem:[%s1 + $0x18] sm:$0xf]
  %v182 = vld [vmem:[%s1 + $0x1c] sm:$0xf]
  %v183 = vld [vmem:[%s1 + $0x20] sm:$0xf]
  %v184 = vld [vmem:[%s1 + $0x24] sm:$0xf]
  %v185 = vld [vmem:[%s1 + $0x28] sm:$0xf]
  %v186 = vld [vmem:[%s1 + $0x2c] sm:$0xf]
  %v187 = vld [vmem:[%s1 + $0x30] sm:$0xf]
  %v188 = vld [vmem:[%s1 + $0x34] sm:$0xf]
  %v189 = vld [vmem:[%s1 + $0x38] sm:$0xf]
  %v190 = vld [vmem:[%s1 + $0x3c] sm:$0xf]
  %v191 = vld [vmem:[%s1 + $0x40] sm:$0xf]
  %v192 = vld [vmem:[%s1 + $0x44] sm:$0xf]
  %v193 = vld [vmem:[%s1 + $0x48] sm:$0xf]
  %v194 = vld [vmem:[%s1 + $0x4c] sm:$0xf]
  %v195 = vld [vmem:[%s1 + $0x50] sm:$0xf]
  %v196 = vld [vmem:[%s1 + $0x54] sm:$0xf]
  %v197 = vld [vmem:[%s1 + $0x58] sm:$0xf]
  %v198 = vld [vmem:[%s1 + $0x5c] sm:$0xf]
  %v199 = vld [vmem:[%s1 + $0x60] sm:$0xf]
  %v200 = vld [vmem:[%s1 + $0x64] sm:$0xf]
  %v201 = vld [vmem:[%s1 + $0x68] sm:$0xf]
  %v202 = vld [vmem:[%s1 + $0x6c] sm:$0xf]
  %v203 = vld [vmem:[%s1 + $0x70] sm:$0xf]
  %v204 = vld [vmem:[%s1 + $0x74] sm:$0xf]
  %v205 = vld [vmem:[%s1 + $0x78] sm:$0xf]
  %v206 = vld [vmem:[%s1 + $0x7c] sm:$0xf]
  %v271 = vunpack.c.l.b16 %v111
  %v272 = vunpack.c.h.b16 %v111
  %v273 = vunpack.c.l.b16 %v112
  %v274 = vunpack.c.l.b16 %v113
  %v275 = vunpack.c.h.b16 %v113
  %v276 = vunpack.c.l.b16 %v114
  %v277 = vunpack.c.l.b16 %v115
  %v278 = vunpack.c.h.b16 %v115
  %v279 = vunpack.c.l.b16 %v116
  %v280 = vunpack.c.l.b16 %v117
  %v281 = vunpack.c.h.b16 %v117
  %v282 = vunpack.c.l.b16 %v118
  %v283 = vunpack.c.l.b16 %v119
  %v284 = vunpack.c.h.b16 %v119
  %v285 = vunpack.c.l.b16 %v120
  %v286 = vunpack.c.l.b16 %v121
  %v287 = vunpack.c.h.b16 %v121
  %v288 = vunpack.c.l.b16 %v122
  %v289 = vunpack.c.l.b16 %v123
  %v290 = vunpack.c.h.b16 %v123
  %v291 = vunpack.c.l.b16 %v124
  %v292 = vunpack.c.l.b16 %v125
  %v293 = vunpack.c.h.b16 %v125
  %v294 = vunpack.c.l.b16 %v126
  %v295 = vunpack.c.l.b16 %v127
  %v296 = vunpack.c.h.b16 %v127
  %v297 = vunpack.c.l.b16 %v128
  %v298 = vunpack.c.l.b16 %v129
  %v299 = vunpack.c.h.b16 %v129
  %v300 = vunpack.c.l.b16 %v130
  %v301 = vunpack.c.l.b16 %v131
  %v302 = vunpack.c.h.b16 %v131
  %v303 = vunpack.c.l.b16 %v132
  %v304 = vunpack.c.l.b16 %v133
  %v305 = vunpack.c.h.b16 %v133
  %v306 = vunpack.c.l.b16 %v134
  %v307 = vunpack.c.l.b16 %v135
  %v308 = vunpack.c.h.b16 %v135
  %v309 = vunpack.c.l.b16 %v136
  %v310 = vunpack.c.l.b16 %v137
  %v311 = vunpack.c.h.b16 %v137
  %v312 = vunpack.c.l.b16 %v138
  %v313 = vunpack.c.l.b16 %v139
  %v314 = vunpack.c.h.b16 %v139
  %v315 = vunpack.c.l.b16 %v140
  %v316 = vunpack.c.l.b16 %v141
  %v317 = vunpack.c.h.b16 %v141
  %v318 = vunpack.c.l.b16 %v142
  %v319 = vunpack.c.l.b16 %v143
  %v320 = vunpack.c.h.b16 %v143
  %v321 = vunpack.c.l.b16 %v144
  %v322 = vunpack.c.l.b16 %v145
  %v323 = vunpack.c.h.b16 %v145
  %v324 = vunpack.c.l.b16 %v146
  %v325 = vunpack.c.l.b16 %v147
  %v326 = vunpack.c.h.b16 %v147
  %v327 = vunpack.c.l.b16 %v148
  %v328 = vunpack.c.l.b16 %v149
  %v329 = vunpack.c.h.b16 %v149
  %v330 = vunpack.c.l.b16 %v150
  %v331 = vunpack.c.l.b16 %v151
  %v332 = vunpack.c.h.b16 %v151
  %v333 = vunpack.c.l.b16 %v152
  %v334 = vunpack.c.l.b16 %v153
  %v335 = vunpack.c.h.b16 %v153
  %v336 = vunpack.c.l.b16 %v154
  %v337 = vunpack.c.l.b16 %v155
  %v338 = vunpack.c.h.b16 %v155
  %v339 = vunpack.c.l.b16 %v156
  %v340 = vunpack.c.l.b16 %v157
  %v341 = vunpack.c.h.b16 %v157
  %v342 = vunpack.c.l.b16 %v158
  %v343 = vunpack.c.l.b16 %v159
  %v344 = vunpack.c.h.b16 %v159
  %v345 = vunpack.c.l.b16 %v160
  %v346 = vunpack.c.l.b16 %v161
  %v347 = vunpack.c.h.b16 %v161
  %v348 = vunpack.c.l.b16 %v162
  %v349 = vunpack.c.l.b16 %v163
  %v350 = vunpack.c.h.b16 %v163
  %v351 = vunpack.c.l.b16 %v164
  %v352 = vunpack.c.l.b16 %v165
  %v353 = vunpack.c.h.b16 %v165
  %v354 = vunpack.c.l.b16 %v166
  %v355 = vunpack.c.l.b16 %v167
  %v356 = vunpack.c.h.b16 %v167
  %v357 = vunpack.c.l.b16 %v168
  %v358 = vunpack.c.l.b16 %v169
  %v359 = vunpack.c.h.b16 %v169
  %v360 = vunpack.c.l.b16 %v170
  %v361 = vunpack.c.l.b16 %v171
  %v362 = vunpack.c.h.b16 %v171
  %v363 = vunpack.c.l.b16 %v172
  %v364 = vunpack.c.l.b16 %v173
  %v365 = vunpack.c.h.b16 %v173
  %v366 = vunpack.c.l.b16 %v174
  %v367 = vpack.c.b16 %v274, %v271
  %v368 = vpack.c.b16 %v275, %v272
  %v369 = vpack.c.b16 %v276, %v273
  %v370 = vpack.c.b16 %v280, %v277
  %v371 = vpack.c.b16 %v281, %v278
  %v372 = vpack.c.b16 %v282, %v279
  %v373 = vpack.c.b16 %v286, %v283
  %v374 = vpack.c.b16 %v287, %v284
  %v375 = vpack.c.b16 %v288, %v285
  %v376 = vpack.c.b16 %v292, %v289
  %v377 = vpack.c.b16 %v293, %v290
  %v378 = vpack.c.b16 %v294, %v291
  %v379 = vpack.c.b16 %v298, %v295
  %v380 = vpack.c.b16 %v299, %v296
  %v381 = vpack.c.b16 %v300, %v297
  %v382 = vpack.c.b16 %v304, %v301
  %v383 = vpack.c.b16 %v305, %v302
  %v384 = vpack.c.b16 %v306, %v303
  %v385 = vpack.c.b16 %v310, %v307
  %v386 = vpack.c.b16 %v311, %v308
  %v387 = vpack.c.b16 %v312, %v309
  %v388 = vpack.c.b16 %v316, %v313
  %v389 = vpack.c.b16 %v317, %v314
  %v390 = vpack.c.b16 %v318, %v315
  %v391 = vpack.c.b16 %v322, %v319
  %v392 = vpack.c.b16 %v323, %v320
  %v393 = vpack.c.b16 %v324, %v321
  %v394 = vpack.c.b16 %v328, %v325
  %v395 = vpack.c.b16 %v329, %v326
  %v396 = vpack.c.b16 %v330, %v327
  %v397 = vpack.c.b16 %v334, %v331
  %v398 = vpack.c.b16 %v335, %v332
  %v399 = vpack.c.b16 %v336, %v333
  %v400 = vpack.c.b16 %v340, %v337
  %v401 = vpack.c.b16 %v341, %v338
  %v402 = vpack.c.b16 %v342, %v339
  %v403 = vpack.c.b16 %v346, %v343
  %v404 = vpack.c.b16 %v347, %v344
  %v405 = vpack.c.b16 %v348, %v345
  %v406 = vpack.c.b16 %v352, %v349
  %v407 = vpack.c.b16 %v353, %v350
  %v408 = vpack.c.b16 %v354, %v351
  %v409 = vpack.c.b16 %v358, %v355
  %v410 = vpack.c.b16 %v359, %v356
  %v411 = vpack.c.b16 %v360, %v357
  %v412 = vpack.c.b16 %v364, %v361
  %v413 = vpack.c.b16 %v365, %v362
  %v414 = vpack.c.b16 %v366, %v363
  %463 = vxpose.binary.xlu0.c.b16.start [1/16] %v368, %v367, 128
  %464 = vxpose.binary.xlu0.c.b16.cont [2/16] %v371, %v370, 128
  %465 = vxpose.binary.xlu0.c.b16.cont [3/16] %v374, %v373, 128
  %466 = vxpose.binary.xlu0.c.b16.cont [4/16] %v377, %v376, 128
  %467 = vxpose.binary.xlu0.c.b16.cont [5/16] %v380, %v379, 128
  %468 = vxpose.binary.xlu0.c.b16.cont [6/16] %v383, %v382, 128
  %469 = vxpose.binary.xlu0.c.b16.cont [7/16] %v386, %v385, 128
  %470 = vxpose.binary.xlu0.c.b16.end [8/16] %v389, %v388, 128
  %v471 = vpop.trf.xlu0
  %v472 = vpop.trf.xlu0
  %v473 = vpop.trf.xlu0
  %v474 = vpop.trf.xlu0
  %v475 = vpop.trf.xlu0
  %v476 = vpop.trf.xlu0
  %v477 = vpop.trf.xlu0
  %v478 = vpop.trf.xlu0
  %v479 = vpop.trf.xlu0
  %v480 = vpop.trf.xlu0
  %v481 = vpop.trf.xlu0
  %v482 = vpop.trf.xlu0
  %v483 = vpop.trf.xlu0
  %v484 = vpop.trf.xlu0
  %v485 = vpop.trf.xlu0
  %v486 = vpop.trf.xlu0
  %487 = vxpose.xlu0.c.b16.start [1/8] %v369, 128
  %488 = vxpose.xlu0.c.b16.cont [2/8] %v372, 128
  %489 = vxpose.xlu0.c.b16.cont [3/8] %v375, 128
  %490 = vxpose.xlu0.c.b16.cont [4/8] %v378, 128
  %491 = vxpose.xlu0.c.b16.cont [5/8] %v381, 128
  %492 = vxpose.xlu0.c.b16.cont [6/8] %v384, 128
  %493 = vxpose.xlu0.c.b16.cont [7/8] %v387, 128
  %494 = vxpose.xlu0.c.b16.end [8/8] %v390, 128
  %v495 = vpop.trf.xlu0
  %v496 = vpop.trf.xlu0
  %v497 = vpop.trf.xlu0
  %v498 = vpop.trf.xlu0
  %v499 = vpop.trf.xlu0
  %v500 = vpop.trf.xlu0
  %v501 = vpop.trf.xlu0
  %v502 = vpop.trf.xlu0
  %503 = vxpose.binary.xlu0.c.b16.start [1/16] %v392, %v391, 128
  %504 = vxpose.binary.xlu0.c.b16.cont [2/16] %v395, %v394, 128
  %505 = vxpose.binary.xlu0.c.b16.cont [3/16] %v398, %v397, 128
  %506 = vxpose.binary.xlu0.c.b16.cont [4/16] %v401, %v400, 128
  %507 = vxpose.binary.xlu0.c.b16.cont [5/16] %v404, %v403, 128
  %508 = vxpose.binary.xlu0.c.b16.cont [6/16] %v407, %v406, 128
  %509 = vxpose.binary.xlu0.c.b16.cont [7/16] %v410, %v409, 128
  %510 = vxpose.binary.xlu0.c.b16.end [8/16] %v413, %v412, 128
  %v511 = vpop.trf.xlu0
  %v512 = vpop.trf.xlu0
  %v513 = vpop.trf.xlu0
  %v514 = vpop.trf.xlu0
  %v515 = vpop.trf.xlu0
  %v516 = vpop.trf.xlu0
  %v517 = vpop.trf.xlu0
  %v518 = vpop.trf.xlu0
  %v519 = vpop.trf.xlu0
  %v520 = vpop.trf.xlu0
  %v521 = vpop.trf.xlu0
  %v522 = vpop.trf.xlu0
  %v523 = vpop.trf.xlu0
  %v524 = vpop.trf.xlu0
  %v525 = vpop.trf.xlu0
  %v526 = vpop.trf.xlu0
  %527 = vxpose.xlu0.c.b16.start [1/8] %v393, 128
  %528 = vxpose.xlu0.c.b16.cont [2/8] %v396, 128
  %529 = vxpose.xlu0.c.b16.cont [3/8] %v399, 128
  %530 = vxpose.xlu0.c.b16.cont [4/8] %v402, 128
  %531 = vxpose.xlu0.c.b16.cont [5/8] %v405, 128
  %532 = vxpose.xlu0.c.b16.cont [6/8] %v408, 128
  %533 = vxpose.xlu0.c.b16.cont [7/8] %v411, 128
  %534 = vxpose.xlu0.c.b16.end [8/8] %v414, 128
  %v535 = vpop.trf.xlu0
  %v536 = vpop.trf.xlu0
  %v537 = vpop.trf.xlu0
  %v538 = vpop.trf.xlu0
  %v539 = vpop.trf.xlu0
  %v540 = vpop.trf.xlu0
  %v541 = vpop.trf.xlu0
  %v542 = vpop.trf.xlu0
  %v575 = vunpack.c.l.b16 %v175
  %v576 = vunpack.c.l.b16 %v176
  %v577 = vunpack.c.l.b16 %v177
  %v578 = vunpack.c.l.b16 %v178
  %v579 = vunpack.c.l.b16 %v179
  %v580 = vunpack.c.l.b16 %v180
  %v581 = vunpack.c.l.b16 %v181
  %v582 = vunpack.c.l.b16 %v182
  %v583 = vunpack.c.l.b16 %v183
  %v584 = vunpack.c.l.b16 %v184
  %v585 = vunpack.c.l.b16 %v185
  %v586 = vunpack.c.l.b16 %v186
  %v587 = vunpack.c.l.b16 %v187
  %v588 = vunpack.c.l.b16 %v188
  %v589 = vunpack.c.l.b16 %v189
  %v590 = vunpack.c.l.b16 %v190
  %v591 = vunpack.c.l.b16 %v191
  %v592 = vunpack.c.l.b16 %v192
  %v593 = vunpack.c.l.b16 %v193
  %v594 = vunpack.c.l.b16 %v194
  %v595 = vunpack.c.l.b16 %v195
  %v596 = vunpack.c.l.b16 %v196
  %v597 = vunpack.c.l.b16 %v197
  %v598 = vunpack.c.l.b16 %v198
  %v599 = vunpack.c.l.b16 %v199
  %v600 = vunpack.c.l.b16 %v200
  %v601 = vunpack.c.l.b16 %v201
  %v602 = vunpack.c.l.b16 %v202
  %v603 = vunpack.c.l.b16 %v203
  %v604 = vunpack.c.l.b16 %v204
  %v605 = vunpack.c.l.b16 %v205
  %v606 = vunpack.c.l.b16 %v206
  %v607 = vpack.c.b16 %v576, %v575
  %v608 = vpack.c.b16 %v578, %v577
  %v609 = vpack.c.b16 %v580, %v579
  %v610 = vpack.c.b16 %v582, %v581
  %v611 = vpack.c.b16 %v584, %v583
  %v612 = vpack.c.b16 %v586, %v585
  %v613 = vpack.c.b16 %v588, %v587
  %v614 = vpack.c.b16 %v590, %v589
  %v615 = vpack.c.b16 %v592, %v591
  %v616 = vpack.c.b16 %v594, %v593
  %v617 = vpack.c.b16 %v596, %v595
  %v618 = vpack.c.b16 %v598, %v597
  %v619 = vpack.c.b16 %v600, %v599
  %v620 = vpack.c.b16 %v602, %v601
  %v621 = vpack.c.b16 %v604, %v603
  %v622 = vpack.c.b16 %v606, %v605
  %639 = vmatpush.bf16.msra.mxu0 %v614
  %640 = vmatpush.bf16.msra.mxu0 %v613
  %641 = vmatpush.bf16.msra.mxu0 %v612
  %642 = vmatpush.bf16.msra.mxu0 %v611
  %643 = vmatpush.bf16.msra.mxu0 %v610
  %644 = vmatpush.bf16.msra.mxu0 %v609
  %645 = vmatpush.bf16.msra.mxu0 %v608
  %646 = vmatpush.bf16.msra.mxu0 %v607
  %647 = vmatmul.bf16.gmra.mxu0 %v471
  %v648 = vpop.f32.mrf.mxu0
  %v649 = vadd.f32 0.0, %v648
  %v650 = vpop.f32.mrf.mxu0
  %v651 = vadd.f32 0.0, %v650
  %652 = vmatmul.bf16.gmra.mxu0 %v473
  %v653 = vpop.f32.mrf.mxu0
  %v654 = vadd.f32 0.0, %v653
  %v655 = vpop.f32.mrf.mxu0
  %v656 = vadd.f32 0.0, %v655
  %657 = vmatmul.bf16.gmra.mxu0 %v475
  %v658 = vpop.f32.mrf.mxu0
  %v659 = vadd.f32 0.0, %v658
  %v660 = vpop.f32.mrf.mxu0
  %v661 = vadd.f32 0.0, %v660
  %662 = vmatmul.bf16.gmra.mxu0 %v477
  %v663 = vpop.f32.mrf.mxu0
  %v664 = vadd.f32 0.0, %v663
  %v665 = vpop.f32.mrf.mxu0
  %v666 = vadd.f32 0.0, %v665
  %667 = vmatmul.bf16.gmra.mxu0 %v479
  %v668 = vpop.f32.mrf.mxu0
  %v669 = vadd.f32 0.0, %v668
  %v670 = vpop.f32.mrf.mxu0
  %v671 = vadd.f32 0.0, %v670
  %672 = vmatmul.bf16.gmra.mxu0 %v481
  %v673 = vpop.f32.mrf.mxu0
  %v674 = vadd.f32 0.0, %v673
  %v675 = vpop.f32.mrf.mxu0
  %v676 = vadd.f32 0.0, %v675
  %677 = vmatmul.bf16.gmra.mxu0 %v483
  %v678 = vpop.f32.mrf.mxu0
  %v679 = vadd.f32 0.0, %v678
  %v680 = vpop.f32.mrf.mxu0
  %v681 = vadd.f32 0.0, %v680
  %682 = vmatmul.bf16.gmra.mxu0 %v485
  %v683 = vpop.f32.mrf.mxu0
  %v684 = vadd.f32 0.0, %v683
  %v685 = vpop.f32.mrf.mxu0
  %v686 = vadd.f32 0.0, %v685
  %687 = vmatmul.bf16.gmra.mxu0 %v472
  %v688 = vpop.f32.mrf.mxu0
  %v689 = vadd.f32 0.0, %v688
  %v690 = vpop.f32.mrf.mxu0
  %v691 = vadd.f32 0.0, %v690
  %692 = vmatmul.bf16.gmra.mxu0 %v474
  %v693 = vpop.f32.mrf.mxu0
  %v694 = vadd.f32 0.0, %v693
  %v695 = vpop.f32.mrf.mxu0
  %v696 = vadd.f32 0.0, %v695
  %697 = vmatmul.bf16.gmra.mxu0 %v476
  %v698 = vpop.f32.mrf.mxu0
  %v699 = vadd.f32 0.0, %v698
  %v700 = vpop.f32.mrf.mxu0
  %v701 = vadd.f32 0.0, %v700
  %702 = vmatmul.bf16.gmra.mxu0 %v478
  %v703 = vpop.f32.mrf.mxu0
  %v704 = vadd.f32 0.0, %v703
  %v705 = vpop.f32.mrf.mxu0
  %v706 = vadd.f32 0.0, %v705
  %707 = vmatmul.bf16.gmra.mxu0 %v480
  %v708 = vpop.f32.mrf.mxu0
  %v709 = vadd.f32 0.0, %v708
  %v710 = vpop.f32.mrf.mxu0
  %v711 = vadd.f32 0.0, %v710
  %712 = vmatmul.bf16.gmra.mxu0 %v482
  %v713 = vpop.f32.mrf.mxu0
  %v714 = vadd.f32 0.0, %v713
  %v715 = vpop.f32.mrf.mxu0
  %v716 = vadd.f32 0.0, %v715
  %717 = vmatmul.bf16.gmra.mxu0 %v484
  %v718 = vpop.f32.mrf.mxu0
  %v719 = vadd.f32 0.0, %v718
  %v720 = vpop.f32.mrf.mxu0
  %v721 = vadd.f32 0.0, %v720
  %722 = vmatmul.bf16.gmra.mxu0 %v486
  %v723 = vpop.f32.mrf.mxu0
  %v724 = vadd.f32 0.0, %v723
  %v725 = vpop.f32.mrf.mxu0
  %v726 = vadd.f32 0.0, %v725
  %727 = vmatmul.bf16.gmra.mxu0 %v495
  %v728 = vpop.f32.mrf.mxu0
  %v729 = vadd.f32 0.0, %v728
  %v730 = vpop.f32.mrf.mxu0
  %v731 = vadd.f32 0.0, %v730
  %732 = vmatmul.bf16.gmra.mxu0 %v496
  %v733 = vpop.f32.mrf.mxu0
  %v734 = vadd.f32 0.0, %v733
  %v735 = vpop.f32.mrf.mxu0
  %v736 = vadd.f32 0.0, %v735
  %737 = vmatmul.bf16.gmra.mxu0 %v497
  %v738 = vpop.f32.mrf.mxu0
  %v739 = vadd.f32 0.0, %v738
  %v740 = vpop.f32.mrf.mxu0
  %v741 = vadd.f32 0.0, %v740
  %742 = vmatmul.bf16.gmra.mxu0 %v498
  %v743 = vpop.f32.mrf.mxu0
  %v744 = vadd.f32 0.0, %v743
  %v745 = vpop.f32.mrf.mxu0
  %v746 = vadd.f32 0.0, %v745
  %747 = vmatmul.bf16.gmra.mxu0 %v499
  %v748 = vpop.f32.mrf.mxu0
  %v749 = vadd.f32 0.0, %v748
  %v750 = vpop.f32.mrf.mxu0
  %v751 = vadd.f32 0.0, %v750
  %752 = vmatmul.bf16.gmra.mxu0 %v500
  %v753 = vpop.f32.mrf.mxu0
  %v754 = vadd.f32 0.0, %v753
  %v755 = vpop.f32.mrf.mxu0
  %v756 = vadd.f32 0.0, %v755
  %757 = vmatmul.bf16.gmra.mxu0 %v501
  %v758 = vpop.f32.mrf.mxu0
  %v759 = vadd.f32 0.0, %v758
  %v760 = vpop.f32.mrf.mxu0
  %v761 = vadd.f32 0.0, %v760
  %762 = vmatmul.bf16.gmra.mxu0 %v502
  %v763 = vpop.f32.mrf.mxu0
  %v764 = vadd.f32 0.0, %v763
  %v765 = vpop.f32.mrf.mxu0
  %v766 = vadd.f32 0.0, %v765
  %767 = vdwg.mxu0
  %768 = vmatpush.bf16.msra.mxu0 %v622
  %769 = vmatpush.bf16.msra.mxu0 %v621
  %770 = vmatpush.bf16.msra.mxu0 %v620
  %771 = vmatpush.bf16.msra.mxu0 %v619
  %772 = vmatpush.bf16.msra.mxu0 %v618
  %773 = vmatpush.bf16.msra.mxu0 %v617
  %774 = vmatpush.bf16.msra.mxu0 %v616
  %775 = vmatpush.bf16.msra.mxu0 %v615
  %776 = vmatmul.bf16.gmra.mxu0 %v511
  %v777 = vpop.f32.mrf.mxu0
  %v778 = vadd.f32 %v649, %v777
  %v779 = vpop.f32.mrf.mxu0
  %v780 = vadd.f32 %v651, %v779
  %781 = vmatmul.bf16.gmra.mxu0 %v513
  %v782 = vpop.f32.mrf.mxu0
  %v783 = vadd.f32 %v654, %v782
  %v784 = vpop.f32.mrf.mxu0
  %v785 = vadd.f32 %v656, %v784
  %786 = vmatmul.bf16.gmra.mxu0 %v515
  %v787 = vpop.f32.mrf.mxu0
  %v788 = vadd.f32 %v659, %v787
  %v789 = vpop.f32.mrf.mxu0
  %v790 = vadd.f32 %v661, %v789
  %791 = vmatmul.bf16.gmra.mxu0 %v517
  %v792 = vpop.f32.mrf.mxu0
  %v793 = vadd.f32 %v664, %v792
  %v794 = vpop.f32.mrf.mxu0
  %v795 = vadd.f32 %v666, %v794
  %796 = vmatmul.bf16.gmra.mxu0 %v519
  %v797 = vpop.f32.mrf.mxu0
  %v798 = vadd.f32 %v669, %v797
  %v799 = vpop.f32.mrf.mxu0
  %v800 = vadd.f32 %v671, %v799
  %801 = vmatmul.bf16.gmra.mxu0 %v521
  %v802 = vpop.f32.mrf.mxu0
  %v803 = vadd.f32 %v674, %v802
  %v804 = vpop.f32.mrf.mxu0
  %v805 = vadd.f32 %v676, %v804
  %806 = vmatmul.bf16.gmra.mxu0 %v523
  %v807 = vpop.f32.mrf.mxu0
  %v808 = vadd.f32 %v679, %v807
  %v809 = vpop.f32.mrf.mxu0
  %v810 = vadd.f32 %v681, %v809
  %811 = vmatmul.bf16.gmra.mxu0 %v525
  %v812 = vpop.f32.mrf.mxu0
  %v813 = vadd.f32 %v684, %v812
  %v814 = vpop.f32.mrf.mxu0
  %v815 = vadd.f32 %v686, %v814
  %816 = vmatmul.bf16.gmra.mxu0 %v512
  %v817 = vpop.f32.mrf.mxu0
  %v818 = vadd.f32 %v689, %v817
  %v819 = vpop.f32.mrf.mxu0
  %v820 = vadd.f32 %v691, %v819
  %821 = vmatmul.bf16.gmra.mxu0 %v514
  %v822 = vpop.f32.mrf.mxu0
  %v823 = vadd.f32 %v694, %v822
  %v824 = vpop.f32.mrf.mxu0
  %v825 = vadd.f32 %v696, %v824
  %826 = vmatmul.bf16.gmra.mxu0 %v516
  %v827 = vpop.f32.mrf.mxu0
  %v828 = vadd.f32 %v699, %v827
  %v829 = vpop.f32.mrf.mxu0
  %v830 = vadd.f32 %v701, %v829
  %831 = vmatmul.bf16.gmra.mxu0 %v518
  %v832 = vpop.f32.mrf.mxu0
  %v833 = vadd.f32 %v704, %v832
  %v834 = vpop.f32.mrf.mxu0
  %v835 = vadd.f32 %v706, %v834
  %836 = vmatmul.bf16.gmra.mxu0 %v520
  %v837 = vpop.f32.mrf.mxu0
  %v838 = vadd.f32 %v709, %v837
  %v839 = vpop.f32.mrf.mxu0
  %v840 = vadd.f32 %v711, %v839
  %841 = vmatmul.bf16.gmra.mxu0 %v522
  %v842 = vpop.f32.mrf.mxu0
  %v843 = vadd.f32 %v714, %v842
  %v844 = vpop.f32.mrf.mxu0
  %v845 = vadd.f32 %v716, %v844
  %846 = vmatmul.bf16.gmra.mxu0 %v524
  %v847 = vpop.f32.mrf.mxu0
  %v848 = vadd.f32 %v719, %v847
  %v849 = vpop.f32.mrf.mxu0
  %v850 = vadd.f32 %v721, %v849
  %851 = vmatmul.bf16.gmra.mxu0 %v526
  %v852 = vpop.f32.mrf.mxu0
  %v853 = vadd.f32 %v724, %v852
  %v854 = vpop.f32.mrf.mxu0
  %v855 = vadd.f32 %v726, %v854
  %856 = vmatmul.bf16.gmra.mxu0 %v535
  %v857 = vpop.f32.mrf.mxu0
  %v858 = vadd.f32 %v729, %v857
  %v859 = vpop.f32.mrf.mxu0
  %v860 = vadd.f32 %v731, %v859
  %861 = vmatmul.bf16.gmra.mxu0 %v536
  %v862 = vpop.f32.mrf.mxu0
  %v863 = vadd.f32 %v734, %v862
  %v864 = vpop.f32.mrf.mxu0
  %v865 = vadd.f32 %v736, %v864
  %866 = vmatmul.bf16.gmra.mxu0 %v537
  %v867 = vpop.f32.mrf.mxu0
  %v868 = vadd.f32 %v739, %v867
  %v869 = vpop.f32.mrf.mxu0
  %v870 = vadd.f32 %v741, %v869
  %871 = vmatmul.bf16.gmra.mxu0 %v538
  %v872 = vpop.f32.mrf.mxu0
  %v873 = vadd.f32 %v744, %v872
  %v874 = vpop.f32.mrf.mxu0
  %v875 = vadd.f32 %v746, %v874
  %876 = vmatmul.bf16.gmra.mxu0 %v539
  %v877 = vpop.f32.mrf.mxu0
  %v878 = vadd.f32 %v749, %v877
  %v879 = vpop.f32.mrf.mxu0
  %v880 = vadd.f32 %v751, %v879
  %881 = vmatmul.bf16.gmra.mxu0 %v540
  %v882 = vpop.f32.mrf.mxu0
  %v883 = vadd.f32 %v754, %v882
  %v884 = vpop.f32.mrf.mxu0
  %v885 = vadd.f32 %v756, %v884
  %886 = vmatmul.bf16.gmra.mxu0 %v541
  %v887 = vpop.f32.mrf.mxu0
  %v888 = vadd.f32 %v759, %v887
  %v889 = vpop.f32.mrf.mxu0
  %v890 = vadd.f32 %v761, %v889
  %891 = vmatmul.bf16.gmra.mxu0 %v542
  %v892 = vpop.f32.mrf.mxu0
  %v893 = vadd.f32 %v764, %v892
  %v894 = vpop.f32.mrf.mxu0
  %v895 = vadd.f32 %v766, %v894
  %896 = vdwg.mxu0
  %v897 = vadd.f32 %v63, %v778
  %v898 = vadd.f32 %v64, %v780
  %v899 = vadd.f32 %v65, %v783
  %v900 = vadd.f32 %v66, %v785
  %v901 = vadd.f32 %v67, %v788
  %v902 = vadd.f32 %v68, %v790
  %v903 = vadd.f32 %v69, %v793
  %v904 = vadd.f32 %v70, %v795
  %v905 = vadd.f32 %v71, %v798
  %v906 = vadd.f32 %v72, %v800
  %v907 = vadd.f32 %v73, %v803
  %v908 = vadd.f32 %v74, %v805
  %v909 = vadd.f32 %v75, %v808
  %v910 = vadd.f32 %v76, %v810
  %v911 = vadd.f32 %v77, %v813
  %v912 = vadd.f32 %v78, %v815
  %v913 = vadd.f32 %v79, %v818
  %v914 = vadd.f32 %v80, %v820
  %v915 = vadd.f32 %v81, %v823
  %v916 = vadd.f32 %v82, %v825
  %v917 = vadd.f32 %v83, %v828
  %v918 = vadd.f32 %v84, %v830
  %v919 = vadd.f32 %v85, %v833
  %v920 = vadd.f32 %v86, %v835
  %v921 = vadd.f32 %v87, %v838
  %v922 = vadd.f32 %v88, %v840
  %v923 = vadd.f32 %v89, %v843
  %v924 = vadd.f32 %v90, %v845
  %v925 = vadd.f32 %v91, %v848
  %v926 = vadd.f32 %v92, %v850
  %v927 = vadd.f32 %v93, %v853
  %v928 = vadd.f32 %v94, %v855
  %v929 = vadd.f32 %v95, %v858
  %v930 = vadd.f32 %v96, %v860
  %v931 = vadd.f32 %v97, %v863
  %v932 = vadd.f32 %v98, %v865
  %v933 = vadd.f32 %v99, %v868
  %v934 = vadd.f32 %v100, %v870
  %v935 = vadd.f32 %v101, %v873
  %v936 = vadd.f32 %v102, %v875
  %v937 = vadd.f32 %v103, %v878
  %v938 = vadd.f32 %v104, %v880
  %v939 = vadd.f32 %v105, %v883
  %v940 = vadd.f32 %v106, %v885
  %v941 = vadd.f32 %v107, %v888
  %v942 = vadd.f32 %v108, %v890
  %v943 = vadd.f32 %v109, %v893
  %v944 = vadd.f32 %v110, %v895
  %945 = vst [vmem:[#allocation2] sm:$0xff] %v897
  %946 = vst [vmem:[#allocation2 + $0x8] sm:$0xff] %v898
  %947 = vst [vmem:[#allocation2 + $0x10] sm:$0xff] %v899
  %948 = vst [vmem:[#allocation2 + $0x18] sm:$0xff] %v900
  %949 = vst [vmem:[#allocation2 + $0x20] sm:$0xff] %v901
  %950 = vst [vmem:[#allocation2 + $0x28] sm:$0xff] %v902
  %951 = vst [vmem:[#allocation2 + $0x30] sm:$0xff] %v903
  %952 = vst [vmem:[#allocation2 + $0x38] sm:$0xff] %v904
  %953 = vst [vmem:[#allocation2 + $0x40] sm:$0xff] %v905
  %954 = vst [vmem:[#allocation2 + $0x48] sm:$0xff] %v906
  %955 = vst [vmem:[#allocation2 + $0x50] sm:$0xff] %v907
  %956 = vst [vmem:[#allocation2 + $0x58] sm:$0xff] %v908
  %957 = vst [vmem:[#allocation2 + $0x60] sm:$0xff] %v909
  %958 = vst [vmem:[#allocation2 + $0x68] sm:$0xff] %v910
  %959 = vst [vmem:[#allocation2 + $0x70] sm:$0xff] %v911
  %960 = vst [vmem:[#allocation2 + $0x78] sm:$0xff] %v912
  %961 = vst [vmem:[#allocation2 + $0x80] sm:$0xff] %v913
  %962 = vst [vmem:[#allocation2 + $0x88] sm:$0xff] %v914
  %963 = vst [vmem:[#allocation2 + $0x90] sm:$0xff] %v915
  %964 = vst [vmem:[#allocation2 + $0x98] sm:$0xff] %v916
  %965 = vst [vmem:[#allocation2 + $0xa0] sm:$0xff] %v917
  %966 = vst [vmem:[#allocation2 + $0xa8] sm:$0xff] %v918
  %967 = vst [vmem:[#allocation2 + $0xb0] sm:$0xff] %v919
  %968 = vst [vmem:[#allocation2 + $0xb8] sm:$0xff] %v920
  %969 = vst [vmem:[#allocation2 + $0xc0] sm:$0xff] %v921
  %970 = vst [vmem:[#allocation2 + $0xc8] sm:$0xff] %v922
  %971 = vst [vmem:[#allocation2 + $0xd0] sm:$0xff] %v923
  %972 = vst [vmem:[#allocation2 + $0xd8] sm:$0xff] %v924
  %973 = vst [vmem:[#allocation2 + $0xe0] sm:$0xff] %v925
  %974 = vst [vmem:[#allocation2 + $0xe8] sm:$0xff] %v926
  %975 = vst [vmem:[#allocation2 + $0xf0] sm:$0xff] %v927
  %976 = vst [vmem:[#allocation2 + $0xf8] sm:$0xff] %v928
  %977 = vst [vmem:[#allocation2 + $0x100] sm:$0xff] %v929
  %978 = vst [vmem:[#allocation2 + $0x108] sm:$0xff] %v930
  %979 = vst [vmem:[#allocation2 + $0x110] sm:$0xff] %v931
  %980 = vst [vmem:[#allocation2 + $0x118] sm:$0xff] %v932
  %981 = vst [vmem:[#allocation2 + $0x120] sm:$0xff] %v933
  %982 = vst [vmem:[#allocation2 + $0x128] sm:$0xff] %v934
  %983 = vst [vmem:[#allocation2 + $0x130] sm:$0xff] %v935
  %984 = vst [vmem:[#allocation2 + $0x138] sm:$0xff] %v936
  %985 = vst [vmem:[#allocation2 + $0x140] sm:$0xff] %v937
  %986 = vst [vmem:[#allocation2 + $0x148] sm:$0xff] %v938
  %987 = vst [vmem:[#allocation2 + $0x150] sm:$0xff] %v939
  %988 = vst [vmem:[#allocation2 + $0x158] sm:$0xff] %v940
  %989 = vst [vmem:[#allocation2 + $0x160] sm:$0xff] %v941
  %990 = vst [vmem:[#allocation2 + $0x168] sm:$0xff] %v942
  %991 = vst [vmem:[#allocation2 + $0x170] sm:$0xff] %v943
  %992 = vst [vmem:[#allocation2 + $0x178] sm:$0xff] %v944
  // Predicated region
  $region14: #{lightgcn_forward.10} parent=0 // pred_check
    %p993 = pneg %p11
  $region15: #{lightgcn_forward.10} parent=0 // pred_check_branch
    %995 = sbr.rel (%p993) target = $region17
  $region16: #{lightgcn_forward.10} parent=0 // pred_region
    %v996 = vld [vmem:[#allocation2] sm:$0xff]
    %v997 = vld [vmem:[#allocation2 + $0x8] sm:$0xff]
    %v998 = vld [vmem:[#allocation2 + $0x10] sm:$0xff]
    %v999 = vld [vmem:[#allocation2 + $0x18] sm:$0xff]
    %v1000 = vld [vmem:[#allocation2 + $0x20] sm:$0xff]
    %v1001 = vld [vmem:[#allocation2 + $0x28] sm:$0xff]
    %v1002 = vld [vmem:[#allocation2 + $0x30] sm:$0xff]
    %v1003 = vld [vmem:[#allocation2 + $0x38] sm:$0xff]
    %v1004 = vld [vmem:[#allocation2 + $0x40] sm:$0xff]
    %v1005 = vld [vmem:[#allocation2 + $0x48] sm:$0xff]
    %v1006 = vld [vmem:[#allocation2 + $0x50] sm:$0xff]
    %v1007 = vld [vmem:[#allocation2 + $0x58] sm:$0xff]
    %v1008 = vld [vmem:[#allocation2 + $0x60] sm:$0xff]
    %v1009 = vld [vmem:[#allocation2 + $0x68] sm:$0xff]
    %v1010 = vld [vmem:[#allocation2 + $0x70] sm:$0xff]
    %v1011 = vld [vmem:[#allocation2 + $0x78] sm:$0xff]
    %v1012 = vld [vmem:[#allocation2 + $0x80] sm:$0xff]
    %v1013 = vld [vmem:[#allocation2 + $0x88] sm:$0xff]
    %v1014 = vld [vmem:[#allocation2 + $0x90] sm:$0xff]
    %v1015 = vld [vmem:[#allocation2 + $0x98] sm:$0xff]
    %v1016 = vld [vmem:[#allocation2 + $0xa0] sm:$0xff]
    %v1017 = vld [vmem:[#allocation2 + $0xa8] sm:$0xff]
    %v1018 = vld [vmem:[#allocation2 + $0xb0] sm:$0xff]
    %v1019 = vld [vmem:[#allocation2 + $0xb8] sm:$0xff]
    %v1020 = vld [vmem:[#allocation2 + $0xc0] sm:$0xff]
    %v1021 = vld [vmem:[#allocation2 + $0xc8] sm:$0xff]
    %v1022 = vld [vmem:[#allocation2 + $0xd0] sm:$0xff]
    %v1023 = vld [vmem:[#allocation2 + $0xd8] sm:$0xff]
    %v1024 = vld [vmem:[#allocation2 + $0xe0] sm:$0xff]
    %v1025 = vld [vmem:[#allocation2 + $0xe8] sm:$0xff]
    %v1026 = vld [vmem:[#allocation2 + $0xf0] sm:$0xff]
    %v1027 = vld [vmem:[#allocation2 + $0xf8] sm:$0xff]
    %v1028 = vld [vmem:[#allocation2 + $0x100] sm:$0xff]
    %v1029 = vld [vmem:[#allocation2 + $0x108] sm:$0xff]
    %v1030 = vld [vmem:[#allocation2 + $0x110] sm:$0xff]
    %v1031 = vld [vmem:[#allocation2 + $0x118] sm:$0xff]
    %v1032 = vld [vmem:[#allocation2 + $0x120] sm:$0xff]
    %v1033 = vld [vmem:[#allocation2 + $0x128] sm:$0xff]
    %v1034 = vld [vmem:[#allocation2 + $0x130] sm:$0xff]
    %v1035 = vld [vmem:[#allocation2 + $0x138] sm:$0xff]
    %v1036 = vld [vmem:[#allocation2 + $0x140] sm:$0xff]
    %v1037 = vld [vmem:[#allocation2 + $0x148] sm:$0xff]
    %v1038 = vld [vmem:[#allocation2 + $0x150] sm:$0xff]
    %v1039 = vld [vmem:[#allocation2 + $0x158] sm:$0xff]
    %v1040 = vld [vmem:[#allocation2 + $0x160] sm:$0xff]
    %v1041 = vld [vmem:[#allocation2 + $0x168] sm:$0xff]
    %v1042 = vld [vmem:[#allocation2 + $0x170] sm:$0xff]
    %v1043 = vld [vmem:[#allocation2 + $0x178] sm:$0xff]
    %v1044 = vpack.c.bf16 %v996, %v996
    %v1045 = vpack.c.bf16 %v997, %v997
    %v1046 = vpack.c.bf16 %v998, %v998
    %v1047 = vpack.c.bf16 %v999, %v999
    %v1048 = vpack.c.bf16 %v1000, %v1000
    %v1049 = vpack.c.bf16 %v1001, %v1001
    %v1050 = vpack.c.bf16 %v1002, %v1002
    %v1051 = vpack.c.bf16 %v1003, %v1003
    %v1052 = vpack.c.bf16 %v1004, %v1004
    %v1053 = vpack.c.bf16 %v1005, %v1005
    %v1054 = vpack.c.bf16 %v1006, %v1006
    %v1055 = vpack.c.bf16 %v1007, %v1007
    %v1056 = vpack.c.bf16 %v1008, %v1008
    %v1057 = vpack.c.bf16 %v1009, %v1009
    %v1058 = vpack.c.bf16 %v1010, %v1010
    %v1059 = vpack.c.bf16 %v1011, %v1011
    %v1060 = vpack.c.bf16 %v1012, %v1012
    %v1061 = vpack.c.bf16 %v1013, %v1013
    %v1062 = vpack.c.bf16 %v1014, %v1014
    %v1063 = vpack.c.bf16 %v1015, %v1015
    %v1064 = vpack.c.bf16 %v1016, %v1016
    %v1065 = vpack.c.bf16 %v1017, %v1017
    %v1066 = vpack.c.bf16 %v1018, %v1018
    %v1067 = vpack.c.bf16 %v1019, %v1019
    %v1068 = vpack.c.bf16 %v1020, %v1020
    %v1069 = vpack.c.bf16 %v1021, %v1021
    %v1070 = vpack.c.bf16 %v1022, %v1022
    %v1071 = vpack.c.bf16 %v1023, %v1023
    %v1072 = vpack.c.bf16 %v1024, %v1024
    %v1073 = vpack.c.bf16 %v1025, %v1025
    %v1074 = vpack.c.bf16 %v1026, %v1026
    %v1075 = vpack.c.bf16 %v1027, %v1027
    %v1076 = vpack.c.bf16 %v1028, %v1028
    %v1077 = vpack.c.bf16 %v1029, %v1029
    %v1078 = vpack.c.bf16 %v1030, %v1030
    %v1079 = vpack.c.bf16 %v1031, %v1031
    %v1080 = vpack.c.bf16 %v1032, %v1032
    %v1081 = vpack.c.bf16 %v1033, %v1033
    %v1082 = vpack.c.bf16 %v1034, %v1034
    %v1083 = vpack.c.bf16 %v1035, %v1035
    %v1084 = vpack.c.bf16 %v1036, %v1036
    %v1085 = vpack.c.bf16 %v1037, %v1037
    %v1086 = vpack.c.bf16 %v1038, %v1038
    %v1087 = vpack.c.bf16 %v1039, %v1039
    %v1088 = vpack.c.bf16 %v1040, %v1040
    %v1089 = vpack.c.bf16 %v1041, %v1041
    %v1090 = vpack.c.bf16 %v1042, %v1042
    %v1091 = vpack.c.bf16 %v1043, %v1043
    %1092 = vst [vmem:[%s2] sm:$0xf] %v1044
    %1093 = vst [vmem:[%s2 + $0x4] sm:$0xf] %v1045
    %1094 = vst [vmem:[%s2 + $0x8] sm:$0xf] %v1046
    %1095 = vst [vmem:[%s2 + $0xc] sm:$0xf] %v1047
    %1096 = vst [vmem:[%s2 + $0x10] sm:$0xf] %v1048
    %1097 = vst [vmem:[%s2 + $0x14] sm:$0xf] %v1049
    %1098 = vst [vmem:[%s2 + $0x18] sm:$0xf] %v1050
    %1099 = vst [vmem:[%s2 + $0x1c] sm:$0xf] %v1051
    %1100 = vst [vmem:[%s2 + $0x20] sm:$0xf] %v1052
    %1101 = vst [vmem:[%s2 + $0x24] sm:$0xf] %v1053
    %1102 = vst [vmem:[%s2 + $0x28] sm:$0xf] %v1054
    %1103 = vst [vmem:[%s2 + $0x2c] sm:$0xf] %v1055
    %1104 = vst [vmem:[%s2 + $0x30] sm:$0xf] %v1056
    %1105 = vst [vmem:[%s2 + $0x34] sm:$0xf] %v1057
    %1106 = vst [vmem:[%s2 + $0x38] sm:$0xf] %v1058
    %1107 = vst [vmem:[%s2 + $0x3c] sm:$0xf] %v1059
    %1108 = vst [vmem:[%s2 + $0x40] sm:$0xf] %v1060
    %1109 = vst [vmem:[%s2 + $0x44] sm:$0xf] %v1061
    %1110 = vst [vmem:[%s2 + $0x48] sm:$0xf] %v1062
    %1111 = vst [vmem:[%s2 + $0x4c] sm:$0xf] %v1063
    %1112 = vst [vmem:[%s2 + $0x50] sm:$0xf] %v1064
    %1113 = vst [vmem:[%s2 + $0x54] sm:$0xf] %v1065
    %1114 = vst [vmem:[%s2 + $0x58] sm:$0xf] %v1066
    %1115 = vst [vmem:[%s2 + $0x5c] sm:$0xf] %v1067
    %1116 = vst [vmem:[%s2 + $0x60] sm:$0xf] %v1068
    %1117 = vst [vmem:[%s2 + $0x64] sm:$0xf] %v1069
    %1118 = vst [vmem:[%s2 + $0x68] sm:$0xf] %v1070
    %1119 = vst [vmem:[%s2 + $0x6c] sm:$0xf] %v1071
    %1120 = vst [vmem:[%s2 + $0x70] sm:$0xf] %v1072
    %1121 = vst [vmem:[%s2 + $0x74] sm:$0xf] %v1073
    %1122 = vst [vmem:[%s2 + $0x78] sm:$0xf] %v1074
    %1123 = vst [vmem:[%s2 + $0x7c] sm:$0xf] %v1075
    %1124 = vst [vmem:[%s2 + $0x80] sm:$0xf] %v1076
    %1125 = vst [vmem:[%s2 + $0x84] sm:$0xf] %v1077
    %1126 = vst [vmem:[%s2 + $0x88] sm:$0xf] %v1078
    %1127 = vst [vmem:[%s2 + $0x8c] sm:$0xf] %v1079
    %1128 = vst [vmem:[%s2 + $0x90] sm:$0xf] %v1080
    %1129 = vst [vmem:[%s2 + $0x94] sm:$0xf] %v1081
    %1130 = vst [vmem:[%s2 + $0x98] sm:$0xf] %v1082
    %1131 = vst [vmem:[%s2 + $0x9c] sm:$0xf] %v1083
    %1132 = vst [vmem:[%s2 + $0xa0] sm:$0xf] %v1084
    %1133 = vst [vmem:[%s2 + $0xa4] sm:$0xf] %v1085
    %1134 = vst [vmem:[%s2 + $0xa8] sm:$0xf] %v1086
    %1135 = vst [vmem:[%s2 + $0xac] sm:$0xf] %v1087
    %1136 = vst [vmem:[%s2 + $0xb0] sm:$0xf] %v1088
    %1137 = vst [vmem:[%s2 + $0xb4] sm:$0xf] %v1089
    %1138 = vst [vmem:[%s2 + $0xb8] sm:$0xf] %v1090
    %1139 = vst [vmem:[%s2 + $0xbc] sm:$0xf] %v1091
  $region17: #{lightgcn_forward.10} parent=0 // pred_fallthru
    _
  // Predicated region
  $region18: #{lightgcn_forward.10} parent=0 // pred_check
    _
  $region19: #{lightgcn_forward.10} parent=0 // pred_check_branch
    %1141 = sbr.rel (0) target = $region21
  $region20: #{lightgcn_forward.10} parent=0 // pred_region
    _
  $region21: #{lightgcn_forward.10} parent=0 // pred_fallthru
    _
  // Predicated region
  $region22: #{lightgcn_forward.10} parent=0 // pred_check
    _
  $region23: #{lightgcn_forward.10} parent=0 // pred_check_branch
    %1143 = sbr.rel (0) target = $region25
  $region24: #{lightgcn_forward.10} parent=0 // pred_region
    _
  $region25: #{lightgcn_forward.10} parent=0 // pred_fallthru
    _

// kernel: lightgcn_forward.6
$region0: #{lightgcn_forward.6}
  #allocation0 [shape = 'u32[]', space=smem, size = 0x4, offset = 0x4, fixed_abs, tag = 'smem constant byte address 0x4 - core index']
  #allocation1 [shape = 'u32[72,128]{1,0:T(1,128)}', space=vmem, size = 0x9000, scoped, tag = 'internal scratch']
  %s0 = inlined_call_operand.vmem [shape: bf16[3,256,384], index: 0, kind: input, shape index: {}]
  %s1 = inlined_call_operand.vmem [shape: f32[3,256,1], index: 1, kind: input, shape index: {}]
  %s2 = inlined_call_operand.vmem [shape: f32[3,1,384], index: 2, kind: input, shape index: {}]
  %s3 = inlined_call_operand.vmem [shape: bf16[256,384], index: 3, kind: output, shape index: {}]
  %s4 = sld [smem:[#allocation0]]
  $region22: #{lightgcn_forward.6} parent=0
    _
  %s6 = ssub.s32 1, %s4
  %s7 = scalar_select 0, %s6, %s4
  // Predicated region
  $region2: #{lightgcn_forward.6} parent=0 // pred_check
    _
  $region3: #{lightgcn_forward.6} parent=0 // pred_check_branch
    %9 = sbr.rel (0) target = $region5
  $region4: #{lightgcn_forward.6} parent=0 // pred_region
    _
  $region5: #{lightgcn_forward.6} parent=0 // pred_fallthru
    _
  // Predicated region
  $region6: #{lightgcn_forward.6} parent=0 // pred_check
    _
  $region7: #{lightgcn_forward.6} parent=0 // pred_check_branch
    %11 = sbr.rel (0) target = $region9
  $region8: #{lightgcn_forward.6} parent=0 // pred_region
    _
  $region9: #{lightgcn_forward.6} parent=0 // pred_fallthru
    _
  // Predicated region
  $region10: #{lightgcn_forward.6} parent=0 // pred_check
    _
  $region11: #{lightgcn_forward.6} parent=0 // pred_check_branch
    %13 = sbr.rel (0) target = $region13
  $region12: #{lightgcn_forward.6} parent=0 // pred_region
    _
  $region13: #{lightgcn_forward.6} parent=0 // pred_fallthru
    _
  %v14 = vld [vmem:[%s0] sm:$0xff]
  %v15 = vld [vmem:[%s0 + $0x8] sm:$0xf]
  %v16 = vld [vmem:[%s0 + $0xc] sm:$0xff]
  %v17 = vld [vmem:[%s0 + $0x14] sm:$0xf]
  %v18 = vld [vmem:[%s0 + $0x18] sm:$0xff]
  %v19 = vld [vmem:[%s0 + $0x20] sm:$0xf]
  %v20 = vld [vmem:[%s0 + $0x24] sm:$0xff]
  %v21 = vld [vmem:[%s0 + $0x2c] sm:$0xf]
  %v22 = vld [vmem:[%s0 + $0x30] sm:$0xff]
  %v23 = vld [vmem:[%s0 + $0x38] sm:$0xf]
  %v24 = vld [vmem:[%s0 + $0x3c] sm:$0xff]
  %v25 = vld [vmem:[%s0 + $0x44] sm:$0xf]
  %v26 = vld [vmem:[%s0 + $0x48] sm:$0xff]
  %v27 = vld [vmem:[%s0 + $0x50] sm:$0xf]
  %v28 = vld [vmem:[%s0 + $0x54] sm:$0xff]
  %v29 = vld [vmem:[%s0 + $0x5c] sm:$0xf]
  %v30 = vld [vmem:[%s0 + $0x60] sm:$0xff]
  %v31 = vld [vmem:[%s0 + $0x68] sm:$0xf]
  %v32 = vld [vmem:[%s0 + $0x6c] sm:$0xff]
  %v33 = vld [vmem:[%s0 + $0x74] sm:$0xf]
  %v34 = vld [vmem:[%s0 + $0x78] sm:$0xff]
  %v35 = vld [vmem:[%s0 + $0x80] sm:$0xf]
  %v36 = vld [vmem:[%s0 + $0x84] sm:$0xff]
  %v37 = vld [vmem:[%s0 + $0x8c] sm:$0xf]
  %v38 = vld [vmem:[%s0 + $0x90] sm:$0xff]
  %v39 = vld [vmem:[%s0 + $0x98] sm:$0xf]
  %v40 = vld [vmem:[%s0 + $0x9c] sm:$0xff]
  %v41 = vld [vmem:[%s0 + $0xa4] sm:$0xf]
  %v42 = vld [vmem:[%s0 + $0xa8] sm:$0xff]
  %v43 = vld [vmem:[%s0 + $0xb0] sm:$0xf]
  %v44 = vld [vmem:[%s0 + $0xb4] sm:$0xff]
  %v45 = vld [vmem:[%s0 + $0xbc] sm:$0xf]
  %v46 = vld [vmem:[%s0 + $0xc0] sm:$0xff]
  %v47 = vld [vmem:[%s0 + $0xc8] sm:$0xf]
  %v48 = vld [vmem:[%s0 + $0xcc] sm:$0xff]
  %v49 = vld [vmem:[%s0 + $0xd4] sm:$0xf]
  %v50 = vld [vmem:[%s0 + $0xd8] sm:$0xff]
  %v51 = vld [vmem:[%s0 + $0xe0] sm:$0xf]
  %v52 = vld [vmem:[%s0 + $0xe4] sm:$0xff]
  %v53 = vld [vmem:[%s0 + $0xec] sm:$0xf]
  %v54 = vld [vmem:[%s0 + $0xf0] sm:$0xff]
  %v55 = vld [vmem:[%s0 + $0xf8] sm:$0xf]
  %v56 = vld [vmem:[%s0 + $0xfc] sm:$0xff]
  %v57 = vld [vmem:[%s0 + $0x104] sm:$0xf]
  %v58 = vld [vmem:[%s0 + $0x108] sm:$0xff]
  %v59 = vld [vmem:[%s0 + $0x110] sm:$0xf]
  %v60 = vld [vmem:[%s0 + $0x114] sm:$0xff]
  %v61 = vld [vmem:[%s0 + $0x11c] sm:$0xf]
  %v62 = vld [vmem:[%s0 + $0x120] sm:$0xff]
  %v63 = vld [vmem:[%s0 + $0x128] sm:$0xf]
  %v64 = vld [vmem:[%s0 + $0x12c] sm:$0xff]
  %v65 = vld [vmem:[%s0 + $0x134] sm:$0xf]
  %v66 = vld [vmem:[%s0 + $0x138] sm:$0xff]
  %v67 = vld [vmem:[%s0 + $0x140] sm:$0xf]
  %v68 = vld [vmem:[%s0 + $0x144] sm:$0xff]
  %v69 = vld [vmem:[%s0 + $0x14c] sm:$0xf]
  %v70 = vld [vmem:[%s0 + $0x150] sm:$0xff]
  %v71 = vld [vmem:[%s0 + $0x158] sm:$0xf]
  %v72 = vld [vmem:[%s0 + $0x15c] sm:$0xff]
  %v73 = vld [vmem:[%s0 + $0x164] sm:$0xf]
  %v74 = vld [vmem:[%s0 + $0x168] sm:$0xff]
  %v75 = vld [vmem:[%s0 + $0x170] sm:$0xf]
  %v76 = vld [vmem:[%s0 + $0x174] sm:$0xff]
  %v77 = vld [vmem:[%s0 + $0x17c] sm:$0xf]
  %v78 = vld [vmem:[%s0 + $0x180] sm:$0xff]
  %v79 = vld [vmem:[%s0 + $0x188] sm:$0xf]
  %v80 = vld [vmem:[%s0 + $0x18c] sm:$0xff]
  %v81 = vld [vmem:[%s0 + $0x194] sm:$0xf]
  %v82 = vld [vmem:[%s0 + $0x198] sm:$0xff]
  %v83 = vld [vmem:[%s0 + $0x1a0] sm:$0xf]
  %v84 = vld [vmem:[%s0 + $0x1a4] sm:$0xff]
  %v85 = vld [vmem:[%s0 + $0x1ac] sm:$0xf]
  %v86 = vld [vmem:[%s0 + $0x1b0] sm:$0xff]
  %v87 = vld [vmem:[%s0 + $0x1b8] sm:$0xf]
  %v88 = vld [vmem:[%s0 + $0x1bc] sm:$0xff]
  %v89 = vld [vmem:[%s0 + $0x1c4] sm:$0xf]
  %v90 = vld [vmem:[%s0 + $0x1c8] sm:$0xff]
  %v91 = vld [vmem:[%s0 + $0x1d0] sm:$0xf]
  %v92 = vld [vmem:[%s0 + $0x1d4] sm:$0xff]
  %v93 = vld [vmem:[%s0 + $0x1dc] sm:$0xf]
  %v94 = vld [vmem:[%s0 + $0x1e0] sm:$0xff]
  %v95 = vld [vmem:[%s0 + $0x1e8] sm:$0xf]
  %v96 = vld [vmem:[%s0 + $0x1ec] sm:$0xff]
  %v97 = vld [vmem:[%s0 + $0x1f4] sm:$0xf]
  %v98 = vld [vmem:[%s0 + $0x1f8] sm:$0xff]
  %v99 = vld [vmem:[%s0 + $0x200] sm:$0xf]
  %v100 = vld [vmem:[%s0 + $0x204] sm:$0xff]
  %v101 = vld [vmem:[%s0 + $0x20c] sm:$0xf]
  %v102 = vld [vmem:[%s0 + $0x210] sm:$0xff]
  %v103 = vld [vmem:[%s0 + $0x218] sm:$0xf]
  %v104 = vld [vmem:[%s0 + $0x21c] sm:$0xff]
  %v105 = vld [vmem:[%s0 + $0x224] sm:$0xf]
  %v106 = vld [vmem:[%s0 + $0x228] sm:$0xff]
  %v107 = vld [vmem:[%s0 + $0x230] sm:$0xf]
  %v108 = vld [vmem:[%s0 + $0x234] sm:$0xff]
  %v109 = vld [vmem:[%s0 + $0x23c] sm:$0xf]
  %v110 = vld [vmem:[%s0 + $0x240] sm:$0xff]
  %v111 = vld [vmem:[%s0 + $0x248] sm:$0xf]
  %v112 = vld [vmem:[%s0 + $0x24c] sm:$0xff]
  %v113 = vld [vmem:[%s0 + $0x254] sm:$0xf]
  %v114 = vld [vmem:[%s0 + $0x258] sm:$0xff]
  %v115 = vld [vmem:[%s0 + $0x260] sm:$0xf]
  %v116 = vld [vmem:[%s0 + $0x264] sm:$0xff]
  %v117 = vld [vmem:[%s0 + $0x26c] sm:$0xf]
  %v118 = vld [vmem:[%s0 + $0x270] sm:$0xff]
  %v119 = vld [vmem:[%s0 + $0x278] sm:$0xf]
  %v120 = vld [vmem:[%s0 + $0x27c] sm:$0xff]
  %v121 = vld [vmem:[%s0 + $0x284] sm:$0xf]
  %v122 = vld [vmem:[%s0 + $0x288] sm:$0xff]
  %v123 = vld [vmem:[%s0 + $0x290] sm:$0xf]
  %v124 = vld [vmem:[%s0 + $0x294] sm:$0xff]
  %v125 = vld [vmem:[%s0 + $0x29c] sm:$0xf]
  %v126 = vld [vmem:[%s0 + $0x2a0] sm:$0xff]
  %v127 = vld [vmem:[%s0 + $0x2a8] sm:$0xf]
  %v128 = vld [vmem:[%s0 + $0x2ac] sm:$0xff]
  %v129 = vld [vmem:[%s0 + $0x2b4] sm:$0xf]
  %v130 = vld [vmem:[%s0 + $0x2b8] sm:$0xff]
  %v131 = vld [vmem:[%s0 + $0x2c0] sm:$0xf]
  %v132 = vld [vmem:[%s0 + $0x2c4] sm:$0xff]
  %v133 = vld [vmem:[%s0 + $0x2cc] sm:$0xf]
  %v134 = vld [vmem:[%s0 + $0x2d0] sm:$0xff]
  %v135 = vld [vmem:[%s0 + $0x2d8] sm:$0xf]
  %v136 = vld [vmem:[%s0 + $0x2dc] sm:$0xff]
  %v137 = vld [vmem:[%s0 + $0x2e4] sm:$0xf]
  %v138 = vld [vmem:[%s0 + $0x2e8] sm:$0xff]
  %v139 = vld [vmem:[%s0 + $0x2f0] sm:$0xf]
  %v140 = vld [vmem:[%s0 + $0x2f4] sm:$0xff]
  %v141 = vld [vmem:[%s0 + $0x2fc] sm:$0xf]
  %v142 = vld [vmem:[%s0 + $0x300] sm:$0xff]
  %v143 = vld [vmem:[%s0 + $0x308] sm:$0xf]
  %v144 = vld [vmem:[%s0 + $0x30c] sm:$0xff]
  %v145 = vld [vmem:[%s0 + $0x314] sm:$0xf]
  %v146 = vld [vmem:[%s0 + $0x318] sm:$0xff]
  %v147 = vld [vmem:[%s0 + $0x320] sm:$0xf]
  %v148 = vld [vmem:[%s0 + $0x324] sm:$0xff]
  %v149 = vld [vmem:[%s0 + $0x32c] sm:$0xf]
  %v150 = vld [vmem:[%s0 + $0x330] sm:$0xff]
  %v151 = vld [vmem:[%s0 + $0x338] sm:$0xf]
  %v152 = vld [vmem:[%s0 + $0x33c] sm:$0xff]
  %v153 = vld [vmem:[%s0 + $0x344] sm:$0xf]
  %v154 = vld [vmem:[%s0 + $0x348] sm:$0xff]
  %v155 = vld [vmem:[%s0 + $0x350] sm:$0xf]
  %v156 = vld [vmem:[%s0 + $0x354] sm:$0xff]
  %v157 = vld [vmem:[%s0 + $0x35c] sm:$0xf]
  %v158 = vld [vmem:[%s0 + $0x360] sm:$0xff]
  %v159 = vld [vmem:[%s0 + $0x368] sm:$0xf]
  %v160 = vld [vmem:[%s0 + $0x36c] sm:$0xff]
  %v161 = vld [vmem:[%s0 + $0x374] sm:$0xf]
  %v162 = vld [vmem:[%s0 + $0x378] sm:$0xff]
  %v163 = vld [vmem:[%s0 + $0x380] sm:$0xf]
  %v164 = vld [vmem:[%s0 + $0x384] sm:$0xff]
  %v165 = vld [vmem:[%s0 + $0x38c] sm:$0xf]
  %v166 = vld [vmem:[%s0 + $0x390] sm:$0xff]
  %v167 = vld [vmem:[%s0 + $0x398] sm:$0xf]
  %v168 = vld [vmem:[%s0 + $0x39c] sm:$0xff]
  %v169 = vld [vmem:[%s0 + $0x3a4] sm:$0xf]
  %v170 = vld [vmem:[%s0 + $0x3a8] sm:$0xff]
  %v171 = vld [vmem:[%s0 + $0x3b0] sm:$0xf]
  %v172 = vld [vmem:[%s0 + $0x3b4] sm:$0xff]
  %v173 = vld [vmem:[%s0 + $0x3bc] sm:$0xf]
  %v174 = vld [vmem:[%s0 + $0x3c0] sm:$0xff]
  %v175 = vld [vmem:[%s0 + $0x3c8] sm:$0xf]
  %v176 = vld [vmem:[%s0 + $0x3cc] sm:$0xff]
  %v177 = vld [vmem:[%s0 + $0x3d4] sm:$0xf]
  %v178 = vld [vmem:[%s0 + $0x3d8] sm:$0xff]
  %v179 = vld [vmem:[%s0 + $0x3e0] sm:$0xf]
  %v180 = vld [vmem:[%s0 + $0x3e4] sm:$0xff]
  %v181 = vld [vmem:[%s0 + $0x3ec] sm:$0xf]
  %v182 = vld [vmem:[%s0 + $0x3f0] sm:$0xff]
  %v183 = vld [vmem:[%s0 + $0x3f8] sm:$0xf]
  %v184 = vld [vmem:[%s0 + $0x3fc] sm:$0xff]
  %v185 = vld [vmem:[%s0 + $0x404] sm:$0xf]
  %v186 = vld [vmem:[%s0 + $0x408] sm:$0xff]
  %v187 = vld [vmem:[%s0 + $0x410] sm:$0xf]
  %v188 = vld [vmem:[%s0 + $0x414] sm:$0xff]
  %v189 = vld [vmem:[%s0 + $0x41c] sm:$0xf]
  %v190 = vld [vmem:[%s0 + $0x420] sm:$0xff]
  %v191 = vld [vmem:[%s0 + $0x428] sm:$0xf]
  %v192 = vld [vmem:[%s0 + $0x42c] sm:$0xff]
  %v193 = vld [vmem:[%s0 + $0x434] sm:$0xf]
  %v194 = vld [vmem:[%s0 + $0x438] sm:$0xff]
  %v195 = vld [vmem:[%s0 + $0x440] sm:$0xf]
  %v196 = vld [vmem:[%s0 + $0x444] sm:$0xff]
  %v197 = vld [vmem:[%s0 + $0x44c] sm:$0xf]
  %v198 = vld [vmem:[%s0 + $0x450] sm:$0xff]
  %v199 = vld [vmem:[%s0 + $0x458] sm:$0xf]
  %v200 = vld [vmem:[%s0 + $0x45c] sm:$0xff]
  %v201 = vld [vmem:[%s0 + $0x464] sm:$0xf]
  %v202 = vld [vmem:[%s0 + $0x468] sm:$0xff]
  %v203 = vld [vmem:[%s0 + $0x470] sm:$0xf]
  %v204 = vld [vmem:[%s0 + $0x474] sm:$0xff]
  %v205 = vld [vmem:[%s0 + $0x47c] sm:$0xf]
  %v206 = vunpack.c.l.bf16 %v14
  %v207 = vunpack.c.h.bf16 %v14
  %v208 = vunpack.c.l.bf16 %v15
  %v209 = vunpack.c.l.bf16 %v16
  %v210 = vunpack.c.h.bf16 %v16
  %v211 = vunpack.c.l.bf16 %v17
  %v212 = vunpack.c.l.bf16 %v18
  %v213 = vunpack.c.h.bf16 %v18
  %v214 = vunpack.c.l.bf16 %v19
  %v215 = vunpack.c.l.bf16 %v20
  %v216 = vunpack.c.h.bf16 %v20
  %v217 = vunpack.c.l.bf16 %v21
  %v218 = vunpack.c.l.bf16 %v22
  %v219 = vunpack.c.h.bf16 %v22
  %v220 = vunpack.c.l.bf16 %v23
  %v221 = vunpack.c.l.bf16 %v24
  %v222 = vunpack.c.h.bf16 %v24
  %v223 = vunpack.c.l.bf16 %v25
  %v224 = vunpack.c.l.bf16 %v26
  %v225 = vunpack.c.h.bf16 %v26
  %v226 = vunpack.c.l.bf16 %v27
  %v227 = vunpack.c.l.bf16 %v28
  %v228 = vunpack.c.h.bf16 %v28
  %v229 = vunpack.c.l.bf16 %v29
  %v230 = vunpack.c.l.bf16 %v30
  %v231 = vunpack.c.h.bf16 %v30
  %v232 = vunpack.c.l.bf16 %v31
  %v233 = vunpack.c.l.bf16 %v32
  %v234 = vunpack.c.h.bf16 %v32
  %v235 = vunpack.c.l.bf16 %v33
  %v236 = vunpack.c.l.bf16 %v34
  %v237 = vunpack.c.h.bf16 %v34
  %v238 = vunpack.c.l.bf16 %v35
  %v239 = vunpack.c.l.bf16 %v36
  %v240 = vunpack.c.h.bf16 %v36
  %v241 = vunpack.c.l.bf16 %v37
  %v242 = vunpack.c.l.bf16 %v38
  %v243 = vunpack.c.h.bf16 %v38
  %v244 = vunpack.c.l.bf16 %v39
  %v245 = vunpack.c.l.bf16 %v40
  %v246 = vunpack.c.h.bf16 %v40
  %v247 = vunpack.c.l.bf16 %v41
  %v248 = vunpack.c.l.bf16 %v42
  %v249 = vunpack.c.h.bf16 %v42
  %v250 = vunpack.c.l.bf16 %v43
  %v251 = vunpack.c.l.bf16 %v44
  %v252 = vunpack.c.h.bf16 %v44
  %v253 = vunpack.c.l.bf16 %v45
  %v254 = vunpack.c.l.bf16 %v46
  %v255 = vunpack.c.h.bf16 %v46
  %v256 = vunpack.c.l.bf16 %v47
  %v257 = vunpack.c.l.bf16 %v48
  %v258 = vunpack.c.h.bf16 %v48
  %v259 = vunpack.c.l.bf16 %v49
  %v260 = vunpack.c.l.bf16 %v50
  %v261 = vunpack.c.h.bf16 %v50
  %v262 = vunpack.c.l.bf16 %v51
  %v263 = vunpack.c.l.bf16 %v52
  %v264 = vunpack.c.h.bf16 %v52
  %v265 = vunpack.c.l.bf16 %v53
  %v266 = vunpack.c.l.bf16 %v54
  %v267 = vunpack.c.h.bf16 %v54
  %v268 = vunpack.c.l.bf16 %v55
  %v269 = vunpack.c.l.bf16 %v56
  %v270 = vunpack.c.h.bf16 %v56
  %v271 = vunpack.c.l.bf16 %v57
  %v272 = vunpack.c.l.bf16 %v58
  %v273 = vunpack.c.h.bf16 %v58
  %v274 = vunpack.c.l.bf16 %v59
  %v275 = vunpack.c.l.bf16 %v60
  %v276 = vunpack.c.h.bf16 %v60
  %v277 = vunpack.c.l.bf16 %v61
  %v278 = vunpack.c.l.bf16 %v62
  %v279 = vunpack.c.h.bf16 %v62
  %v280 = vunpack.c.l.bf16 %v63
  %v281 = vunpack.c.l.bf16 %v64
  %v282 = vunpack.c.h.bf16 %v64
  %v283 = vunpack.c.l.bf16 %v65
  %v284 = vunpack.c.l.bf16 %v66
  %v285 = vunpack.c.h.bf16 %v66
  %v286 = vunpack.c.l.bf16 %v67
  %v287 = vunpack.c.l.bf16 %v68
  %v288 = vunpack.c.h.bf16 %v68
  %v289 = vunpack.c.l.bf16 %v69
  %v290 = vunpack.c.l.bf16 %v70
  %v291 = vunpack.c.h.bf16 %v70
  %v292 = vunpack.c.l.bf16 %v71
  %v293 = vunpack.c.l.bf16 %v72
  %v294 = vunpack.c.h.bf16 %v72
  %v295 = vunpack.c.l.bf16 %v73
  %v296 = vunpack.c.l.bf16 %v74
  %v297 = vunpack.c.h.bf16 %v74
  %v298 = vunpack.c.l.bf16 %v75
  %v299 = vunpack.c.l.bf16 %v76
  %v300 = vunpack.c.h.bf16 %v76
  %v301 = vunpack.c.l.bf16 %v77
  %v302 = vunpack.c.l.bf16 %v78
  %v303 = vunpack.c.h.bf16 %v78
  %v304 = vunpack.c.l.bf16 %v79
  %v305 = vunpack.c.l.bf16 %v80
  %v306 = vunpack.c.h.bf16 %v80
  %v307 = vunpack.c.l.bf16 %v81
  %v308 = vunpack.c.l.bf16 %v82
  %v309 = vunpack.c.h.bf16 %v82
  %v310 = vunpack.c.l.bf16 %v83
  %v311 = vunpack.c.l.bf16 %v84
  %v312 = vunpack.c.h.bf16 %v84
  %v313 = vunpack.c.l.bf16 %v85
  %v314 = vunpack.c.l.bf16 %v86
  %v315 = vunpack.c.h.bf16 %v86
  %v316 = vunpack.c.l.bf16 %v87
  %v317 = vunpack.c.l.bf16 %v88
  %v318 = vunpack.c.h.bf16 %v88
  %v319 = vunpack.c.l.bf16 %v89
  %v320 = vunpack.c.l.bf16 %v90
  %v321 = vunpack.c.h.bf16 %v90
  %v322 = vunpack.c.l.bf16 %v91
  %v323 = vunpack.c.l.bf16 %v92
  %v324 = vunpack.c.h.bf16 %v92
  %v325 = vunpack.c.l.bf16 %v93
  %v326 = vunpack.c.l.bf16 %v94
  %v327 = vunpack.c.h.bf16 %v94
  %v328 = vunpack.c.l.bf16 %v95
  %v329 = vunpack.c.l.bf16 %v96
  %v330 = vunpack.c.h.bf16 %v96
  %v331 = vunpack.c.l.bf16 %v97
  %v332 = vunpack.c.l.bf16 %v98
  %v333 = vunpack.c.h.bf16 %v98
  %v334 = vunpack.c.l.bf16 %v99
  %v335 = vunpack.c.l.bf16 %v100
  %v336 = vunpack.c.h.bf16 %v100
  %v337 = vunpack.c.l.bf16 %v101
  %v338 = vunpack.c.l.bf16 %v102
  %v339 = vunpack.c.h.bf16 %v102
  %v340 = vunpack.c.l.bf16 %v103
  %v341 = vunpack.c.l.bf16 %v104
  %v342 = vunpack.c.h.bf16 %v104
  %v343 = vunpack.c.l.bf16 %v105
  %v344 = vunpack.c.l.bf16 %v106
  %v345 = vunpack.c.h.bf16 %v106
  %v346 = vunpack.c.l.bf16 %v107
  %v347 = vunpack.c.l.bf16 %v108
  %v348 = vunpack.c.h.bf16 %v108
  %v349 = vunpack.c.l.bf16 %v109
  %v350 = vunpack.c.l.bf16 %v110
  %v351 = vunpack.c.h.bf16 %v110
  %v352 = vunpack.c.l.bf16 %v111
  %v353 = vunpack.c.l.bf16 %v112
  %v354 = vunpack.c.h.bf16 %v112
  %v355 = vunpack.c.l.bf16 %v113
  %v356 = vunpack.c.l.bf16 %v114
  %v357 = vunpack.c.h.bf16 %v114
  %v358 = vunpack.c.l.bf16 %v115
  %v359 = vunpack.c.l.bf16 %v116
  %v360 = vunpack.c.h.bf16 %v116
  %v361 = vunpack.c.l.bf16 %v117
  %v362 = vunpack.c.l.bf16 %v118
  %v363 = vunpack.c.h.bf16 %v118
  %v364 = vunpack.c.l.bf16 %v119
  %v365 = vunpack.c.l.bf16 %v120
  %v366 = vunpack.c.h.bf16 %v120
  %v367 = vunpack.c.l.bf16 %v121
  %v368 = vunpack.c.l.bf16 %v122
  %v369 = vunpack.c.h.bf16 %v122
  %v370 = vunpack.c.l.bf16 %v123
  %v371 = vunpack.c.l.bf16 %v124
  %v372 = vunpack.c.h.bf16 %v124
  %v373 = vunpack.c.l.bf16 %v125
  %v374 = vunpack.c.l.bf16 %v126
  %v375 = vunpack.c.h.bf16 %v126
  %v376 = vunpack.c.l.bf16 %v127
  %v377 = vunpack.c.l.bf16 %v128
  %v378 = vunpack.c.h.bf16 %v128
  %v379 = vunpack.c.l.bf16 %v129
  %v380 = vunpack.c.l.bf16 %v130
  %v381 = vunpack.c.h.bf16 %v130
  %v382 = vunpack.c.l.bf16 %v131
  %v383 = vunpack.c.l.bf16 %v132
  %v384 = vunpack.c.h.bf16 %v132
  %v385 = vunpack.c.l.bf16 %v133
  %v386 = vunpack.c.l.bf16 %v134
  %v387 = vunpack.c.h.bf16 %v134
  %v388 = vunpack.c.l.bf16 %v135
  %v389 = vunpack.c.l.bf16 %v136
  %v390 = vunpack.c.h.bf16 %v136
  %v391 = vunpack.c.l.bf16 %v137
  %v392 = vunpack.c.l.bf16 %v138
  %v393 = vunpack.c.h.bf16 %v138
  %v394 = vunpack.c.l.bf16 %v139
  %v395 = vunpack.c.l.bf16 %v140
  %v396 = vunpack.c.h.bf16 %v140
  %v397 = vunpack.c.l.bf16 %v141
  %v398 = vunpack.c.l.bf16 %v142
  %v399 = vunpack.c.h.bf16 %v142
  %v400 = vunpack.c.l.bf16 %v143
  %v401 = vunpack.c.l.bf16 %v144
  %v402 = vunpack.c.h.bf16 %v144
  %v403 = vunpack.c.l.bf16 %v145
  %v404 = vunpack.c.l.bf16 %v146
  %v405 = vunpack.c.h.bf16 %v146
  %v406 = vunpack.c.l.bf16 %v147
  %v407 = vunpack.c.l.bf16 %v148
  %v408 = vunpack.c.h.bf16 %v148
  %v409 = vunpack.c.l.bf16 %v149
  %v410 = vunpack.c.l.bf16 %v150
  %v411 = vunpack.c.h.bf16 %v150
  %v412 = vunpack.c.l.bf16 %v151
  %v413 = vunpack.c.l.bf16 %v152
  %v414 = vunpack.c.h.bf16 %v152
  %v415 = vunpack.c.l.bf16 %v153
  %v416 = vunpack.c.l.bf16 %v154
  %v417 = vunpack.c.h.bf16 %v154
  %v418 = vunpack.c.l.bf16 %v155
  %v419 = vunpack.c.l.bf16 %v156
  %v420 = vunpack.c.h.bf16 %v156
  %v421 = vunpack.c.l.bf16 %v157
  %v422 = vunpack.c.l.bf16 %v158
  %v423 = vunpack.c.h.bf16 %v158
  %v424 = vunpack.c.l.bf16 %v159
  %v425 = vunpack.c.l.bf16 %v160
  %v426 = vunpack.c.h.bf16 %v160
  %v427 = vunpack.c.l.bf16 %v161
  %v428 = vunpack.c.l.bf16 %v162
  %v429 = vunpack.c.h.bf16 %v162
  %v430 = vunpack.c.l.bf16 %v163
  %v431 = vunpack.c.l.bf16 %v164
  %v432 = vunpack.c.h.bf16 %v164
  %v433 = vunpack.c.l.bf16 %v165
  %v434 = vunpack.c.l.bf16 %v166
  %v435 = vunpack.c.h.bf16 %v166
  %v436 = vunpack.c.l.bf16 %v167
  %v437 = vunpack.c.l.bf16 %v168
  %v438 = vunpack.c.h.bf16 %v168
  %v439 = vunpack.c.l.bf16 %v169
  %v440 = vunpack.c.l.bf16 %v170
  %v441 = vunpack.c.h.bf16 %v170
  %v442 = vunpack.c.l.bf16 %v171
  %v443 = vunpack.c.l.bf16 %v172
  %v444 = vunpack.c.h.bf16 %v172
  %v445 = vunpack.c.l.bf16 %v173
  %v446 = vunpack.c.l.bf16 %v174
  %v447 = vunpack.c.h.bf16 %v174
  %v448 = vunpack.c.l.bf16 %v175
  %v449 = vunpack.c.l.bf16 %v176
  %v450 = vunpack.c.h.bf16 %v176
  %v451 = vunpack.c.l.bf16 %v177
  %v452 = vunpack.c.l.bf16 %v178
  %v453 = vunpack.c.h.bf16 %v178
  %v454 = vunpack.c.l.bf16 %v179
  %v455 = vunpack.c.l.bf16 %v180
  %v456 = vunpack.c.h.bf16 %v180
  %v457 = vunpack.c.l.bf16 %v181
  %v458 = vunpack.c.l.bf16 %v182
  %v459 = vunpack.c.h.bf16 %v182
  %v460 = vunpack.c.l.bf16 %v183
  %v461 = vunpack.c.l.bf16 %v184
  %v462 = vunpack.c.h.bf16 %v184
  %v463 = vunpack.c.l.bf16 %v185
  %v464 = vunpack.c.l.bf16 %v186
  %v465 = vunpack.c.h.bf16 %v186
  %v466 = vunpack.c.l.bf16 %v187
  %v467 = vunpack.c.l.bf16 %v188
  %v468 = vunpack.c.h.bf16 %v188
  %v469 = vunpack.c.l.bf16 %v189
  %v470 = vunpack.c.l.bf16 %v190
  %v471 = vunpack.c.h.bf16 %v190
  %v472 = vunpack.c.l.bf16 %v191
  %v473 = vunpack.c.l.bf16 %v192
  %v474 = vunpack.c.h.bf16 %v192
  %v475 = vunpack.c.l.bf16 %v193
  %v476 = vunpack.c.l.bf16 %v194
  %v477 = vunpack.c.h.bf16 %v194
  %v478 = vunpack.c.l.bf16 %v195
  %v479 = vunpack.c.l.bf16 %v196
  %v480 = vunpack.c.h.bf16 %v196
  %v481 = vunpack.c.l.bf16 %v197
  %v482 = vunpack.c.l.bf16 %v198
  %v483 = vunpack.c.h.bf16 %v198
  %v484 = vunpack.c.l.bf16 %v199
  %v485 = vunpack.c.l.bf16 %v200
  %v486 = vunpack.c.h.bf16 %v200
  %v487 = vunpack.c.l.bf16 %v201
  %v488 = vunpack.c.l.bf16 %v202
  %v489 = vunpack.c.h.bf16 %v202
  %v490 = vunpack.c.l.bf16 %v203
  %v491 = vunpack.c.l.bf16 %v204
  %v492 = vunpack.c.h.bf16 %v204
  %v493 = vunpack.c.l.bf16 %v205
  %v494 = vld [vmem:[%s1] sm:$0xff]
  %v495 = vld [vmem:[%s1 + $0x8] sm:$0xff]
  %v496 = vld [vmem:[%s1 + $0x10] sm:$0xff]
  %v497 = vld [vmem:[%s1 + $0x18] sm:$0xff]
  %v498 = vld [vmem:[%s1 + $0x20] sm:$0xff]
  %v499 = vld [vmem:[%s1 + $0x28] sm:$0xff]
  %v500 = vld [vmem:[%s1 + $0x30] sm:$0xff]
  %v501 = vld [vmem:[%s1 + $0x38] sm:$0xff]
  %v502 = vld [vmem:[%s1 + $0x40] sm:$0xff]
  %v503 = vld [vmem:[%s1 + $0x48] sm:$0xff]
  %v504 = vld [vmem:[%s1 + $0x50] sm:$0xff]
  %v505 = vld [vmem:[%s1 + $0x58] sm:$0xff]
  %v506 = vld [vmem:[%s1 + $0x60] sm:$0xff]
  %v507 = vld [vmem:[%s1 + $0x68] sm:$0xff]
  %v508 = vld [vmem:[%s1 + $0x70] sm:$0xff]
  %v509 = vld [vmem:[%s1 + $0x78] sm:$0xff]
  %v510 = vld [vmem:[%s1 + $0x80] sm:$0xff]
  %v511 = vld [vmem:[%s1 + $0x88] sm:$0xff]
  %v512 = vld [vmem:[%s1 + $0x90] sm:$0xff]
  %v513 = vld [vmem:[%s1 + $0x98] sm:$0xff]
  %v514 = vld [vmem:[%s1 + $0xa0] sm:$0xff]
  %v515 = vld [vmem:[%s1 + $0xa8] sm:$0xff]
  %v516 = vld [vmem:[%s1 + $0xb0] sm:$0xff]
  %v517 = vld [vmem:[%s1 + $0xb8] sm:$0xff]
  %v518 = vld [vmem:[%s1 + $0xc0] sm:$0xff]
  %v519 = vld [vmem:[%s1 + $0xc8] sm:$0xff]
  %v520 = vld [vmem:[%s1 + $0xd0] sm:$0xff]
  %v521 = vld [vmem:[%s1 + $0xd8] sm:$0xff]
  %v522 = vld [vmem:[%s1 + $0xe0] sm:$0xff]
  %v523 = vld [vmem:[%s1 + $0xe8] sm:$0xff]
  %v524 = vld [vmem:[%s1 + $0xf0] sm:$0xff]
  %v525 = vld [vmem:[%s1 + $0xf8] sm:$0xff]
  %v526 = vld [vmem:[%s1 + $0x100] sm:$0xff]
  %v527 = vld [vmem:[%s1 + $0x108] sm:$0xff]
  %v528 = vld [vmem:[%s1 + $0x110] sm:$0xff]
  %v529 = vld [vmem:[%s1 + $0x118] sm:$0xff]
  %v530 = vld [vmem:[%s1 + $0x120] sm:$0xff]
  %v531 = vld [vmem:[%s1 + $0x128] sm:$0xff]
  %v532 = vld [vmem:[%s1 + $0x130] sm:$0xff]
  %v533 = vld [vmem:[%s1 + $0x138] sm:$0xff]
  %v534 = vld [vmem:[%s1 + $0x140] sm:$0xff]
  %v535 = vld [vmem:[%s1 + $0x148] sm:$0xff]
  %v536 = vld [vmem:[%s1 + $0x150] sm:$0xff]
  %v537 = vld [vmem:[%s1 + $0x158] sm:$0xff]
  %v538 = vld [vmem:[%s1 + $0x160] sm:$0xff]
  %v539 = vld [vmem:[%s1 + $0x168] sm:$0xff]
  %v540 = vld [vmem:[%s1 + $0x170] sm:$0xff]
  %v541 = vld [vmem:[%s1 + $0x178] sm:$0xff]
  %v542 = vld [vmem:[%s1 + $0x180] sm:$0xff]
  %v543 = vld [vmem:[%s1 + $0x188] sm:$0xff]
  %v544 = vld [vmem:[%s1 + $0x190] sm:$0xff]
  %v545 = vld [vmem:[%s1 + $0x198] sm:$0xff]
  %v546 = vld [vmem:[%s1 + $0x1a0] sm:$0xff]
  %v547 = vld [vmem:[%s1 + $0x1a8] sm:$0xff]
  %v548 = vld [vmem:[%s1 + $0x1b0] sm:$0xff]
  %v549 = vld [vmem:[%s1 + $0x1b8] sm:$0xff]
  %v550 = vld [vmem:[%s1 + $0x1c0] sm:$0xff]
  %v551 = vld [vmem:[%s1 + $0x1c8] sm:$0xff]
  %v552 = vld [vmem:[%s1 + $0x1d0] sm:$0xff]
  %v553 = vld [vmem:[%s1 + $0x1d8] sm:$0xff]
  %v554 = vld [vmem:[%s1 + $0x1e0] sm:$0xff]
  %v555 = vld [vmem:[%s1 + $0x1e8] sm:$0xff]
  %v556 = vld [vmem:[%s1 + $0x1f0] sm:$0xff]
  %v557 = vld [vmem:[%s1 + $0x1f8] sm:$0xff]
  %v558 = vld [vmem:[%s1 + $0x200] sm:$0xff]
  %v559 = vld [vmem:[%s1 + $0x208] sm:$0xff]
  %v560 = vld [vmem:[%s1 + $0x210] sm:$0xff]
  %v561 = vld [vmem:[%s1 + $0x218] sm:$0xff]
  %v562 = vld [vmem:[%s1 + $0x220] sm:$0xff]
  %v563 = vld [vmem:[%s1 + $0x228] sm:$0xff]
  %v564 = vld [vmem:[%s1 + $0x230] sm:$0xff]
  %v565 = vld [vmem:[%s1 + $0x238] sm:$0xff]
  %v566 = vld [vmem:[%s1 + $0x240] sm:$0xff]
  %v567 = vld [vmem:[%s1 + $0x248] sm:$0xff]
  %v568 = vld [vmem:[%s1 + $0x250] sm:$0xff]
  %v569 = vld [vmem:[%s1 + $0x258] sm:$0xff]
  %v570 = vld [vmem:[%s1 + $0x260] sm:$0xff]
  %v571 = vld [vmem:[%s1 + $0x268] sm:$0xff]
  %v572 = vld [vmem:[%s1 + $0x270] sm:$0xff]
  %v573 = vld [vmem:[%s1 + $0x278] sm:$0xff]
  %v574 = vld [vmem:[%s1 + $0x280] sm:$0xff]
  %v575 = vld [vmem:[%s1 + $0x288] sm:$0xff]
  %v576 = vld [vmem:[%s1 + $0x290] sm:$0xff]
  %v577 = vld [vmem:[%s1 + $0x298] sm:$0xff]
  %v578 = vld [vmem:[%s1 + $0x2a0] sm:$0xff]
  %v579 = vld [vmem:[%s1 + $0x2a8] sm:$0xff]
  %v580 = vld [vmem:[%s1 + $0x2b0] sm:$0xff]
  %v581 = vld [vmem:[%s1 + $0x2b8] sm:$0xff]
  %v582 = vld [vmem:[%s1 + $0x2c0] sm:$0xff]
  %v583 = vld [vmem:[%s1 + $0x2c8] sm:$0xff]
  %v584 = vld [vmem:[%s1 + $0x2d0] sm:$0xff]
  %v585 = vld [vmem:[%s1 + $0x2d8] sm:$0xff]
  %v586 = vld [vmem:[%s1 + $0x2e0] sm:$0xff]
  %v587 = vld [vmem:[%s1 + $0x2e8] sm:$0xff]
  %v588 = vld [vmem:[%s1 + $0x2f0] sm:$0xff]
  %v589 = vld [vmem:[%s1 + $0x2f8] sm:$0xff]
  %591 = vset.pattern.permute.xlu0 0
  %592 = vperm.xlu0 %591, %v494
  %v593 = vpop.permute.xlu0 %592
  %596 = vset.pattern.permute.xlu0 0
  %597 = vperm.xlu0 %596, %v495
  %v598 = vpop.permute.xlu0 %597
  %601 = vset.pattern.permute.xlu0 0
  %602 = vperm.xlu0 %601, %v496
  %v603 = vpop.permute.xlu0 %602
  %606 = vset.pattern.permute.xlu0 0
  %607 = vperm.xlu0 %606, %v497
  %v608 = vpop.permute.xlu0 %607
  %611 = vset.pattern.permute.xlu0 0
  %612 = vperm.xlu0 %611, %v498
  %v613 = vpop.permute.xlu0 %612
  %616 = vset.pattern.permute.xlu0 0
  %617 = vperm.xlu0 %616, %v499
  %v618 = vpop.permute.xlu0 %617
  %621 = vset.pattern.permute.xlu0 0
  %622 = vperm.xlu0 %621, %v500
  %v623 = vpop.permute.xlu0 %622
  %626 = vset.pattern.permute.xlu0 0
  %627 = vperm.xlu0 %626, %v501
  %v628 = vpop.permute.xlu0 %627
  %631 = vset.pattern.permute.xlu0 0
  %632 = vperm.xlu0 %631, %v502
  %v633 = vpop.permute.xlu0 %632
  %636 = vset.pattern.permute.xlu0 0
  %637 = vperm.xlu0 %636, %v503
  %v638 = vpop.permute.xlu0 %637
  %641 = vset.pattern.permute.xlu0 0
  %642 = vperm.xlu0 %641, %v504
  %v643 = vpop.permute.xlu0 %642
  %646 = vset.pattern.permute.xlu0 0
  %647 = vperm.xlu0 %646, %v505
  %v648 = vpop.permute.xlu0 %647
  %651 = vset.pattern.permute.xlu0 0
  %652 = vperm.xlu0 %651, %v506
  %v653 = vpop.permute.xlu0 %652
  %656 = vset.pattern.permute.xlu0 0
  %657 = vperm.xlu0 %656, %v507
  %v658 = vpop.permute.xlu0 %657
  %661 = vset.pattern.permute.xlu0 0
  %662 = vperm.xlu0 %661, %v508
  %v663 = vpop.permute.xlu0 %662
  %666 = vset.pattern.permute.xlu0 0
  %667 = vperm.xlu0 %666, %v509
  %v668 = vpop.permute.xlu0 %667
  %671 = vset.pattern.permute.xlu0 0
  %672 = vperm.xlu0 %671, %v510
  %v673 = vpop.permute.xlu0 %672
  %676 = vset.pattern.permute.xlu0 0
  %677 = vperm.xlu0 %676, %v511
  %v678 = vpop.permute.xlu0 %677
  %681 = vset.pattern.permute.xlu0 0
  %682 = vperm.xlu0 %681, %v512
  %v683 = vpop.permute.xlu0 %682
  %686 = vset.pattern.permute.xlu0 0
  %687 = vperm.xlu0 %686, %v513
  %v688 = vpop.permute.xlu0 %687
  %691 = vset.pattern.permute.xlu0 0
  %692 = vperm.xlu0 %691, %v514
  %v693 = vpop.permute.xlu0 %692
  %696 = vset.pattern.permute.xlu0 0
  %697 = vperm.xlu0 %696, %v515
  %v698 = vpop.permute.xlu0 %697
  %701 = vset.pattern.permute.xlu0 0
  %702 = vperm.xlu0 %701, %v516
  %v703 = vpop.permute.xlu0 %702
  %706 = vset.pattern.permute.xlu0 0
  %707 = vperm.xlu0 %706, %v517
  %v708 = vpop.permute.xlu0 %707
  %711 = vset.pattern.permute.xlu0 0
  %712 = vperm.xlu0 %711, %v518
  %v713 = vpop.permute.xlu0 %712
  %716 = vset.pattern.permute.xlu0 0
  %717 = vperm.xlu0 %716, %v519
  %v718 = vpop.permute.xlu0 %717
  %721 = vset.pattern.permute.xlu0 0
  %722 = vperm.xlu0 %721, %v520
  %v723 = vpop.permute.xlu0 %722
  %726 = vset.pattern.permute.xlu0 0
  %727 = vperm.xlu0 %726, %v521
  %v728 = vpop.permute.xlu0 %727
  %731 = vset.pattern.permute.xlu0 0
  %732 = vperm.xlu0 %731, %v522
  %v733 = vpop.permute.xlu0 %732
  %736 = vset.pattern.permute.xlu0 0
  %737 = vperm.xlu0 %736, %v523
  %v738 = vpop.permute.xlu0 %737
  %741 = vset.pattern.permute.xlu0 0
  %742 = vperm.xlu0 %741, %v524
  %v743 = vpop.permute.xlu0 %742
  %746 = vset.pattern.permute.xlu0 0
  %747 = vperm.xlu0 %746, %v525
  %v748 = vpop.permute.xlu0 %747
  %751 = vset.pattern.permute.xlu0 0
  %752 = vperm.xlu0 %751, %v526
  %v753 = vpop.permute.xlu0 %752
  %756 = vset.pattern.permute.xlu0 0
  %757 = vperm.xlu0 %756, %v527
  %v758 = vpop.permute.xlu0 %757
  %761 = vset.pattern.permute.xlu0 0
  %762 = vperm.xlu0 %761, %v528
  %v763 = vpop.permute.xlu0 %762
  %766 = vset.pattern.permute.xlu0 0
  %767 = vperm.xlu0 %766, %v529
  %v768 = vpop.permute.xlu0 %767
  %771 = vset.pattern.permute.xlu0 0
  %772 = vperm.xlu0 %771, %v530
  %v773 = vpop.permute.xlu0 %772
  %776 = vset.pattern.permute.xlu0 0
  %777 = vperm.xlu0 %776, %v531
  %v778 = vpop.permute.xlu0 %777
  %781 = vset.pattern.permute.xlu0 0
  %782 = vperm.xlu0 %781, %v532
  %v783 = vpop.permute.xlu0 %782
  %786 = vset.pattern.permute.xlu0 0
  %787 = vperm.xlu0 %786, %v533
  %v788 = vpop.permute.xlu0 %787
  %791 = vset.pattern.permute.xlu0 0
  %792 = vperm.xlu0 %791, %v534
  %v793 = vpop.permute.xlu0 %792
  %796 = vset.pattern.permute.xlu0 0
  %797 = vperm.xlu0 %796, %v535
  %v798 = vpop.permute.xlu0 %797
  %801 = vset.pattern.permute.xlu0 0
  %802 = vperm.xlu0 %801, %v536
  %v803 = vpop.permute.xlu0 %802
  %806 = vset.pattern.permute.xlu0 0
  %807 = vperm.xlu0 %806, %v537
  %v808 = vpop.permute.xlu0 %807
  %811 = vset.pattern.permute.xlu0 0
  %812 = vperm.xlu0 %811, %v538
  %v813 = vpop.permute.xlu0 %812
  %816 = vset.pattern.permute.xlu0 0
  %817 = vperm.xlu0 %816, %v539
  %v818 = vpop.permute.xlu0 %817
  %821 = vset.pattern.permute.xlu0 0
  %822 = vperm.xlu0 %821, %v540
  %v823 = vpop.permute.xlu0 %822
  %826 = vset.pattern.permute.xlu0 0
  %827 = vperm.xlu0 %826, %v541
  %v828 = vpop.permute.xlu0 %827
  %831 = vset.pattern.permute.xlu0 0
  %832 = vperm.xlu0 %831, %v542
  %v833 = vpop.permute.xlu0 %832
  %836 = vset.pattern.permute.xlu0 0
  %837 = vperm.xlu0 %836, %v543
  %v838 = vpop.permute.xlu0 %837
  %841 = vset.pattern.permute.xlu0 0
  %842 = vperm.xlu0 %841, %v544
  %v843 = vpop.permute.xlu0 %842
  %846 = vset.pattern.permute.xlu0 0
  %847 = vperm.xlu0 %846, %v545
  %v848 = vpop.permute.xlu0 %847
  %851 = vset.pattern.permute.xlu0 0
  %852 = vperm.xlu0 %851, %v546
  %v853 = vpop.permute.xlu0 %852
  %856 = vset.pattern.permute.xlu0 0
  %857 = vperm.xlu0 %856, %v547
  %v858 = vpop.permute.xlu0 %857
  %861 = vset.pattern.permute.xlu0 0
  %862 = vperm.xlu0 %861, %v548
  %v863 = vpop.permute.xlu0 %862
  %866 = vset.pattern.permute.xlu0 0
  %867 = vperm.xlu0 %866, %v549
  %v868 = vpop.permute.xlu0 %867
  %871 = vset.pattern.permute.xlu0 0
  %872 = vperm.xlu0 %871, %v550
  %v873 = vpop.permute.xlu0 %872
  %876 = vset.pattern.permute.xlu0 0
  %877 = vperm.xlu0 %876, %v551
  %v878 = vpop.permute.xlu0 %877
  %881 = vset.pattern.permute.xlu0 0
  %882 = vperm.xlu0 %881, %v552
  %v883 = vpop.permute.xlu0 %882
  %886 = vset.pattern.permute.xlu0 0
  %887 = vperm.xlu0 %886, %v553
  %v888 = vpop.permute.xlu0 %887
  %891 = vset.pattern.permute.xlu0 0
  %892 = vperm.xlu0 %891, %v554
  %v893 = vpop.permute.xlu0 %892
  %896 = vset.pattern.permute.xlu0 0
  %897 = vperm.xlu0 %896, %v555
  %v898 = vpop.permute.xlu0 %897
  %901 = vset.pattern.permute.xlu0 0
  %902 = vperm.xlu0 %901, %v556
  %v903 = vpop.permute.xlu0 %902
  %906 = vset.pattern.permute.xlu0 0
  %907 = vperm.xlu0 %906, %v557
  %v908 = vpop.permute.xlu0 %907
  %911 = vset.pattern.permute.xlu0 0
  %912 = vperm.xlu0 %911, %v558
  %v913 = vpop.permute.xlu0 %912
  %916 = vset.pattern.permute.xlu0 0
  %917 = vperm.xlu0 %916, %v559
  %v918 = vpop.permute.xlu0 %917
  %921 = vset.pattern.permute.xlu0 0
  %922 = vperm.xlu0 %921, %v560
  %v923 = vpop.permute.xlu0 %922
  %926 = vset.pattern.permute.xlu0 0
  %927 = vperm.xlu0 %926, %v561
  %v928 = vpop.permute.xlu0 %927
  %931 = vset.pattern.permute.xlu0 0
  %932 = vperm.xlu0 %931, %v562
  %v933 = vpop.permute.xlu0 %932
  %936 = vset.pattern.permute.xlu0 0
  %937 = vperm.xlu0 %936, %v563
  %v938 = vpop.permute.xlu0 %937
  %941 = vset.pattern.permute.xlu0 0
  %942 = vperm.xlu0 %941, %v564
  %v943 = vpop.permute.xlu0 %942
  %946 = vset.pattern.permute.xlu0 0
  %947 = vperm.xlu0 %946, %v565
  %v948 = vpop.permute.xlu0 %947
  %951 = vset.pattern.permute.xlu0 0
  %952 = vperm.xlu0 %951, %v566
  %v953 = vpop.permute.xlu0 %952
  %956 = vset.pattern.permute.xlu0 0
  %957 = vperm.xlu0 %956, %v567
  %v958 = vpop.permute.xlu0 %957
  %961 = vset.pattern.permute.xlu0 0
  %962 = vperm.xlu0 %961, %v568
  %v963 = vpop.permute.xlu0 %962
  %966 = vset.pattern.permute.xlu0 0
  %967 = vperm.xlu0 %966, %v569
  %v968 = vpop.permute.xlu0 %967
  %971 = vset.pattern.permute.xlu0 0
  %972 = vperm.xlu0 %971, %v570
  %v973 = vpop.permute.xlu0 %972
  %976 = vset.pattern.permute.xlu0 0
  %977 = vperm.xlu0 %976, %v571
  %v978 = vpop.permute.xlu0 %977
  %981 = vset.pattern.permute.xlu0 0
  %982 = vperm.xlu0 %981, %v572
  %v983 = vpop.permute.xlu0 %982
  %986 = vset.pattern.permute.xlu0 0
  %987 = vperm.xlu0 %986, %v573
  %v988 = vpop.permute.xlu0 %987
  %991 = vset.pattern.permute.xlu0 0
  %992 = vperm.xlu0 %991, %v574
  %v993 = vpop.permute.xlu0 %992
  %996 = vset.pattern.permute.xlu0 0
  %997 = vperm.xlu0 %996, %v575
  %v998 = vpop.permute.xlu0 %997
  %1001 = vset.pattern.permute.xlu0 0
  %1002 = vperm.xlu0 %1001, %v576
  %v1003 = vpop.permute.xlu0 %1002
  %1006 = vset.pattern.permute.xlu0 0
  %1007 = vperm.xlu0 %1006, %v577
  %v1008 = vpop.permute.xlu0 %1007
  %1011 = vset.pattern.permute.xlu0 0
  %1012 = vperm.xlu0 %1011, %v578
  %v1013 = vpop.permute.xlu0 %1012
  %1016 = vset.pattern.permute.xlu0 0
  %1017 = vperm.xlu0 %1016, %v579
  %v1018 = vpop.permute.xlu0 %1017
  %1021 = vset.pattern.permute.xlu0 0
  %1022 = vperm.xlu0 %1021, %v580
  %v1023 = vpop.permute.xlu0 %1022
  %1026 = vset.pattern.permute.xlu0 0
  %1027 = vperm.xlu0 %1026, %v581
  %v1028 = vpop.permute.xlu0 %1027
  %1031 = vset.pattern.permute.xlu0 0
  %1032 = vperm.xlu0 %1031, %v582
  %v1033 = vpop.permute.xlu0 %1032
  %1036 = vset.pattern.permute.xlu0 0
  %1037 = vperm.xlu0 %1036, %v583
  %v1038 = vpop.permute.xlu0 %1037
  %1041 = vset.pattern.permute.xlu0 0
  %1042 = vperm.xlu0 %1041, %v584
  %v1043 = vpop.permute.xlu0 %1042
  %1046 = vset.pattern.permute.xlu0 0
  %1047 = vperm.xlu0 %1046, %v585
  %v1048 = vpop.permute.xlu0 %1047
  %1051 = vset.pattern.permute.xlu0 0
  %1052 = vperm.xlu0 %1051, %v586
  %v1053 = vpop.permute.xlu0 %1052
  %1056 = vset.pattern.permute.xlu0 0
  %1057 = vperm.xlu0 %1056, %v587
  %v1058 = vpop.permute.xlu0 %1057
  %1061 = vset.pattern.permute.xlu0 0
  %1062 = vperm.xlu0 %1061, %v588
  %v1063 = vpop.permute.xlu0 %1062
  %1066 = vset.pattern.permute.xlu0 0
  %1067 = vperm.xlu0 %1066, %v589
  %v1068 = vpop.permute.xlu0 %1067
  %v1070 = vmul.f32 %v206, %v593
  %v1071 = vmul.f32 %v207, %v593
  %v1072 = vmul.f32 %v208, %v593
  %v1073 = vmul.f32 %v209, %v598
  %v1074 = vmul.f32 %v210, %v598
  %v1075 = vmul.f32 %v211, %v598
  %v1076 = vmul.f32 %v212, %v603
  %v1077 = vmul.f32 %v213, %v603
  %v1078 = vmul.f32 %v214, %v603
  %v1079 = vmul.f32 %v215, %v608
  %v1080 = vmul.f32 %v216, %v608
  %v1081 = vmul.f32 %v217, %v608
  %v1082 = vmul.f32 %v218, %v613
  %v1083 = vmul.f32 %v219, %v613
  %v1084 = vmul.f32 %v220, %v613
  %v1085 = vmul.f32 %v221, %v618
  %v1086 = vmul.f32 %v222, %v618
  %v1087 = vmul.f32 %v223, %v618
  %v1088 = vmul.f32 %v224, %v623
  %v1089 = vmul.f32 %v225, %v623
  %v1090 = vmul.f32 %v226, %v623
  %v1091 = vmul.f32 %v227, %v628
  %v1092 = vmul.f32 %v228, %v628
  %v1093 = vmul.f32 %v229, %v628
  %v1094 = vmul.f32 %v230, %v633
  %v1095 = vmul.f32 %v231, %v633
  %v1096 = vmul.f32 %v232, %v633
  %v1097 = vmul.f32 %v233, %v638
  %v1098 = vmul.f32 %v234, %v638
  %v1099 = vmul.f32 %v235, %v638
  %v1100 = vmul.f32 %v236, %v643
  %v1101 = vmul.f32 %v237, %v643
  %v1102 = vmul.f32 %v238, %v643
  %v1103 = vmul.f32 %v239, %v648
  %v1104 = vmul.f32 %v240, %v648
  %v1105 = vmul.f32 %v241, %v648
  %v1106 = vmul.f32 %v242, %v653
  %v1107 = vmul.f32 %v243, %v653
  %v1108 = vmul.f32 %v244, %v653
  %v1109 = vmul.f32 %v245, %v658
  %v1110 = vmul.f32 %v246, %v658
  %v1111 = vmul.f32 %v247, %v658
  %v1112 = vmul.f32 %v248, %v663
  %v1113 = vmul.f32 %v249, %v663
  %v1114 = vmul.f32 %v250, %v663
  %v1115 = vmul.f32 %v251, %v668
  %v1116 = vmul.f32 %v252, %v668
  %v1117 = vmul.f32 %v253, %v668
  %v1118 = vmul.f32 %v254, %v673
  %v1119 = vmul.f32 %v255, %v673
  %v1120 = vmul.f32 %v256, %v673
  %v1121 = vmul.f32 %v257, %v678
  %v1122 = vmul.f32 %v258, %v678
  %v1123 = vmul.f32 %v259, %v678
  %v1124 = vmul.f32 %v260, %v683
  %v1125 = vmul.f32 %v261, %v683
  %v1126 = vmul.f32 %v262, %v683
  %v1127 = vmul.f32 %v263, %v688
  %v1128 = vmul.f32 %v264, %v688
  %v1129 = vmul.f32 %v265, %v688
  %v1130 = vmul.f32 %v266, %v693
  %v1131 = vmul.f32 %v267, %v693
  %v1132 = vmul.f32 %v268, %v693
  %v1133 = vmul.f32 %v269, %v698
  %v1134 = vmul.f32 %v270, %v698
  %v1135 = vmul.f32 %v271, %v698
  %v1136 = vmul.f32 %v272, %v703
  %v1137 = vmul.f32 %v273, %v703
  %v1138 = vmul.f32 %v274, %v703
  %v1139 = vmul.f32 %v275, %v708
  %v1140 = vmul.f32 %v276, %v708
  %v1141 = vmul.f32 %v277, %v708
  %v1142 = vmul.f32 %v278, %v713
  %v1143 = vmul.f32 %v279, %v713
  %v1144 = vmul.f32 %v280, %v713
  %v1145 = vmul.f32 %v281, %v718
  %v1146 = vmul.f32 %v282, %v718
  %v1147 = vmul.f32 %v283, %v718
  %v1148 = vmul.f32 %v284, %v723
  %v1149 = vmul.f32 %v285, %v723
  %v1150 = vmul.f32 %v286, %v723
  %v1151 = vmul.f32 %v287, %v728
  %v1152 = vmul.f32 %v288, %v728
  %v1153 = vmul.f32 %v289, %v728
  %v1154 = vmul.f32 %v290, %v733
  %v1155 = vmul.f32 %v291, %v733
  %v1156 = vmul.f32 %v292, %v733
  %v1157 = vmul.f32 %v293, %v738
  %v1158 = vmul.f32 %v294, %v738
  %v1159 = vmul.f32 %v295, %v738
  %v1160 = vmul.f32 %v296, %v743
  %v1161 = vmul.f32 %v297, %v743
  %v1162 = vmul.f32 %v298, %v743
  %v1163 = vmul.f32 %v299, %v748
  %v1164 = vmul.f32 %v300, %v748
  %v1165 = vmul.f32 %v301, %v748
  %v1166 = vmul.f32 %v302, %v753
  %v1167 = vmul.f32 %v303, %v753
  %v1168 = vmul.f32 %v304, %v753
  %v1169 = vmul.f32 %v305, %v758
  %v1170 = vmul.f32 %v306, %v758
  %v1171 = vmul.f32 %v307, %v758
  %v1172 = vmul.f32 %v308, %v763
  %v1173 = vmul.f32 %v309, %v763
  %v1174 = vmul.f32 %v310, %v763
  %v1175 = vmul.f32 %v311, %v768
  %v1176 = vmul.f32 %v312, %v768
  %v1177 = vmul.f32 %v313, %v768
  %v1178 = vmul.f32 %v314, %v773
  %v1179 = vmul.f32 %v315, %v773
  %v1180 = vmul.f32 %v316, %v773
  %v1181 = vmul.f32 %v317, %v778
  %v1182 = vmul.f32 %v318, %v778
  %v1183 = vmul.f32 %v319, %v778
  %v1184 = vmul.f32 %v320, %v783
  %v1185 = vmul.f32 %v321, %v783
  %v1186 = vmul.f32 %v322, %v783
  %v1187 = vmul.f32 %v323, %v788
  %v1188 = vmul.f32 %v324, %v788
  %v1189 = vmul.f32 %v325, %v788
  %v1190 = vmul.f32 %v326, %v793
  %v1191 = vmul.f32 %v327, %v793
  %v1192 = vmul.f32 %v328, %v793
  %v1193 = vmul.f32 %v329, %v798
  %v1194 = vmul.f32 %v330, %v798
  %v1195 = vmul.f32 %v331, %v798
  %v1196 = vmul.f32 %v332, %v803
  %v1197 = vmul.f32 %v333, %v803
  %v1198 = vmul.f32 %v334, %v803
  %v1199 = vmul.f32 %v335, %v808
  %v1200 = vmul.f32 %v336, %v808
  %v1201 = vmul.f32 %v337, %v808
  %v1202 = vmul.f32 %v338, %v813
  %v1203 = vmul.f32 %v339, %v813
  %v1204 = vmul.f32 %v340, %v813
  %v1205 = vmul.f32 %v341, %v818
  %v1206 = vmul.f32 %v342, %v818
  %v1207 = vmul.f32 %v343, %v818
  %v1208 = vmul.f32 %v344, %v823
  %v1209 = vmul.f32 %v345, %v823
  %v1210 = vmul.f32 %v346, %v823
  %v1211 = vmul.f32 %v347, %v828
  %v1212 = vmul.f32 %v348, %v828
  %v1213 = vmul.f32 %v349, %v828
  %v1214 = vmul.f32 %v350, %v833
  %v1215 = vmul.f32 %v351, %v833
  %v1216 = vmul.f32 %v352, %v833
  %v1217 = vmul.f32 %v353, %v838
  %v1218 = vmul.f32 %v354, %v838
  %v1219 = vmul.f32 %v355, %v838
  %v1220 = vmul.f32 %v356, %v843
  %v1221 = vmul.f32 %v357, %v843
  %v1222 = vmul.f32 %v358, %v843
  %v1223 = vmul.f32 %v359, %v848
  %v1224 = vmul.f32 %v360, %v848
  %v1225 = vmul.f32 %v361, %v848
  %v1226 = vmul.f32 %v362, %v853
  %v1227 = vmul.f32 %v363, %v853
  %v1228 = vmul.f32 %v364, %v853
  %v1229 = vmul.f32 %v365, %v858
  %v1230 = vmul.f32 %v366, %v858
  %v1231 = vmul.f32 %v367, %v858
  %v1232 = vmul.f32 %v368, %v863
  %v1233 = vmul.f32 %v369, %v863
  %v1234 = vmul.f32 %v370, %v863
  %v1235 = vmul.f32 %v371, %v868
  %v1236 = vmul.f32 %v372, %v868
  %v1237 = vmul.f32 %v373, %v868
  %v1238 = vmul.f32 %v374, %v873
  %v1239 = vmul.f32 %v375, %v873
  %v1240 = vmul.f32 %v376, %v873
  %v1241 = vmul.f32 %v377, %v878
  %v1242 = vmul.f32 %v378, %v878
  %v1243 = vmul.f32 %v379, %v878
  %v1244 = vmul.f32 %v380, %v883
  %v1245 = vmul.f32 %v381, %v883
  %v1246 = vmul.f32 %v382, %v883
  %v1247 = vmul.f32 %v383, %v888
  %v1248 = vmul.f32 %v384, %v888
  %v1249 = vmul.f32 %v385, %v888
  %v1250 = vmul.f32 %v386, %v893
  %v1251 = vmul.f32 %v387, %v893
  %v1252 = vmul.f32 %v388, %v893
  %v1253 = vmul.f32 %v389, %v898
  %v1254 = vmul.f32 %v390, %v898
  %v1255 = vmul.f32 %v391, %v898
  %v1256 = vmul.f32 %v392, %v903
  %v1257 = vmul.f32 %v393, %v903
  %v1258 = vmul.f32 %v394, %v903
  %v1259 = vmul.f32 %v395, %v908
  %v1260 = vmul.f32 %v396, %v908
  %v1261 = vmul.f32 %v397, %v908
  %v1262 = vmul.f32 %v398, %v913
  %v1263 = vmul.f32 %v399, %v913
  %v1264 = vmul.f32 %v400, %v913
  %v1265 = vmul.f32 %v401, %v918
  %v1266 = vmul.f32 %v402, %v918
  %v1267 = vmul.f32 %v403, %v918
  %v1268 = vmul.f32 %v404, %v923
  %v1269 = vmul.f32 %v405, %v923
  %v1270 = vmul.f32 %v406, %v923
  %v1271 = vmul.f32 %v407, %v928
  %v1272 = vmul.f32 %v408, %v928
  %v1273 = vmul.f32 %v409, %v928
  %v1274 = vmul.f32 %v410, %v933
  %v1275 = vmul.f32 %v411, %v933
  %v1276 = vmul.f32 %v412, %v933
  %v1277 = vmul.f32 %v413, %v938
  %v1278 = vmul.f32 %v414, %v938
  %v1279 = vmul.f32 %v415, %v938
  %v1280 = vmul.f32 %v416, %v943
  %v1281 = vmul.f32 %v417, %v943
  %v1282 = vmul.f32 %v418, %v943
  %v1283 = vmul.f32 %v419, %v948
  %v1284 = vmul.f32 %v420, %v948
  %v1285 = vmul.f32 %v421, %v948
  %v1286 = vmul.f32 %v422, %v953
  %v1287 = vmul.f32 %v423, %v953
  %v1288 = vmul.f32 %v424, %v953
  %v1289 = vmul.f32 %v425, %v958
  %v1290 = vmul.f32 %v426, %v958
  %v1291 = vmul.f32 %v427, %v958
  %v1292 = vmul.f32 %v428, %v963
  %v1293 = vmul.f32 %v429, %v963
  %v1294 = vmul.f32 %v430, %v963
  %v1295 = vmul.f32 %v431, %v968
  %v1296 = vmul.f32 %v432, %v968
  %v1297 = vmul.f32 %v433, %v968
  %v1298 = vmul.f32 %v434, %v973
  %v1299 = vmul.f32 %v435, %v973
  %v1300 = vmul.f32 %v436, %v973
  %v1301 = vmul.f32 %v437, %v978
  %v1302 = vmul.f32 %v438, %v978
  %v1303 = vmul.f32 %v439, %v978
  %v1304 = vmul.f32 %v440, %v983
  %v1305 = vmul.f32 %v441, %v983
  %v1306 = vmul.f32 %v442, %v983
  %v1307 = vmul.f32 %v443, %v988
  %v1308 = vmul.f32 %v444, %v988
  %v1309 = vmul.f32 %v445, %v988
  %v1310 = vmul.f32 %v446, %v993
  %v1311 = vmul.f32 %v447, %v993
  %v1312 = vmul.f32 %v448, %v993
  %v1313 = vmul.f32 %v449, %v998
  %v1314 = vmul.f32 %v450, %v998
  %v1315 = vmul.f32 %v451, %v998
  %v1316 = vmul.f32 %v452, %v1003
  %v1317 = vmul.f32 %v453, %v1003
  %v1318 = vmul.f32 %v454, %v1003
  %v1319 = vmul.f32 %v455, %v1008
  %v1320 = vmul.f32 %v456, %v1008
  %v1321 = vmul.f32 %v457, %v1008
  %v1322 = vmul.f32 %v458, %v1013
  %v1323 = vmul.f32 %v459, %v1013
  %v1324 = vmul.f32 %v460, %v1013
  %v1325 = vmul.f32 %v461, %v1018
  %v1326 = vmul.f32 %v462, %v1018
  %v1327 = vmul.f32 %v463, %v1018
  %v1328 = vmul.f32 %v464, %v1023
  %v1329 = vmul.f32 %v465, %v1023
  %v1330 = vmul.f32 %v466, %v1023
  %v1331 = vmul.f32 %v467, %v1028
  %v1332 = vmul.f32 %v468, %v1028
  %v1333 = vmul.f32 %v469, %v1028
  %v1334 = vmul.f32 %v470, %v1033
  %v1335 = vmul.f32 %v471, %v1033
  %v1336 = vmul.f32 %v472, %v1033
  %v1337 = vmul.f32 %v473, %v1038
  %v1338 = vmul.f32 %v474, %v1038
  %v1339 = vmul.f32 %v475, %v1038
  %v1340 = vmul.f32 %v476, %v1043
  %v1341 = vmul.f32 %v477, %v1043
  %v1342 = vmul.f32 %v478, %v1043
  %v1343 = vmul.f32 %v479, %v1048
  %v1344 = vmul.f32 %v480, %v1048
  %v1345 = vmul.f32 %v481, %v1048
  %v1346 = vmul.f32 %v482, %v1053
  %v1347 = vmul.f32 %v483, %v1053
  %v1348 = vmul.f32 %v484, %v1053
  %v1349 = vmul.f32 %v485, %v1058
  %v1350 = vmul.f32 %v486, %v1058
  %v1351 = vmul.f32 %v487, %v1058
  %v1352 = vmul.f32 %v488, %v1063
  %v1353 = vmul.f32 %v489, %v1063
  %v1354 = vmul.f32 %v490, %v1063
  %v1355 = vmul.f32 %v491, %v1068
  %v1356 = vmul.f32 %v492, %v1068
  %v1357 = vmul.f32 %v493, %v1068
  %v1358 = vld [vmem:[%s2] sm:$0x7]
  %v1359 = vld [vmem:[%s2 + $0x3] sm:$0x7]
  %v1360 = vld [vmem:[%s2 + $0x6] sm:$0x7]
  %v1364 = vperm.slane %v1358, 0
  %v1365 = vperm.slane %v1358, 1
  %v1366 = vperm.slane %v1358, 2
  %v1367 = vperm.slane %v1359, 0
  %v1368 = vperm.slane %v1359, 1
  %v1369 = vperm.slane %v1359, 2
  %v1370 = vperm.slane %v1360, 0
  %v1371 = vperm.slane %v1360, 1
  %v1372 = vperm.slane %v1360, 2
  %v1382 = vmul.f32 %v1070, %v1364
  %v1383 = vmul.f32 %v1071, %v1365
  %v1384 = vmul.f32 %v1072, %v1366
  %v1385 = vmul.f32 %v1073, %v1364
  %v1386 = vmul.f32 %v1074, %v1365
  %v1387 = vmul.f32 %v1075, %v1366
  %v1388 = vmul.f32 %v1076, %v1364
  %v1389 = vmul.f32 %v1077, %v1365
  %v1390 = vmul.f32 %v1078, %v1366
  %v1391 = vmul.f32 %v1079, %v1364
  %v1392 = vmul.f32 %v1080, %v1365
  %v1393 = vmul.f32 %v1081, %v1366
  %v1394 = vmul.f32 %v1082, %v1364
  %v1395 = vmul.f32 %v1083, %v1365
  %v1396 = vmul.f32 %v1084, %v1366
  %v1397 = vmul.f32 %v1085, %v1364
  %v1398 = vmul.f32 %v1086, %v1365
  %v1399 = vmul.f32 %v1087, %v1366
  %v1400 = vmul.f32 %v1088, %v1364
  %v1401 = vmul.f32 %v1089, %v1365
  %v1402 = vmul.f32 %v1090, %v1366
  %v1403 = vmul.f32 %v1091, %v1364
  %v1404 = vmul.f32 %v1092, %v1365
  %v1405 = vmul.f32 %v1093, %v1366
  %v1406 = vmul.f32 %v1094, %v1364
  %v1407 = vmul.f32 %v1095, %v1365
  %v1408 = vmul.f32 %v1096, %v1366
  %v1409 = vmul.f32 %v1097, %v1364
  %v1410 = vmul.f32 %v1098, %v1365
  %v1411 = vmul.f32 %v1099, %v1366
  %v1412 = vmul.f32 %v1100, %v1364
  %v1413 = vmul.f32 %v1101, %v1365
  %v1414 = vmul.f32 %v1102, %v1366
  %v1415 = vmul.f32 %v1103, %v1364
  %v1416 = vmul.f32 %v1104, %v1365
  %v1417 = vmul.f32 %v1105, %v1366
  %v1418 = vmul.f32 %v1106, %v1364
  %v1419 = vmul.f32 %v1107, %v1365
  %v1420 = vmul.f32 %v1108, %v1366
  %v1421 = vmul.f32 %v1109, %v1364
  %v1422 = vmul.f32 %v1110, %v1365
  %v1423 = vmul.f32 %v1111, %v1366
  %v1424 = vmul.f32 %v1112, %v1364
  %v1425 = vmul.f32 %v1113, %v1365
  %v1426 = vmul.f32 %v1114, %v1366
  %v1427 = vmul.f32 %v1115, %v1364
  %v1428 = vmul.f32 %v1116, %v1365
  %v1429 = vmul.f32 %v1117, %v1366
  %v1430 = vmul.f32 %v1118, %v1364
  %v1431 = vmul.f32 %v1119, %v1365
  %v1432 = vmul.f32 %v1120, %v1366
  %v1433 = vmul.f32 %v1121, %v1364
  %v1434 = vmul.f32 %v1122, %v1365
  %v1435 = vmul.f32 %v1123, %v1366
  %v1436 = vmul.f32 %v1124, %v1364
  %v1437 = vmul.f32 %v1125, %v1365
  %v1438 = vmul.f32 %v1126, %v1366
  %v1439 = vmul.f32 %v1127, %v1364
  %v1440 = vmul.f32 %v1128, %v1365
  %v1441 = vmul.f32 %v1129, %v1366
  %v1442 = vmul.f32 %v1130, %v1364
  %v1443 = vmul.f32 %v1131, %v1365
  %v1444 = vmul.f32 %v1132, %v1366
  %v1445 = vmul.f32 %v1133, %v1364
  %v1446 = vmul.f32 %v1134, %v1365
  %v1447 = vmul.f32 %v1135, %v1366
  %v1448 = vmul.f32 %v1136, %v1364
  %v1449 = vmul.f32 %v1137, %v1365
  %v1450 = vmul.f32 %v1138, %v1366
  %v1451 = vmul.f32 %v1139, %v1364
  %v1452 = vmul.f32 %v1140, %v1365
  %v1453 = vmul.f32 %v1141, %v1366
  %v1454 = vmul.f32 %v1142, %v1364
  %v1455 = vmul.f32 %v1143, %v1365
  %v1456 = vmul.f32 %v1144, %v1366
  %v1457 = vmul.f32 %v1145, %v1364
  %v1458 = vmul.f32 %v1146, %v1365
  %v1459 = vmul.f32 %v1147, %v1366
  %v1460 = vmul.f32 %v1148, %v1364
  %v1461 = vmul.f32 %v1149, %v1365
  %v1462 = vmul.f32 %v1150, %v1366
  %v1463 = vmul.f32 %v1151, %v1364
  %v1464 = vmul.f32 %v1152, %v1365
  %v1465 = vmul.f32 %v1153, %v1366
  %v1466 = vmul.f32 %v1154, %v1364
  %v1467 = vmul.f32 %v1155, %v1365
  %v1468 = vmul.f32 %v1156, %v1366
  %v1469 = vmul.f32 %v1157, %v1364
  %v1470 = vmul.f32 %v1158, %v1365
  %v1471 = vmul.f32 %v1159, %v1366
  %v1472 = vmul.f32 %v1160, %v1364
  %v1473 = vmul.f32 %v1161, %v1365
  %v1474 = vmul.f32 %v1162, %v1366
  %v1475 = vmul.f32 %v1163, %v1364
  %v1476 = vmul.f32 %v1164, %v1365
  %v1477 = vmul.f32 %v1165, %v1366
  %v1478 = vmul.f32 %v1166, %v1367
  %v1479 = vmul.f32 %v1167, %v1368
  %v1480 = vmul.f32 %v1168, %v1369
  %v1481 = vmul.f32 %v1169, %v1367
  %v1482 = vmul.f32 %v1170, %v1368
  %v1483 = vmul.f32 %v1171, %v1369
  %v1484 = vmul.f32 %v1172, %v1367
  %v1485 = vmul.f32 %v1173, %v1368
  %v1486 = vmul.f32 %v1174, %v1369
  %v1487 = vmul.f32 %v1175, %v1367
  %v1488 = vmul.f32 %v1176, %v1368
  %v1489 = vmul.f32 %v1177, %v1369
  %v1490 = vmul.f32 %v1178, %v1367
  %v1491 = vmul.f32 %v1179, %v1368
  %v1492 = vmul.f32 %v1180, %v1369
  %v1493 = vmul.f32 %v1181, %v1367
  %v1494 = vmul.f32 %v1182, %v1368
  %v1495 = vmul.f32 %v1183, %v1369
  %v1496 = vmul.f32 %v1184, %v1367
  %v1497 = vmul.f32 %v1185, %v1368
  %v1498 = vmul.f32 %v1186, %v1369
  %v1499 = vmul.f32 %v1187, %v1367
  %v1500 = vmul.f32 %v1188, %v1368
  %v1501 = vmul.f32 %v1189, %v1369
  %v1502 = vmul.f32 %v1190, %v1367
  %v1503 = vmul.f32 %v1191, %v1368
  %v1504 = vmul.f32 %v1192, %v1369
  %v1505 = vmul.f32 %v1193, %v1367
  %v1506 = vmul.f32 %v1194, %v1368
  %v1507 = vmul.f32 %v1195, %v1369
  %v1508 = vmul.f32 %v1196, %v1367
  %v1509 = vmul.f32 %v1197, %v1368
  %v1510 = vmul.f32 %v1198, %v1369
  %v1511 = vmul.f32 %v1199, %v1367
  %v1512 = vmul.f32 %v1200, %v1368
  %v1513 = vmul.f32 %v1201, %v1369
  %v1514 = vmul.f32 %v1202, %v1367
  %v1515 = vmul.f32 %v1203, %v1368
  %v1516 = vmul.f32 %v1204, %v1369
  %v1517 = vmul.f32 %v1205, %v1367
  %v1518 = vmul.f32 %v1206, %v1368
  %v1519 = vmul.f32 %v1207, %v1369
  %v1520 = vmul.f32 %v1208, %v1367
  %v1521 = vmul.f32 %v1209, %v1368
  %v1522 = vmul.f32 %v1210, %v1369
  %v1523 = vmul.f32 %v1211, %v1367
  %v1524 = vmul.f32 %v1212, %v1368
  %v1525 = vmul.f32 %v1213, %v1369
  %v1526 = vmul.f32 %v1214, %v1367
  %v1527 = vmul.f32 %v1215, %v1368
  %v1528 = vmul.f32 %v1216, %v1369
  %v1529 = vmul.f32 %v1217, %v1367
  %v1530 = vmul.f32 %v1218, %v1368
  %v1531 = vmul.f32 %v1219, %v1369
  %v1532 = vmul.f32 %v1220, %v1367
  %v1533 = vmul.f32 %v1221, %v1368
  %v1534 = vmul.f32 %v1222, %v1369
  %v1535 = vmul.f32 %v1223, %v1367
  %v1536 = vmul.f32 %v1224, %v1368
  %v1537 = vmul.f32 %v1225, %v1369
  %v1538 = vmul.f32 %v1226, %v1367
  %v1539 = vmul.f32 %v1227, %v1368
  %v1540 = vmul.f32 %v1228, %v1369
  %v1541 = vmul.f32 %v1229, %v1367
  %v1542 = vmul.f32 %v1230, %v1368
  %v1543 = vmul.f32 %v1231, %v1369
  %v1544 = vmul.f32 %v1232, %v1367
  %v1545 = vmul.f32 %v1233, %v1368
  %v1546 = vmul.f32 %v1234, %v1369
  %v1547 = vmul.f32 %v1235, %v1367
  %v1548 = vmul.f32 %v1236, %v1368
  %v1549 = vmul.f32 %v1237, %v1369
  %v1550 = vmul.f32 %v1238, %v1367
  %v1551 = vmul.f32 %v1239, %v1368
  %v1552 = vmul.f32 %v1240, %v1369
  %v1553 = vmul.f32 %v1241, %v1367
  %v1554 = vmul.f32 %v1242, %v1368
  %v1555 = vmul.f32 %v1243, %v1369
  %v1556 = vmul.f32 %v1244, %v1367
  %v1557 = vmul.f32 %v1245, %v1368
  %v1558 = vmul.f32 %v1246, %v1369
  %v1559 = vmul.f32 %v1247, %v1367
  %v1560 = vmul.f32 %v1248, %v1368
  %v1561 = vmul.f32 %v1249, %v1369
  %v1562 = vmul.f32 %v1250, %v1367
  %v1563 = vmul.f32 %v1251, %v1368
  %v1564 = vmul.f32 %v1252, %v1369
  %v1565 = vmul.f32 %v1253, %v1367
  %v1566 = vmul.f32 %v1254, %v1368
  %v1567 = vmul.f32 %v1255, %v1369
  %v1568 = vmul.f32 %v1256, %v1367
  %v1569 = vmul.f32 %v1257, %v1368
  %v1570 = vmul.f32 %v1258, %v1369
  %v1571 = vmul.f32 %v1259, %v1367
  %v1572 = vmul.f32 %v1260, %v1368
  %v1573 = vmul.f32 %v1261, %v1369
  %v1574 = vmul.f32 %v1262, %v1370
  %v1575 = vmul.f32 %v1263, %v1371
  %v1576 = vmul.f32 %v1264, %v1372
  %v1577 = vmul.f32 %v1265, %v1370
  %v1578 = vmul.f32 %v1266, %v1371
  %v1579 = vmul.f32 %v1267, %v1372
  %v1580 = vmul.f32 %v1268, %v1370
  %v1581 = vmul.f32 %v1269, %v1371
  %v1582 = vmul.f32 %v1270, %v1372
  %v1583 = vmul.f32 %v1271, %v1370
  %v1584 = vmul.f32 %v1272, %v1371
  %v1585 = vmul.f32 %v1273, %v1372
  %v1586 = vmul.f32 %v1274, %v1370
  %v1587 = vmul.f32 %v1275, %v1371
  %v1588 = vmul.f32 %v1276, %v1372
  %v1589 = vmul.f32 %v1277, %v1370
  %v1590 = vmul.f32 %v1278, %v1371
  %v1591 = vmul.f32 %v1279, %v1372
  %v1592 = vmul.f32 %v1280, %v1370
  %v1593 = vmul.f32 %v1281, %v1371
  %v1594 = vmul.f32 %v1282, %v1372
  %v1595 = vmul.f32 %v1283, %v1370
  %v1596 = vmul.f32 %v1284, %v1371
  %v1597 = vmul.f32 %v1285, %v1372
  %v1598 = vmul.f32 %v1286, %v1370
  %v1599 = vmul.f32 %v1287, %v1371
  %v1600 = vmul.f32 %v1288, %v1372
  %v1601 = vmul.f32 %v1289, %v1370
  %v1602 = vmul.f32 %v1290, %v1371
  %v1603 = vmul.f32 %v1291, %v1372
  %v1604 = vmul.f32 %v1292, %v1370
  %v1605 = vmul.f32 %v1293, %v1371
  %v1606 = vmul.f32 %v1294, %v1372
  %v1607 = vmul.f32 %v1295, %v1370
  %v1608 = vmul.f32 %v1296, %v1371
  %v1609 = vmul.f32 %v1297, %v1372
  %v1610 = vmul.f32 %v1298, %v1370
  %v1611 = vmul.f32 %v1299, %v1371
  %v1612 = vmul.f32 %v1300, %v1372
  %v1613 = vmul.f32 %v1301, %v1370
  %v1614 = vmul.f32 %v1302, %v1371
  %v1615 = vmul.f32 %v1303, %v1372
  %v1616 = vmul.f32 %v1304, %v1370
  %v1617 = vmul.f32 %v1305, %v1371
  %v1618 = vmul.f32 %v1306, %v1372
  %v1619 = vmul.f32 %v1307, %v1370
  %v1620 = vmul.f32 %v1308, %v1371
  %v1621 = vmul.f32 %v1309, %v1372
  %v1622 = vmul.f32 %v1310, %v1370
  %v1623 = vmul.f32 %v1311, %v1371
  %v1624 = vmul.f32 %v1312, %v1372
  %v1625 = vmul.f32 %v1313, %v1370
  %v1626 = vmul.f32 %v1314, %v1371
  %v1627 = vmul.f32 %v1315, %v1372
  %v1628 = vmul.f32 %v1316, %v1370
  %v1629 = vmul.f32 %v1317, %v1371
  %v1630 = vmul.f32 %v1318, %v1372
  %v1631 = vmul.f32 %v1319, %v1370
  %v1632 = vmul.f32 %v1320, %v1371
  %v1633 = vmul.f32 %v1321, %v1372
  %v1634 = vmul.f32 %v1322, %v1370
  %v1635 = vmul.f32 %v1323, %v1371
  %v1636 = vmul.f32 %v1324, %v1372
  %v1637 = vmul.f32 %v1325, %v1370
  %v1638 = vmul.f32 %v1326, %v1371
  %v1639 = vmul.f32 %v1327, %v1372
  %v1640 = vmul.f32 %v1328, %v1370
  %v1641 = vmul.f32 %v1329, %v1371
  %v1642 = vmul.f32 %v1330, %v1372
  %v1643 = vmul.f32 %v1331, %v1370
  %v1644 = vmul.f32 %v1332, %v1371
  %v1645 = vmul.f32 %v1333, %v1372
  %v1646 = vmul.f32 %v1334, %v1370
  %v1647 = vmul.f32 %v1335, %v1371
  %v1648 = vmul.f32 %v1336, %v1372
  %v1649 = vmul.f32 %v1337, %v1370
  %v1650 = vmul.f32 %v1338, %v1371
  %v1651 = vmul.f32 %v1339, %v1372
  %v1652 = vmul.f32 %v1340, %v1370
  %v1653 = vmul.f32 %v1341, %v1371
  %v1654 = vmul.f32 %v1342, %v1372
  %v1655 = vmul.f32 %v1343, %v1370
  %v1656 = vmul.f32 %v1344, %v1371
  %v1657 = vmul.f32 %v1345, %v1372
  %v1658 = vmul.f32 %v1346, %v1370
  %v1659 = vmul.f32 %v1347, %v1371
  %v1660 = vmul.f32 %v1348, %v1372
  %v1661 = vmul.f32 %v1349, %v1370
  %v1662 = vmul.f32 %v1350, %v1371
  %v1663 = vmul.f32 %v1351, %v1372
  %v1664 = vmul.f32 %v1352, %v1370
  %v1665 = vmul.f32 %v1353, %v1371
  %v1666 = vmul.f32 %v1354, %v1372
  %v1667 = vmul.f32 %v1355, %v1370
  %v1668 = vmul.f32 %v1356, %v1371
  %v1669 = vmul.f32 %v1357, %v1372
  %v1670 = vadd.f32 %v1382, %v1478
  %v1671 = vadd.f32 %v1670, %v1574
  %v1672 = vadd.f32 %v1383, %v1479
  %v1673 = vadd.f32 %v1672, %v1575
  %v1674 = vadd.f32 %v1384, %v1480
  %v1675 = vadd.f32 %v1674, %v1576
  %v1676 = vadd.f32 %v1385, %v1481
  %v1677 = vadd.f32 %v1676, %v1577
  %v1678 = vadd.f32 %v1386, %v1482
  %v1679 = vadd.f32 %v1678, %v1578
  %v1680 = vadd.f32 %v1387, %v1483
  %v1681 = vadd.f32 %v1680, %v1579
  %v1682 = vadd.f32 %v1388, %v1484
  %v1683 = vadd.f32 %v1682, %v1580
  %v1684 = vadd.f32 %v1389, %v1485
  %v1685 = vadd.f32 %v1684, %v1581
  %v1686 = vadd.f32 %v1390, %v1486
  %v1687 = vadd.f32 %v1686, %v1582
  %v1688 = vadd.f32 %v1391, %v1487
  %v1689 = vadd.f32 %v1688, %v1583
  %v1690 = vadd.f32 %v1392, %v1488
  %v1691 = vadd.f32 %v1690, %v1584
  %v1692 = vadd.f32 %v1393, %v1489
  %v1693 = vadd.f32 %v1692, %v1585
  %v1694 = vadd.f32 %v1394, %v1490
  %v1695 = vadd.f32 %v1694, %v1586
  %v1696 = vadd.f32 %v1395, %v1491
  %v1697 = vadd.f32 %v1696, %v1587
  %v1698 = vadd.f32 %v1396, %v1492
  %v1699 = vadd.f32 %v1698, %v1588
  %v1700 = vadd.f32 %v1397, %v1493
  %v1701 = vadd.f32 %v1700, %v1589
  %v1702 = vadd.f32 %v1398, %v1494
  %v1703 = vadd.f32 %v1702, %v1590
  %v1704 = vadd.f32 %v1399, %v1495
  %v1705 = vadd.f32 %v1704, %v1591
  %v1706 = vadd.f32 %v1400, %v1496
  %v1707 = vadd.f32 %v1706, %v1592
  %v1708 = vadd.f32 %v1401, %v1497
  %v1709 = vadd.f32 %v1708, %v1593
  %v1710 = vadd.f32 %v1402, %v1498
  %v1711 = vadd.f32 %v1710, %v1594
  %v1712 = vadd.f32 %v1403, %v1499
  %v1713 = vadd.f32 %v1712, %v1595
  %v1714 = vadd.f32 %v1404, %v1500
  %v1715 = vadd.f32 %v1714, %v1596
  %v1716 = vadd.f32 %v1405, %v1501
  %v1717 = vadd.f32 %v1716, %v1597
  %v1718 = vadd.f32 %v1406, %v1502
  %v1719 = vadd.f32 %v1718, %v1598
  %v1720 = vadd.f32 %v1407, %v1503
  %v1721 = vadd.f32 %v1720, %v1599
  %v1722 = vadd.f32 %v1408, %v1504
  %v1723 = vadd.f32 %v1722, %v1600
  %v1724 = vadd.f32 %v1409, %v1505
  %v1725 = vadd.f32 %v1724, %v1601
  %v1726 = vadd.f32 %v1410, %v1506
  %v1727 = vadd.f32 %v1726, %v1602
  %v1728 = vadd.f32 %v1411, %v1507
  %v1729 = vadd.f32 %v1728, %v1603
  %v1730 = vadd.f32 %v1412, %v1508
  %v1731 = vadd.f32 %v1730, %v1604
  %v1732 = vadd.f32 %v1413, %v1509
  %v1733 = vadd.f32 %v1732, %v1605
  %v1734 = vadd.f32 %v1414, %v1510
  %v1735 = vadd.f32 %v1734, %v1606
  %v1736 = vadd.f32 %v1415, %v1511
  %v1737 = vadd.f32 %v1736, %v1607
  %v1738 = vadd.f32 %v1416, %v1512
  %v1739 = vadd.f32 %v1738, %v1608
  %v1740 = vadd.f32 %v1417, %v1513
  %v1741 = vadd.f32 %v1740, %v1609
  %v1742 = vadd.f32 %v1418, %v1514
  %v1743 = vadd.f32 %v1742, %v1610
  %v1744 = vadd.f32 %v1419, %v1515
  %v1745 = vadd.f32 %v1744, %v1611
  %v1746 = vadd.f32 %v1420, %v1516
  %v1747 = vadd.f32 %v1746, %v1612
  %v1748 = vadd.f32 %v1421, %v1517
  %v1749 = vadd.f32 %v1748, %v1613
  %v1750 = vadd.f32 %v1422, %v1518
  %v1751 = vadd.f32 %v1750, %v1614
  %v1752 = vadd.f32 %v1423, %v1519
  %v1753 = vadd.f32 %v1752, %v1615
  %v1754 = vadd.f32 %v1424, %v1520
  %v1755 = vadd.f32 %v1754, %v1616
  %v1756 = vadd.f32 %v1425, %v1521
  %v1757 = vadd.f32 %v1756, %v1617
  %v1758 = vadd.f32 %v1426, %v1522
  %v1759 = vadd.f32 %v1758, %v1618
  %v1760 = vadd.f32 %v1427, %v1523
  %v1761 = vadd.f32 %v1760, %v1619
  %v1762 = vadd.f32 %v1428, %v1524
  %v1763 = vadd.f32 %v1762, %v1620
  %v1764 = vadd.f32 %v1429, %v1525
  %v1765 = vadd.f32 %v1764, %v1621
  %v1766 = vadd.f32 %v1430, %v1526
  %v1767 = vadd.f32 %v1766, %v1622
  %v1768 = vadd.f32 %v1431, %v1527
  %v1769 = vadd.f32 %v1768, %v1623
  %v1770 = vadd.f32 %v1432, %v1528
  %v1771 = vadd.f32 %v1770, %v1624
  %v1772 = vadd.f32 %v1433, %v1529
  %v1773 = vadd.f32 %v1772, %v1625
  %v1774 = vadd.f32 %v1434, %v1530
  %v1775 = vadd.f32 %v1774, %v1626
  %v1776 = vadd.f32 %v1435, %v1531
  %v1777 = vadd.f32 %v1776, %v1627
  %v1778 = vadd.f32 %v1436, %v1532
  %v1779 = vadd.f32 %v1778, %v1628
  %v1780 = vadd.f32 %v1437, %v1533
  %v1781 = vadd.f32 %v1780, %v1629
  %v1782 = vadd.f32 %v1438, %v1534
  %v1783 = vadd.f32 %v1782, %v1630
  %v1784 = vadd.f32 %v1439, %v1535
  %v1785 = vadd.f32 %v1784, %v1631
  %v1786 = vadd.f32 %v1440, %v1536
  %v1787 = vadd.f32 %v1786, %v1632
  %v1788 = vadd.f32 %v1441, %v1537
  %v1789 = vadd.f32 %v1788, %v1633
  %v1790 = vadd.f32 %v1442, %v1538
  %v1791 = vadd.f32 %v1790, %v1634
  %v1792 = vadd.f32 %v1443, %v1539
  %v1793 = vadd.f32 %v1792, %v1635
  %v1794 = vadd.f32 %v1444, %v1540
  %v1795 = vadd.f32 %v1794, %v1636
  %v1796 = vadd.f32 %v1445, %v1541
  %v1797 = vadd.f32 %v1796, %v1637
  %v1798 = vadd.f32 %v1446, %v1542
  %v1799 = vadd.f32 %v1798, %v1638
  %v1800 = vadd.f32 %v1447, %v1543
  %v1801 = vadd.f32 %v1800, %v1639
  %v1802 = vadd.f32 %v1448, %v1544
  %v1803 = vadd.f32 %v1802, %v1640
  %v1804 = vadd.f32 %v1449, %v1545
  %v1805 = vadd.f32 %v1804, %v1641
  %v1806 = vadd.f32 %v1450, %v1546
  %v1807 = vadd.f32 %v1806, %v1642
  %v1808 = vadd.f32 %v1451, %v1547
  %v1809 = vadd.f32 %v1808, %v1643
  %v1810 = vadd.f32 %v1452, %v1548
  %v1811 = vadd.f32 %v1810, %v1644
  %v1812 = vadd.f32 %v1453, %v1549
  %v1813 = vadd.f32 %v1812, %v1645
  %v1814 = vadd.f32 %v1454, %v1550
  %v1815 = vadd.f32 %v1814, %v1646
  %v1816 = vadd.f32 %v1455, %v1551
  %v1817 = vadd.f32 %v1816, %v1647
  %v1818 = vadd.f32 %v1456, %v1552
  %v1819 = vadd.f32 %v1818, %v1648
  %v1820 = vadd.f32 %v1457, %v1553
  %v1821 = vadd.f32 %v1820, %v1649
  %v1822 = vadd.f32 %v1458, %v1554
  %v1823 = vadd.f32 %v1822, %v1650
  %v1824 = vadd.f32 %v1459, %v1555
  %v1825 = vadd.f32 %v1824, %v1651
  %v1826 = vadd.f32 %v1460, %v1556
  %v1827 = vadd.f32 %v1826, %v1652
  %v1828 = vadd.f32 %v1461, %v1557
  %v1829 = vadd.f32 %v1828, %v1653
  %v1830 = vadd.f32 %v1462, %v1558
  %v1831 = vadd.f32 %v1830, %v1654
  %v1832 = vadd.f32 %v1463, %v1559
  %v1833 = vadd.f32 %v1832, %v1655
  %v1834 = vadd.f32 %v1464, %v1560
  %v1835 = vadd.f32 %v1834, %v1656
  %v1836 = vadd.f32 %v1465, %v1561
  %v1837 = vadd.f32 %v1836, %v1657
  %v1838 = vadd.f32 %v1466, %v1562
  %v1839 = vadd.f32 %v1838, %v1658
  %v1840 = vadd.f32 %v1467, %v1563
  %v1841 = vadd.f32 %v1840, %v1659
  %v1842 = vadd.f32 %v1468, %v1564
  %v1843 = vadd.f32 %v1842, %v1660
  %v1844 = vadd.f32 %v1469, %v1565
  %v1845 = vadd.f32 %v1844, %v1661
  %v1846 = vadd.f32 %v1470, %v1566
  %v1847 = vadd.f32 %v1846, %v1662
  %v1848 = vadd.f32 %v1471, %v1567
  %v1849 = vadd.f32 %v1848, %v1663
  %v1850 = vadd.f32 %v1472, %v1568
  %v1851 = vadd.f32 %v1850, %v1664
  %v1852 = vadd.f32 %v1473, %v1569
  %v1853 = vadd.f32 %v1852, %v1665
  %v1854 = vadd.f32 %v1474, %v1570
  %v1855 = vadd.f32 %v1854, %v1666
  %v1856 = vadd.f32 %v1475, %v1571
  %v1857 = vadd.f32 %v1856, %v1667
  %v1858 = vadd.f32 %v1476, %v1572
  %v1859 = vadd.f32 %v1858, %v1668
  %v1860 = vadd.f32 %v1477, %v1573
  %v1861 = vadd.f32 %v1860, %v1669
  %v1862 = vpack.c.bf16 %v1673, %v1671
  %v1863 = vpack.c.bf16 %v1675, %v1675
  %v1864 = vpack.c.bf16 %v1679, %v1677
  %v1865 = vpack.c.bf16 %v1681, %v1681
  %v1866 = vpack.c.bf16 %v1685, %v1683
  %v1867 = vpack.c.bf16 %v1687, %v1687
  %v1868 = vpack.c.bf16 %v1691, %v1689
  %v1869 = vpack.c.bf16 %v1693, %v1693
  %v1870 = vpack.c.bf16 %v1697, %v1695
  %v1871 = vpack.c.bf16 %v1699, %v1699
  %v1872 = vpack.c.bf16 %v1703, %v1701
  %v1873 = vpack.c.bf16 %v1705, %v1705
  %v1874 = vpack.c.bf16 %v1709, %v1707
  %v1875 = vpack.c.bf16 %v1711, %v1711
  %v1876 = vpack.c.bf16 %v1715, %v1713
  %v1877 = vpack.c.bf16 %v1717, %v1717
  %v1878 = vpack.c.bf16 %v1721, %v1719
  %v1879 = vpack.c.bf16 %v1723, %v1723
  %v1880 = vpack.c.bf16 %v1727, %v1725
  %v1881 = vpack.c.bf16 %v1729, %v1729
  %v1882 = vpack.c.bf16 %v1733, %v1731
  %v1883 = vpack.c.bf16 %v1735, %v1735
  %v1884 = vpack.c.bf16 %v1739, %v1737
  %v1885 = vpack.c.bf16 %v1741, %v1741
  %v1886 = vpack.c.bf16 %v1745, %v1743
  %v1887 = vpack.c.bf16 %v1747, %v1747
  %v1888 = vpack.c.bf16 %v1751, %v1749
  %v1889 = vpack.c.bf16 %v1753, %v1753
  %v1890 = vpack.c.bf16 %v1757, %v1755
  %v1891 = vpack.c.bf16 %v1759, %v1759
  %v1892 = vpack.c.bf16 %v1763, %v1761
  %v1893 = vpack.c.bf16 %v1765, %v1765
  %v1894 = vpack.c.bf16 %v1769, %v1767
  %v1895 = vpack.c.bf16 %v1771, %v1771
  %v1896 = vpack.c.bf16 %v1775, %v1773
  %v1897 = vpack.c.bf16 %v1777, %v1777
  %v1898 = vpack.c.bf16 %v1781, %v1779
  %v1899 = vpack.c.bf16 %v1783, %v1783
  %v1900 = vpack.c.bf16 %v1787, %v1785
  %v1901 = vpack.c.bf16 %v1789, %v1789
  %v1902 = vpack.c.bf16 %v1793, %v1791
  %v1903 = vpack.c.bf16 %v1795, %v1795
  %v1904 = vpack.c.bf16 %v1799, %v1797
  %v1905 = vpack.c.bf16 %v1801, %v1801
  %v1906 = vpack.c.bf16 %v1805, %v1803
  %v1907 = vpack.c.bf16 %v1807, %v1807
  %v1908 = vpack.c.bf16 %v1811, %v1809
  %v1909 = vpack.c.bf16 %v1813, %v1813
  %v1910 = vpack.c.bf16 %v1817, %v1815
  %v1911 = vpack.c.bf16 %v1819, %v1819
  %v1912 = vpack.c.bf16 %v1823, %v1821
  %v1913 = vpack.c.bf16 %v1825, %v1825
  %v1914 = vpack.c.bf16 %v1829, %v1827
  %v1915 = vpack.c.bf16 %v1831, %v1831
  %v1916 = vpack.c.bf16 %v1835, %v1833
  %v1917 = vpack.c.bf16 %v1837, %v1837
  %v1918 = vpack.c.bf16 %v1841, %v1839
  %v1919 = vpack.c.bf16 %v1843, %v1843
  %v1920 = vpack.c.bf16 %v1847, %v1845
  %v1921 = vpack.c.bf16 %v1849, %v1849
  %v1922 = vpack.c.bf16 %v1853, %v1851
  %v1923 = vpack.c.bf16 %v1855, %v1855
  %v1924 = vpack.c.bf16 %v1859, %v1857
  %v1925 = vpack.c.bf16 %v1861, %v1861
  %1926 = vst [vmem:[%s3] sm:$0xff] %v1862
  %1927 = vst [vmem:[%s3 + $0x8] sm:$0xf] %v1863
  %1928 = vst [vmem:[%s3 + $0xc] sm:$0xff] %v1864
  %1929 = vst [vmem:[%s3 + $0x14] sm:$0xf] %v1865
  %1930 = vst [vmem:[%s3 + $0x18] sm:$0xff] %v1866
  %1931 = vst [vmem:[%s3 + $0x20] sm:$0xf] %v1867
  %1932 = vst [vmem:[%s3 + $0x24] sm:$0xff] %v1868
  %1933 = vst [vmem:[%s3 + $0x2c] sm:$0xf] %v1869
  %1934 = vst [vmem:[%s3 + $0x30] sm:$0xff] %v1870
  %1935 = vst [vmem:[%s3 + $0x38] sm:$0xf] %v1871
  %1936 = vst [vmem:[%s3 + $0x3c] sm:$0xff] %v1872
  %1937 = vst [vmem:[%s3 + $0x44] sm:$0xf] %v1873
  %1938 = vst [vmem:[%s3 + $0x48] sm:$0xff] %v1874
  %1939 = vst [vmem:[%s3 + $0x50] sm:$0xf] %v1875
  %1940 = vst [vmem:[%s3 + $0x54] sm:$0xff] %v1876
  %1941 = vst [vmem:[%s3 + $0x5c] sm:$0xf] %v1877
  %1942 = vst [vmem:[%s3 + $0x60] sm:$0xff] %v1878
  %1943 = vst [vmem:[%s3 + $0x68] sm:$0xf] %v1879
  %1944 = vst [vmem:[%s3 + $0x6c] sm:$0xff] %v1880
  %1945 = vst [vmem:[%s3 + $0x74] sm:$0xf] %v1881
  %1946 = vst [vmem:[%s3 + $0x78] sm:$0xff] %v1882
  %1947 = vst [vmem:[%s3 + $0x80] sm:$0xf] %v1883
  %1948 = vst [vmem:[%s3 + $0x84] sm:$0xff] %v1884
  %1949 = vst [vmem:[%s3 + $0x8c] sm:$0xf] %v1885
  %1950 = vst [vmem:[%s3 + $0x90] sm:$0xff] %v1886
  %1951 = vst [vmem:[%s3 + $0x98] sm:$0xf] %v1887
  %1952 = vst [vmem:[%s3 + $0x9c] sm:$0xff] %v1888
  %1953 = vst [vmem:[%s3 + $0xa4] sm:$0xf] %v1889
  %1954 = vst [vmem:[%s3 + $0xa8] sm:$0xff] %v1890
  %1955 = vst [vmem:[%s3 + $0xb0] sm:$0xf] %v1891
  %1956 = vst [vmem:[%s3 + $0xb4] sm:$0xff] %v1892
  %1957 = vst [vmem:[%s3 + $0xbc] sm:$0xf] %v1893
  %1958 = vst [vmem:[%s3 + $0xc0] sm:$0xff] %v1894
  %1959 = vst [vmem:[%s3 + $0xc8] sm:$0xf] %v1895
  %1960 = vst [vmem:[%s3 + $0xcc] sm:$0xff] %v1896
  %1961 = vst [vmem:[%s3 + $0xd4] sm:$0xf] %v1897
  %1962 = vst [vmem:[%s3 + $0xd8] sm:$0xff] %v1898
  %1963 = vst [vmem:[%s3 + $0xe0] sm:$0xf] %v1899
  %1964 = vst [vmem:[%s3 + $0xe4] sm:$0xff] %v1900
  %1965 = vst [vmem:[%s3 + $0xec] sm:$0xf] %v1901
  %1966 = vst [vmem:[%s3 + $0xf0] sm:$0xff] %v1902
  %1967 = vst [vmem:[%s3 + $0xf8] sm:$0xf] %v1903
  %1968 = vst [vmem:[%s3 + $0xfc] sm:$0xff] %v1904
  %1969 = vst [vmem:[%s3 + $0x104] sm:$0xf] %v1905
  %1970 = vst [vmem:[%s3 + $0x108] sm:$0xff] %v1906
  %1971 = vst [vmem:[%s3 + $0x110] sm:$0xf] %v1907
  %1972 = vst [vmem:[%s3 + $0x114] sm:$0xff] %v1908
  %1973 = vst [vmem:[%s3 + $0x11c] sm:$0xf] %v1909
  %1974 = vst [vmem:[%s3 + $0x120] sm:$0xff] %v1910
  %1975 = vst [vmem:[%s3 + $0x128] sm:$0xf] %v1911
  %1976 = vst [vmem:[%s3 + $0x12c] sm:$0xff] %v1912
  %1977 = vst [vmem:[%s3 + $0x134] sm:$0xf] %v1913
  %1978 = vst [vmem:[%s3 + $0x138] sm:$0xff] %v1914
  %1979 = vst [vmem:[%s3 + $0x140] sm:$0xf] %v1915
  %1980 = vst [vmem:[%s3 + $0x144] sm:$0xff] %v1916
  %1981 = vst [vmem:[%s3 + $0x14c] sm:$0xf] %v1917
  %1982 = vst [vmem:[%s3 + $0x150] sm:$0xff] %v1918
  %1983 = vst [vmem:[%s3 + $0x158] sm:$0xf] %v1919
  %1984 = vst [vmem:[%s3 + $0x15c] sm:$0xff] %v1920
  %1985 = vst [vmem:[%s3 + $0x164] sm:$0xf] %v1921
  %1986 = vst [vmem:[%s3 + $0x168] sm:$0xff] %v1922
  %1987 = vst [vmem:[%s3 + $0x170] sm:$0xf] %v1923
  %1988 = vst [vmem:[%s3 + $0x174] sm:$0xff] %v1924
  %1989 = vst [vmem:[%s3 + $0x17c] sm:$0xf] %v1925
  // Predicated region
  $region14: #{lightgcn_forward.6} parent=0 // pred_check
    _
  $region15: #{lightgcn_forward.6} parent=0 // pred_check_branch
    %1991 = sbr.rel (0) target = $region17
  $region16: #{lightgcn_forward.6} parent=0 // pred_region
    _
  $region17: #{lightgcn_forward.6} parent=0 // pred_fallthru
    _
  // Predicated region
  $region18: #{lightgcn_forward.6} parent=0 // pred_check
    _
  $region19: #{lightgcn_forward.6} parent=0 // pred_check_branch
    %1993 = sbr.rel (0) target = $region21
  $region20: #{lightgcn_forward.6} parent=0 // pred_region
    _
  $region21: #{lightgcn_forward.6} parent=0 // pred_fallthru
    _

// kernel: lightgcn_forward.11
$region0: #{lightgcn_forward.11}
  #allocation0 [shape = 'u32[]', space=smem, size = 0x4, offset = 0x4, fixed_abs, tag = 'smem constant byte address 0x4 - core index']
  #allocation1 [shape = 'u32[72,128]{1,0:T(1,128)}', space=vmem, size = 0x9000, scoped, tag = 'internal scratch']
  %s0 = inlined_call_operand.vmem [shape: bf16[512,128], index: 0, kind: input, shape index: {}]
  %s1 = inlined_call_operand.vmem [shape: bf16[512,128], index: 1, kind: input, shape index: {}]
  %s2 = inlined_call_operand.vmem [shape: bf16[128,256], index: 2, kind: input, shape index: {}]
  %s3 = inlined_call_operand.vmem [shape: f32[2,128], index: 3, kind: input, shape index: {}]
  %s4 = inlined_call_operand.vmem [shape: f32[512,128], index: 4, kind: output, shape index: {}]
  %s5 = sld [smem:[#allocation0]]
  $region26: #{lightgcn_forward.11} parent=0
    _
  %s7 = ssub.s32 1, %s5
  %s8 = scalar_select 0, %s7, %s5
  // Predicated region
  $region2: #{lightgcn_forward.11} parent=0 // pred_check
    _
  $region3: #{lightgcn_forward.11} parent=0 // pred_check_branch
    %10 = sbr.rel (0) target = $region5
  $region4: #{lightgcn_forward.11} parent=0 // pred_region
    _
  $region5: #{lightgcn_forward.11} parent=0 // pred_fallthru
    _
  // Predicated region
  $region6: #{lightgcn_forward.11} parent=0 // pred_check
    _
  $region7: #{lightgcn_forward.11} parent=0 // pred_check_branch
    %12 = sbr.rel (0) target = $region9
  $region8: #{lightgcn_forward.11} parent=0 // pred_region
    _
  $region9: #{lightgcn_forward.11} parent=0 // pred_fallthru
    _
  // Predicated region
  $region10: #{lightgcn_forward.11} parent=0 // pred_check
    _
  $region11: #{lightgcn_forward.11} parent=0 // pred_check_branch
    %14 = sbr.rel (0) target = $region13
  $region12: #{lightgcn_forward.11} parent=0 // pred_region
    _
  $region13: #{lightgcn_forward.11} parent=0 // pred_fallthru
    _
  // Predicated region
  $region14: #{lightgcn_forward.11} parent=0 // pred_check
    _
  $region15: #{lightgcn_forward.11} parent=0 // pred_check_branch
    %16 = sbr.rel (0) target = $region17
  $region16: #{lightgcn_forward.11} parent=0 // pred_region
    _
  $region17: #{lightgcn_forward.11} parent=0 // pred_fallthru
    _
  %v17 = vld [vmem:[%s0] sm:$0xf]
  %v18 = vld [vmem:[%s0 + $0x4] sm:$0xf]
  %v19 = vld [vmem:[%s0 + $0x8] sm:$0xf]
  %v20 = vld [vmem:[%s0 + $0xc] sm:$0xf]
  %v21 = vld [vmem:[%s0 + $0x10] sm:$0xf]
  %v22 = vld [vmem:[%s0 + $0x14] sm:$0xf]
  %v23 = vld [vmem:[%s0 + $0x18] sm:$0xf]
  %v24 = vld [vmem:[%s0 + $0x1c] sm:$0xf]
  %v25 = vld [vmem:[%s0 + $0x20] sm:$0xf]
  %v26 = vld [vmem:[%s0 + $0x24] sm:$0xf]
  %v27 = vld [vmem:[%s0 + $0x28] sm:$0xf]
  %v28 = vld [vmem:[%s0 + $0x2c] sm:$0xf]
  %v29 = vld [vmem:[%s0 + $0x30] sm:$0xf]
  %v30 = vld [vmem:[%s0 + $0x34] sm:$0xf]
  %v31 = vld [vmem:[%s0 + $0x38] sm:$0xf]
  %v32 = vld [vmem:[%s0 + $0x3c] sm:$0xf]
  %v33 = vld [vmem:[%s0 + $0x40] sm:$0xf]
  %v34 = vld [vmem:[%s0 + $0x44] sm:$0xf]
  %v35 = vld [vmem:[%s0 + $0x48] sm:$0xf]
  %v36 = vld [vmem:[%s0 + $0x4c] sm:$0xf]
  %v37 = vld [vmem:[%s0 + $0x50] sm:$0xf]
  %v38 = vld [vmem:[%s0 + $0x54] sm:$0xf]
  %v39 = vld [vmem:[%s0 + $0x58] sm:$0xf]
  %v40 = vld [vmem:[%s0 + $0x5c] sm:$0xf]
  %v41 = vld [vmem:[%s0 + $0x60] sm:$0xf]
  %v42 = vld [vmem:[%s0 + $0x64] sm:$0xf]
  %v43 = vld [vmem:[%s0 + $0x68] sm:$0xf]
  %v44 = vld [vmem:[%s0 + $0x6c] sm:$0xf]
  %v45 = vld [vmem:[%s0 + $0x70] sm:$0xf]
  %v46 = vld [vmem:[%s0 + $0x74] sm:$0xf]
  %v47 = vld [vmem:[%s0 + $0x78] sm:$0xf]
  %v48 = vld [vmem:[%s0 + $0x7c] sm:$0xf]
  %v49 = vld [vmem:[%s0 + $0x80] sm:$0xf]
  %v50 = vld [vmem:[%s0 + $0x84] sm:$0xf]
  %v51 = vld [vmem:[%s0 + $0x88] sm:$0xf]
  %v52 = vld [vmem:[%s0 + $0x8c] sm:$0xf]
  %v53 = vld [vmem:[%s0 + $0x90] sm:$0xf]
  %v54 = vld [vmem:[%s0 + $0x94] sm:$0xf]
  %v55 = vld [vmem:[%s0 + $0x98] sm:$0xf]
  %v56 = vld [vmem:[%s0 + $0x9c] sm:$0xf]
  %v57 = vld [vmem:[%s0 + $0xa0] sm:$0xf]
  %v58 = vld [vmem:[%s0 + $0xa4] sm:$0xf]
  %v59 = vld [vmem:[%s0 + $0xa8] sm:$0xf]
  %v60 = vld [vmem:[%s0 + $0xac] sm:$0xf]
  %v61 = vld [vmem:[%s0 + $0xb0] sm:$0xf]
  %v62 = vld [vmem:[%s0 + $0xb4] sm:$0xf]
  %v63 = vld [vmem:[%s0 + $0xb8] sm:$0xf]
  %v64 = vld [vmem:[%s0 + $0xbc] sm:$0xf]
  %v65 = vld [vmem:[%s0 + $0xc0] sm:$0xf]
  %v66 = vld [vmem:[%s0 + $0xc4] sm:$0xf]
  %v67 = vld [vmem:[%s0 + $0xc8] sm:$0xf]
  %v68 = vld [vmem:[%s0 + $0xcc] sm:$0xf]
  %v69 = vld [vmem:[%s0 + $0xd0] sm:$0xf]
  %v70 = vld [vmem:[%s0 + $0xd4] sm:$0xf]
  %v71 = vld [vmem:[%s0 + $0xd8] sm:$0xf]
  %v72 = vld [vmem:[%s0 + $0xdc] sm:$0xf]
  %v73 = vld [vmem:[%s0 + $0xe0] sm:$0xf]
  %v74 = vld [vmem:[%s0 + $0xe4] sm:$0xf]
  %v75 = vld [vmem:[%s0 + $0xe8] sm:$0xf]
  %v76 = vld [vmem:[%s0 + $0xec] sm:$0xf]
  %v77 = vld [vmem:[%s0 + $0xf0] sm:$0xf]
  %v78 = vld [vmem:[%s0 + $0xf4] sm:$0xf]
  %v79 = vld [vmem:[%s0 + $0xf8] sm:$0xf]
  %v80 = vld [vmem:[%s0 + $0xfc] sm:$0xf]
  %v81 = vld [vmem:[%s2] sm:$0xff]
  %v82 = vld [vmem:[%s2 + $0x8] sm:$0xff]
  %v83 = vld [vmem:[%s2 + $0x10] sm:$0xff]
  %v84 = vld [vmem:[%s2 + $0x18] sm:$0xff]
  %v85 = vld [vmem:[%s2 + $0x20] sm:$0xff]
  %v86 = vld [vmem:[%s2 + $0x28] sm:$0xff]
  %v87 = vld [vmem:[%s2 + $0x30] sm:$0xff]
  %v88 = vld [vmem:[%s2 + $0x38] sm:$0xff]
  %v89 = vld [vmem:[%s2 + $0x40] sm:$0xff]
  %v90 = vld [vmem:[%s2 + $0x48] sm:$0xff]
  %v91 = vld [vmem:[%s2 + $0x50] sm:$0xff]
  %v92 = vld [vmem:[%s2 + $0x58] sm:$0xff]
  %v93 = vld [vmem:[%s2 + $0x60] sm:$0xff]
  %v94 = vld [vmem:[%s2 + $0x68] sm:$0xff]
  %v95 = vld [vmem:[%s2 + $0x70] sm:$0xff]
  %v96 = vld [vmem:[%s2 + $0x78] sm:$0xff]
  %v161 = vunpack.c.l.b16 %v17
  %v162 = vunpack.c.l.b16 %v18
  %v163 = vunpack.c.l.b16 %v19
  %v164 = vunpack.c.l.b16 %v20
  %v165 = vunpack.c.l.b16 %v21
  %v166 = vunpack.c.l.b16 %v22
  %v167 = vunpack.c.l.b16 %v23
  %v168 = vunpack.c.l.b16 %v24
  %v169 = vunpack.c.l.b16 %v25
  %v170 = vunpack.c.l.b16 %v26
  %v171 = vunpack.c.l.b16 %v27
  %v172 = vunpack.c.l.b16 %v28
  %v173 = vunpack.c.l.b16 %v29
  %v174 = vunpack.c.l.b16 %v30
  %v175 = vunpack.c.l.b16 %v31
  %v176 = vunpack.c.l.b16 %v32
  %v177 = vunpack.c.l.b16 %v33
  %v178 = vunpack.c.l.b16 %v34
  %v179 = vunpack.c.l.b16 %v35
  %v180 = vunpack.c.l.b16 %v36
  %v181 = vunpack.c.l.b16 %v37
  %v182 = vunpack.c.l.b16 %v38
  %v183 = vunpack.c.l.b16 %v39
  %v184 = vunpack.c.l.b16 %v40
  %v185 = vunpack.c.l.b16 %v41
  %v186 = vunpack.c.l.b16 %v42
  %v187 = vunpack.c.l.b16 %v43
  %v188 = vunpack.c.l.b16 %v44
  %v189 = vunpack.c.l.b16 %v45
  %v190 = vunpack.c.l.b16 %v46
  %v191 = vunpack.c.l.b16 %v47
  %v192 = vunpack.c.l.b16 %v48
  %v193 = vunpack.c.l.b16 %v49
  %v194 = vunpack.c.l.b16 %v50
  %v195 = vunpack.c.l.b16 %v51
  %v196 = vunpack.c.l.b16 %v52
  %v197 = vunpack.c.l.b16 %v53
  %v198 = vunpack.c.l.b16 %v54
  %v199 = vunpack.c.l.b16 %v55
  %v200 = vunpack.c.l.b16 %v56
  %v201 = vunpack.c.l.b16 %v57
  %v202 = vunpack.c.l.b16 %v58
  %v203 = vunpack.c.l.b16 %v59
  %v204 = vunpack.c.l.b16 %v60
  %v205 = vunpack.c.l.b16 %v61
  %v206 = vunpack.c.l.b16 %v62
  %v207 = vunpack.c.l.b16 %v63
  %v208 = vunpack.c.l.b16 %v64
  %v209 = vunpack.c.l.b16 %v65
  %v210 = vunpack.c.l.b16 %v66
  %v211 = vunpack.c.l.b16 %v67
  %v212 = vunpack.c.l.b16 %v68
  %v213 = vunpack.c.l.b16 %v69
  %v214 = vunpack.c.l.b16 %v70
  %v215 = vunpack.c.l.b16 %v71
  %v216 = vunpack.c.l.b16 %v72
  %v217 = vunpack.c.l.b16 %v73
  %v218 = vunpack.c.l.b16 %v74
  %v219 = vunpack.c.l.b16 %v75
  %v220 = vunpack.c.l.b16 %v76
  %v221 = vunpack.c.l.b16 %v77
  %v222 = vunpack.c.l.b16 %v78
  %v223 = vunpack.c.l.b16 %v79
  %v224 = vunpack.c.l.b16 %v80
  %v225 = vpack.c.b16 %v162, %v161
  %v226 = vpack.c.b16 %v164, %v163
  %v227 = vpack.c.b16 %v166, %v165
  %v228 = vpack.c.b16 %v168, %v167
  %v229 = vpack.c.b16 %v170, %v169
  %v230 = vpack.c.b16 %v172, %v171
  %v231 = vpack.c.b16 %v174, %v173
  %v232 = vpack.c.b16 %v176, %v175
  %v233 = vpack.c.b16 %v178, %v177
  %v234 = vpack.c.b16 %v180, %v179
  %v235 = vpack.c.b16 %v182, %v181
  %v236 = vpack.c.b16 %v184, %v183
  %v237 = vpack.c.b16 %v186, %v185
  %v238 = vpack.c.b16 %v188, %v187
  %v239 = vpack.c.b16 %v190, %v189
  %v240 = vpack.c.b16 %v192, %v191
  %v241 = vpack.c.b16 %v194, %v193
  %v242 = vpack.c.b16 %v196, %v195
  %v243 = vpack.c.b16 %v198, %v197
  %v244 = vpack.c.b16 %v200, %v199
  %v245 = vpack.c.b16 %v202, %v201
  %v246 = vpack.c.b16 %v204, %v203
  %v247 = vpack.c.b16 %v206, %v205
  %v248 = vpack.c.b16 %v208, %v207
  %v249 = vpack.c.b16 %v210, %v209
  %v250 = vpack.c.b16 %v212, %v211
  %v251 = vpack.c.b16 %v214, %v213
  %v252 = vpack.c.b16 %v216, %v215
  %v253 = vpack.c.b16 %v218, %v217
  %v254 = vpack.c.b16 %v220, %v219
  %v255 = vpack.c.b16 %v222, %v221
  %v256 = vpack.c.b16 %v224, %v223
  %v305 = vunpack.c.l.b16 %v81
  %v306 = vunpack.c.h.b16 %v81
  %v307 = vunpack.c.l.b16 %v82
  %v308 = vunpack.c.h.b16 %v82
  %v309 = vunpack.c.l.b16 %v83
  %v310 = vunpack.c.h.b16 %v83
  %v311 = vunpack.c.l.b16 %v84
  %v312 = vunpack.c.h.b16 %v84
  %v313 = vunpack.c.l.b16 %v85
  %v314 = vunpack.c.h.b16 %v85
  %v315 = vunpack.c.l.b16 %v86
  %v316 = vunpack.c.h.b16 %v86
  %v317 = vunpack.c.l.b16 %v87
  %v318 = vunpack.c.h.b16 %v87
  %v319 = vunpack.c.l.b16 %v88
  %v320 = vunpack.c.h.b16 %v88
  %v321 = vunpack.c.l.b16 %v89
  %v322 = vunpack.c.h.b16 %v89
  %v323 = vunpack.c.l.b16 %v90
  %v324 = vunpack.c.h.b16 %v90
  %v325 = vunpack.c.l.b16 %v91
  %v326 = vunpack.c.h.b16 %v91
  %v327 = vunpack.c.l.b16 %v92
  %v328 = vunpack.c.h.b16 %v92
  %v329 = vunpack.c.l.b16 %v93
  %v330 = vunpack.c.h.b16 %v93
  %v331 = vunpack.c.l.b16 %v94
  %v332 = vunpack.c.h.b16 %v94
  %v333 = vunpack.c.l.b16 %v95
  %v334 = vunpack.c.h.b16 %v95
  %v335 = vunpack.c.l.b16 %v96
  %v336 = vunpack.c.h.b16 %v96
  %v337 = vpack.c.b16 %v307, %v305
  %v338 = vpack.c.b16 %v308, %v306
  %v339 = vpack.c.b16 %v311, %v309
  %v340 = vpack.c.b16 %v312, %v310
  %v341 = vpack.c.b16 %v315, %v313
  %v342 = vpack.c.b16 %v316, %v314
  %v343 = vpack.c.b16 %v319, %v317
  %v344 = vpack.c.b16 %v320, %v318
  %v345 = vpack.c.b16 %v323, %v321
  %v346 = vpack.c.b16 %v324, %v322
  %v347 = vpack.c.b16 %v327, %v325
  %v348 = vpack.c.b16 %v328, %v326
  %v349 = vpack.c.b16 %v331, %v329
  %v350 = vpack.c.b16 %v332, %v330
  %v351 = vpack.c.b16 %v335, %v333
  %v352 = vpack.c.b16 %v336, %v334
  %369 = vmatpush.bf16.msra.mxu0 %v351
  %370 = vmatpush.bf16.msra.mxu0 %v349
  %371 = vmatpush.bf16.msra.mxu0 %v347
  %372 = vmatpush.bf16.msra.mxu0 %v345
  %373 = vmatpush.bf16.msra.mxu0 %v343
  %374 = vmatpush.bf16.msra.mxu0 %v341
  %375 = vmatpush.bf16.msra.mxu0 %v339
  %376 = vmatpush.bf16.msra.mxu0 %v337
  %377 = vmatmul.bf16.gmra.mxu0 %v225
  %v378 = vpop.f32.mrf.mxu0
  %v379 = vadd.f32 0.0, %v378
  %v380 = vpop.f32.mrf.mxu0
  %v381 = vadd.f32 0.0, %v380
  %382 = vmatmul.bf16.gmra.mxu0 %v226
  %v383 = vpop.f32.mrf.mxu0
  %v384 = vadd.f32 0.0, %v383
  %v385 = vpop.f32.mrf.mxu0
  %v386 = vadd.f32 0.0, %v385
  %387 = vmatmul.bf16.gmra.mxu0 %v227
  %v388 = vpop.f32.mrf.mxu0
  %v389 = vadd.f32 0.0, %v388
  %v390 = vpop.f32.mrf.mxu0
  %v391 = vadd.f32 0.0, %v390
  %392 = vmatmul.bf16.gmra.mxu0 %v228
  %v393 = vpop.f32.mrf.mxu0
  %v394 = vadd.f32 0.0, %v393
  %v395 = vpop.f32.mrf.mxu0
  %v396 = vadd.f32 0.0, %v395
  %397 = vmatmul.bf16.gmra.mxu0 %v229
  %v398 = vpop.f32.mrf.mxu0
  %v399 = vadd.f32 0.0, %v398
  %v400 = vpop.f32.mrf.mxu0
  %v401 = vadd.f32 0.0, %v400
  %402 = vmatmul.bf16.gmra.mxu0 %v230
  %v403 = vpop.f32.mrf.mxu0
  %v404 = vadd.f32 0.0, %v403
  %v405 = vpop.f32.mrf.mxu0
  %v406 = vadd.f32 0.0, %v405
  %407 = vmatmul.bf16.gmra.mxu0 %v231
  %v408 = vpop.f32.mrf.mxu0
  %v409 = vadd.f32 0.0, %v408
  %v410 = vpop.f32.mrf.mxu0
  %v411 = vadd.f32 0.0, %v410
  %412 = vmatmul.bf16.gmra.mxu0 %v232
  %v413 = vpop.f32.mrf.mxu0
  %v414 = vadd.f32 0.0, %v413
  %v415 = vpop.f32.mrf.mxu0
  %v416 = vadd.f32 0.0, %v415
  %417 = vmatmul.bf16.gmra.mxu0 %v233
  %v418 = vpop.f32.mrf.mxu0
  %v419 = vadd.f32 0.0, %v418
  %v420 = vpop.f32.mrf.mxu0
  %v421 = vadd.f32 0.0, %v420
  %422 = vmatmul.bf16.gmra.mxu0 %v234
  %v423 = vpop.f32.mrf.mxu0
  %v424 = vadd.f32 0.0, %v423
  %v425 = vpop.f32.mrf.mxu0
  %v426 = vadd.f32 0.0, %v425
  %427 = vmatmul.bf16.gmra.mxu0 %v235
  %v428 = vpop.f32.mrf.mxu0
  %v429 = vadd.f32 0.0, %v428
  %v430 = vpop.f32.mrf.mxu0
  %v431 = vadd.f32 0.0, %v430
  %432 = vmatmul.bf16.gmra.mxu0 %v236
  %v433 = vpop.f32.mrf.mxu0
  %v434 = vadd.f32 0.0, %v433
  %v435 = vpop.f32.mrf.mxu0
  %v436 = vadd.f32 0.0, %v435
  %437 = vmatmul.bf16.gmra.mxu0 %v237
  %v438 = vpop.f32.mrf.mxu0
  %v439 = vadd.f32 0.0, %v438
  %v440 = vpop.f32.mrf.mxu0
  %v441 = vadd.f32 0.0, %v440
  %442 = vmatmul.bf16.gmra.mxu0 %v238
  %v443 = vpop.f32.mrf.mxu0
  %v444 = vadd.f32 0.0, %v443
  %v445 = vpop.f32.mrf.mxu0
  %v446 = vadd.f32 0.0, %v445
  %447 = vmatmul.bf16.gmra.mxu0 %v239
  %v448 = vpop.f32.mrf.mxu0
  %v449 = vadd.f32 0.0, %v448
  %v450 = vpop.f32.mrf.mxu0
  %v451 = vadd.f32 0.0, %v450
  %452 = vmatmul.bf16.gmra.mxu0 %v240
  %v453 = vpop.f32.mrf.mxu0
  %v454 = vadd.f32 0.0, %v453
  %v455 = vpop.f32.mrf.mxu0
  %v456 = vadd.f32 0.0, %v455
  %457 = vmatmul.bf16.gmra.mxu0 %v241
  %v458 = vpop.f32.mrf.mxu0
  %v459 = vadd.f32 0.0, %v458
  %v460 = vpop.f32.mrf.mxu0
  %v461 = vadd.f32 0.0, %v460
  %462 = vmatmul.bf16.gmra.mxu0 %v242
  %v463 = vpop.f32.mrf.mxu0
  %v464 = vadd.f32 0.0, %v463
  %v465 = vpop.f32.mrf.mxu0
  %v466 = vadd.f32 0.0, %v465
  %467 = vmatmul.bf16.gmra.mxu0 %v243
  %v468 = vpop.f32.mrf.mxu0
  %v469 = vadd.f32 0.0, %v468
  %v470 = vpop.f32.mrf.mxu0
  %v471 = vadd.f32 0.0, %v470
  %472 = vmatmul.bf16.gmra.mxu0 %v244
  %v473 = vpop.f32.mrf.mxu0
  %v474 = vadd.f32 0.0, %v473
  %v475 = vpop.f32.mrf.mxu0
  %v476 = vadd.f32 0.0, %v475
  %477 = vmatmul.bf16.gmra.mxu0 %v245
  %v478 = vpop.f32.mrf.mxu0
  %v479 = vadd.f32 0.0, %v478
  %v480 = vpop.f32.mrf.mxu0
  %v481 = vadd.f32 0.0, %v480
  %482 = vmatmul.bf16.gmra.mxu0 %v246
  %v483 = vpop.f32.mrf.mxu0
  %v484 = vadd.f32 0.0, %v483
  %v485 = vpop.f32.mrf.mxu0
  %v486 = vadd.f32 0.0, %v485
  %487 = vmatmul.bf16.gmra.mxu0 %v247
  %v488 = vpop.f32.mrf.mxu0
  %v489 = vadd.f32 0.0, %v488
  %v490 = vpop.f32.mrf.mxu0
  %v491 = vadd.f32 0.0, %v490
  %492 = vmatmul.bf16.gmra.mxu0 %v248
  %v493 = vpop.f32.mrf.mxu0
  %v494 = vadd.f32 0.0, %v493
  %v495 = vpop.f32.mrf.mxu0
  %v496 = vadd.f32 0.0, %v495
  %497 = vmatmul.bf16.gmra.mxu0 %v249
  %v498 = vpop.f32.mrf.mxu0
  %v499 = vadd.f32 0.0, %v498
  %v500 = vpop.f32.mrf.mxu0
  %v501 = vadd.f32 0.0, %v500
  %502 = vmatmul.bf16.gmra.mxu0 %v250
  %v503 = vpop.f32.mrf.mxu0
  %v504 = vadd.f32 0.0, %v503
  %v505 = vpop.f32.mrf.mxu0
  %v506 = vadd.f32 0.0, %v505
  %507 = vmatmul.bf16.gmra.mxu0 %v251
  %v508 = vpop.f32.mrf.mxu0
  %v509 = vadd.f32 0.0, %v508
  %v510 = vpop.f32.mrf.mxu0
  %v511 = vadd.f32 0.0, %v510
  %512 = vmatmul.bf16.gmra.mxu0 %v252
  %v513 = vpop.f32.mrf.mxu0
  %v514 = vadd.f32 0.0, %v513
  %v515 = vpop.f32.mrf.mxu0
  %v516 = vadd.f32 0.0, %v515
  %517 = vmatmul.bf16.gmra.mxu0 %v253
  %v518 = vpop.f32.mrf.mxu0
  %v519 = vadd.f32 0.0, %v518
  %v520 = vpop.f32.mrf.mxu0
  %v521 = vadd.f32 0.0, %v520
  %522 = vmatmul.bf16.gmra.mxu0 %v254
  %v523 = vpop.f32.mrf.mxu0
  %v524 = vadd.f32 0.0, %v523
  %v525 = vpop.f32.mrf.mxu0
  %v526 = vadd.f32 0.0, %v525
  %527 = vmatmul.bf16.gmra.mxu0 %v255
  %v528 = vpop.f32.mrf.mxu0
  %v529 = vadd.f32 0.0, %v528
  %v530 = vpop.f32.mrf.mxu0
  %v531 = vadd.f32 0.0, %v530
  %532 = vmatmul.bf16.gmra.mxu0 %v256
  %v533 = vpop.f32.mrf.mxu0
  %v534 = vadd.f32 0.0, %v533
  %v535 = vpop.f32.mrf.mxu0
  %v536 = vadd.f32 0.0, %v535
  %537 = vdwg.mxu0
  %538 = vmatpush.bf16.msra.mxu0 %v352
  %539 = vmatpush.bf16.msra.mxu0 %v350
  %540 = vmatpush.bf16.msra.mxu0 %v348
  %541 = vmatpush.bf16.msra.mxu0 %v346
  %542 = vmatpush.bf16.msra.mxu0 %v344
  %543 = vmatpush.bf16.msra.mxu0 %v342
  %544 = vmatpush.bf16.msra.mxu0 %v340
  %545 = vmatpush.bf16.msra.mxu0 %v338
  %546 = vmatmul.bf16.gmra.mxu0 %v225
  %v547 = vpop.f32.mrf.mxu0
  %v548 = vadd.f32 0.0, %v547
  %v549 = vpop.f32.mrf.mxu0
  %v550 = vadd.f32 0.0, %v549
  %551 = vmatmul.bf16.gmra.mxu0 %v226
  %v552 = vpop.f32.mrf.mxu0
  %v553 = vadd.f32 0.0, %v552
  %v554 = vpop.f32.mrf.mxu0
  %v555 = vadd.f32 0.0, %v554
  %556 = vmatmul.bf16.gmra.mxu0 %v227
  %v557 = vpop.f32.mrf.mxu0
  %v558 = vadd.f32 0.0, %v557
  %v559 = vpop.f32.mrf.mxu0
  %v560 = vadd.f32 0.0, %v559
  %561 = vmatmul.bf16.gmra.mxu0 %v228
  %v562 = vpop.f32.mrf.mxu0
  %v563 = vadd.f32 0.0, %v562
  %v564 = vpop.f32.mrf.mxu0
  %v565 = vadd.f32 0.0, %v564
  %566 = vmatmul.bf16.gmra.mxu0 %v229
  %v567 = vpop.f32.mrf.mxu0
  %v568 = vadd.f32 0.0, %v567
  %v569 = vpop.f32.mrf.mxu0
  %v570 = vadd.f32 0.0, %v569
  %571 = vmatmul.bf16.gmra.mxu0 %v230
  %v572 = vpop.f32.mrf.mxu0
  %v573 = vadd.f32 0.0, %v572
  %v574 = vpop.f32.mrf.mxu0
  %v575 = vadd.f32 0.0, %v574
  %576 = vmatmul.bf16.gmra.mxu0 %v231
  %v577 = vpop.f32.mrf.mxu0
  %v578 = vadd.f32 0.0, %v577
  %v579 = vpop.f32.mrf.mxu0
  %v580 = vadd.f32 0.0, %v579
  %581 = vmatmul.bf16.gmra.mxu0 %v232
  %v582 = vpop.f32.mrf.mxu0
  %v583 = vadd.f32 0.0, %v582
  %v584 = vpop.f32.mrf.mxu0
  %v585 = vadd.f32 0.0, %v584
  %586 = vmatmul.bf16.gmra.mxu0 %v233
  %v587 = vpop.f32.mrf.mxu0
  %v588 = vadd.f32 0.0, %v587
  %v589 = vpop.f32.mrf.mxu0
  %v590 = vadd.f32 0.0, %v589
  %591 = vmatmul.bf16.gmra.mxu0 %v234
  %v592 = vpop.f32.mrf.mxu0
  %v593 = vadd.f32 0.0, %v592
  %v594 = vpop.f32.mrf.mxu0
  %v595 = vadd.f32 0.0, %v594
  %596 = vmatmul.bf16.gmra.mxu0 %v235
  %v597 = vpop.f32.mrf.mxu0
  %v598 = vadd.f32 0.0, %v597
  %v599 = vpop.f32.mrf.mxu0
  %v600 = vadd.f32 0.0, %v599
  %601 = vmatmul.bf16.gmra.mxu0 %v236
  %v602 = vpop.f32.mrf.mxu0
  %v603 = vadd.f32 0.0, %v602
  %v604 = vpop.f32.mrf.mxu0
  %v605 = vadd.f32 0.0, %v604
  %606 = vmatmul.bf16.gmra.mxu0 %v237
  %v607 = vpop.f32.mrf.mxu0
  %v608 = vadd.f32 0.0, %v607
  %v609 = vpop.f32.mrf.mxu0
  %v610 = vadd.f32 0.0, %v609
  %611 = vmatmul.bf16.gmra.mxu0 %v238
  %v612 = vpop.f32.mrf.mxu0
  %v613 = vadd.f32 0.0, %v612
  %v614 = vpop.f32.mrf.mxu0
  %v615 = vadd.f32 0.0, %v614
  %616 = vmatmul.bf16.gmra.mxu0 %v239
  %v617 = vpop.f32.mrf.mxu0
  %v618 = vadd.f32 0.0, %v617
  %v619 = vpop.f32.mrf.mxu0
  %v620 = vadd.f32 0.0, %v619
  %621 = vmatmul.bf16.gmra.mxu0 %v240
  %v622 = vpop.f32.mrf.mxu0
  %v623 = vadd.f32 0.0, %v622
  %v624 = vpop.f32.mrf.mxu0
  %v625 = vadd.f32 0.0, %v624
  %626 = vmatmul.bf16.gmra.mxu0 %v241
  %v627 = vpop.f32.mrf.mxu0
  %v628 = vadd.f32 0.0, %v627
  %v629 = vpop.f32.mrf.mxu0
  %v630 = vadd.f32 0.0, %v629
  %631 = vmatmul.bf16.gmra.mxu0 %v242
  %v632 = vpop.f32.mrf.mxu0
  %v633 = vadd.f32 0.0, %v632
  %v634 = vpop.f32.mrf.mxu0
  %v635 = vadd.f32 0.0, %v634
  %636 = vmatmul.bf16.gmra.mxu0 %v243
  %v637 = vpop.f32.mrf.mxu0
  %v638 = vadd.f32 0.0, %v637
  %v639 = vpop.f32.mrf.mxu0
  %v640 = vadd.f32 0.0, %v639
  %641 = vmatmul.bf16.gmra.mxu0 %v244
  %v642 = vpop.f32.mrf.mxu0
  %v643 = vadd.f32 0.0, %v642
  %v644 = vpop.f32.mrf.mxu0
  %v645 = vadd.f32 0.0, %v644
  %646 = vmatmul.bf16.gmra.mxu0 %v245
  %v647 = vpop.f32.mrf.mxu0
  %v648 = vadd.f32 0.0, %v647
  %v649 = vpop.f32.mrf.mxu0
  %v650 = vadd.f32 0.0, %v649
  %651 = vmatmul.bf16.gmra.mxu0 %v246
  %v652 = vpop.f32.mrf.mxu0
  %v653 = vadd.f32 0.0, %v652
  %v654 = vpop.f32.mrf.mxu0
  %v655 = vadd.f32 0.0, %v654
  %656 = vmatmul.bf16.gmra.mxu0 %v247
  %v657 = vpop.f32.mrf.mxu0
  %v658 = vadd.f32 0.0, %v657
  %v659 = vpop.f32.mrf.mxu0
  %v660 = vadd.f32 0.0, %v659
  %661 = vmatmul.bf16.gmra.mxu0 %v248
  %v662 = vpop.f32.mrf.mxu0
  %v663 = vadd.f32 0.0, %v662
  %v664 = vpop.f32.mrf.mxu0
  %v665 = vadd.f32 0.0, %v664
  %666 = vmatmul.bf16.gmra.mxu0 %v249
  %v667 = vpop.f32.mrf.mxu0
  %v668 = vadd.f32 0.0, %v667
  %v669 = vpop.f32.mrf.mxu0
  %v670 = vadd.f32 0.0, %v669
  %671 = vmatmul.bf16.gmra.mxu0 %v250
  %v672 = vpop.f32.mrf.mxu0
  %v673 = vadd.f32 0.0, %v672
  %v674 = vpop.f32.mrf.mxu0
  %v675 = vadd.f32 0.0, %v674
  %676 = vmatmul.bf16.gmra.mxu0 %v251
  %v677 = vpop.f32.mrf.mxu0
  %v678 = vadd.f32 0.0, %v677
  %v679 = vpop.f32.mrf.mxu0
  %v680 = vadd.f32 0.0, %v679
  %681 = vmatmul.bf16.gmra.mxu0 %v252
  %v682 = vpop.f32.mrf.mxu0
  %v683 = vadd.f32 0.0, %v682
  %v684 = vpop.f32.mrf.mxu0
  %v685 = vadd.f32 0.0, %v684
  %686 = vmatmul.bf16.gmra.mxu0 %v253
  %v687 = vpop.f32.mrf.mxu0
  %v688 = vadd.f32 0.0, %v687
  %v689 = vpop.f32.mrf.mxu0
  %v690 = vadd.f32 0.0, %v689
  %691 = vmatmul.bf16.gmra.mxu0 %v254
  %v692 = vpop.f32.mrf.mxu0
  %v693 = vadd.f32 0.0, %v692
  %v694 = vpop.f32.mrf.mxu0
  %v695 = vadd.f32 0.0, %v694
  %696 = vmatmul.bf16.gmra.mxu0 %v255
  %v697 = vpop.f32.mrf.mxu0
  %v698 = vadd.f32 0.0, %v697
  %v699 = vpop.f32.mrf.mxu0
  %v700 = vadd.f32 0.0, %v699
  %701 = vmatmul.bf16.gmra.mxu0 %v256
  %v702 = vpop.f32.mrf.mxu0
  %v703 = vadd.f32 0.0, %v702
  %v704 = vpop.f32.mrf.mxu0
  %v705 = vadd.f32 0.0, %v704
  %706 = vdwg.mxu0
  %v707 = vld [vmem:[%s1] sm:$0xf]
  %v708 = vld [vmem:[%s1 + $0x4] sm:$0xf]
  %v709 = vld [vmem:[%s1 + $0x8] sm:$0xf]
  %v710 = vld [vmem:[%s1 + $0xc] sm:$0xf]
  %v711 = vld [vmem:[%s1 + $0x10] sm:$0xf]
  %v712 = vld [vmem:[%s1 + $0x14] sm:$0xf]
  %v713 = vld [vmem:[%s1 + $0x18] sm:$0xf]
  %v714 = vld [vmem:[%s1 + $0x1c] sm:$0xf]
  %v715 = vld [vmem:[%s1 + $0x20] sm:$0xf]
  %v716 = vld [vmem:[%s1 + $0x24] sm:$0xf]
  %v717 = vld [vmem:[%s1 + $0x28] sm:$0xf]
  %v718 = vld [vmem:[%s1 + $0x2c] sm:$0xf]
  %v719 = vld [vmem:[%s1 + $0x30] sm:$0xf]
  %v720 = vld [vmem:[%s1 + $0x34] sm:$0xf]
  %v721 = vld [vmem:[%s1 + $0x38] sm:$0xf]
  %v722 = vld [vmem:[%s1 + $0x3c] sm:$0xf]
  %v723 = vld [vmem:[%s1 + $0x40] sm:$0xf]
  %v724 = vld [vmem:[%s1 + $0x44] sm:$0xf]
  %v725 = vld [vmem:[%s1 + $0x48] sm:$0xf]
  %v726 = vld [vmem:[%s1 + $0x4c] sm:$0xf]
  %v727 = vld [vmem:[%s1 + $0x50] sm:$0xf]
  %v728 = vld [vmem:[%s1 + $0x54] sm:$0xf]
  %v729 = vld [vmem:[%s1 + $0x58] sm:$0xf]
  %v730 = vld [vmem:[%s1 + $0x5c] sm:$0xf]
  %v731 = vld [vmem:[%s1 + $0x60] sm:$0xf]
  %v732 = vld [vmem:[%s1 + $0x64] sm:$0xf]
  %v733 = vld [vmem:[%s1 + $0x68] sm:$0xf]
  %v734 = vld [vmem:[%s1 + $0x6c] sm:$0xf]
  %v735 = vld [vmem:[%s1 + $0x70] sm:$0xf]
  %v736 = vld [vmem:[%s1 + $0x74] sm:$0xf]
  %v737 = vld [vmem:[%s1 + $0x78] sm:$0xf]
  %v738 = vld [vmem:[%s1 + $0x7c] sm:$0xf]
  %v739 = vld [vmem:[%s1 + $0x80] sm:$0xf]
  %v740 = vld [vmem:[%s1 + $0x84] sm:$0xf]
  %v741 = vld [vmem:[%s1 + $0x88] sm:$0xf]
  %v742 = vld [vmem:[%s1 + $0x8c] sm:$0xf]
  %v743 = vld [vmem:[%s1 + $0x90] sm:$0xf]
  %v744 = vld [vmem:[%s1 + $0x94] sm:$0xf]
  %v745 = vld [vmem:[%s1 + $0x98] sm:$0xf]
  %v746 = vld [vmem:[%s1 + $0x9c] sm:$0xf]
  %v747 = vld [vmem:[%s1 + $0xa0] sm:$0xf]
  %v748 = vld [vmem:[%s1 + $0xa4] sm:$0xf]
  %v749 = vld [vmem:[%s1 + $0xa8] sm:$0xf]
  %v750 = vld [vmem:[%s1 + $0xac] sm:$0xf]
  %v751 = vld [vmem:[%s1 + $0xb0] sm:$0xf]
  %v752 = vld [vmem:[%s1 + $0xb4] sm:$0xf]
  %v753 = vld [vmem:[%s1 + $0xb8] sm:$0xf]
  %v754 = vld [vmem:[%s1 + $0xbc] sm:$0xf]
  %v755 = vld [vmem:[%s1 + $0xc0] sm:$0xf]
  %v756 = vld [vmem:[%s1 + $0xc4] sm:$0xf]
  %v757 = vld [vmem:[%s1 + $0xc8] sm:$0xf]
  %v758 = vld [vmem:[%s1 + $0xcc] sm:$0xf]
  %v759 = vld [vmem:[%s1 + $0xd0] sm:$0xf]
  %v760 = vld [vmem:[%s1 + $0xd4] sm:$0xf]
  %v761 = vld [vmem:[%s1 + $0xd8] sm:$0xf]
  %v762 = vld [vmem:[%s1 + $0xdc] sm:$0xf]
  %v763 = vld [vmem:[%s1 + $0xe0] sm:$0xf]
  %v764 = vld [vmem:[%s1 + $0xe4] sm:$0xf]
  %v765 = vld [vmem:[%s1 + $0xe8] sm:$0xf]
  %v766 = vld [vmem:[%s1 + $0xec] sm:$0xf]
  %v767 = vld [vmem:[%s1 + $0xf0] sm:$0xf]
  %v768 = vld [vmem:[%s1 + $0xf4] sm:$0xf]
  %v769 = vld [vmem:[%s1 + $0xf8] sm:$0xf]
  %v770 = vld [vmem:[%s1 + $0xfc] sm:$0xf]
  %v771 = vunpack.c.l.bf16 %v707
  %v772 = vunpack.c.l.bf16 %v708
  %v773 = vunpack.c.l.bf16 %v709
  %v774 = vunpack.c.l.bf16 %v710
  %v775 = vunpack.c.l.bf16 %v711
  %v776 = vunpack.c.l.bf16 %v712
  %v777 = vunpack.c.l.bf16 %v713
  %v778 = vunpack.c.l.bf16 %v714
  %v779 = vunpack.c.l.bf16 %v715
  %v780 = vunpack.c.l.bf16 %v716
  %v781 = vunpack.c.l.bf16 %v717
  %v782 = vunpack.c.l.bf16 %v718
  %v783 = vunpack.c.l.bf16 %v719
  %v784 = vunpack.c.l.bf16 %v720
  %v785 = vunpack.c.l.bf16 %v721
  %v786 = vunpack.c.l.bf16 %v722
  %v787 = vunpack.c.l.bf16 %v723
  %v788 = vunpack.c.l.bf16 %v724
  %v789 = vunpack.c.l.bf16 %v725
  %v790 = vunpack.c.l.bf16 %v726
  %v791 = vunpack.c.l.bf16 %v727
  %v792 = vunpack.c.l.bf16 %v728
  %v793 = vunpack.c.l.bf16 %v729
  %v794 = vunpack.c.l.bf16 %v730
  %v795 = vunpack.c.l.bf16 %v731
  %v796 = vunpack.c.l.bf16 %v732
  %v797 = vunpack.c.l.bf16 %v733
  %v798 = vunpack.c.l.bf16 %v734
  %v799 = vunpack.c.l.bf16 %v735
  %v800 = vunpack.c.l.bf16 %v736
  %v801 = vunpack.c.l.bf16 %v737
  %v802 = vunpack.c.l.bf16 %v738
  %v803 = vunpack.c.l.bf16 %v739
  %v804 = vunpack.c.l.bf16 %v740
  %v805 = vunpack.c.l.bf16 %v741
  %v806 = vunpack.c.l.bf16 %v742
  %v807 = vunpack.c.l.bf16 %v743
  %v808 = vunpack.c.l.bf16 %v744
  %v809 = vunpack.c.l.bf16 %v745
  %v810 = vunpack.c.l.bf16 %v746
  %v811 = vunpack.c.l.bf16 %v747
  %v812 = vunpack.c.l.bf16 %v748
  %v813 = vunpack.c.l.bf16 %v749
  %v814 = vunpack.c.l.bf16 %v750
  %v815 = vunpack.c.l.bf16 %v751
  %v816 = vunpack.c.l.bf16 %v752
  %v817 = vunpack.c.l.bf16 %v753
  %v818 = vunpack.c.l.bf16 %v754
  %v819 = vunpack.c.l.bf16 %v755
  %v820 = vunpack.c.l.bf16 %v756
  %v821 = vunpack.c.l.bf16 %v757
  %v822 = vunpack.c.l.bf16 %v758
  %v823 = vunpack.c.l.bf16 %v759
  %v824 = vunpack.c.l.bf16 %v760
  %v825 = vunpack.c.l.bf16 %v761
  %v826 = vunpack.c.l.bf16 %v762
  %v827 = vunpack.c.l.bf16 %v763
  %v828 = vunpack.c.l.bf16 %v764
  %v829 = vunpack.c.l.bf16 %v765
  %v830 = vunpack.c.l.bf16 %v766
  %v831 = vunpack.c.l.bf16 %v767
  %v832 = vunpack.c.l.bf16 %v768
  %v833 = vunpack.c.l.bf16 %v769
  %v834 = vunpack.c.l.bf16 %v770
  %v835 = vld [vmem:[%s3] sm:$0x3]
  %v836 = vmul.f32 %v379, %v771
  %v837 = vmul.f32 %v381, %v772
  %v838 = vmul.f32 %v384, %v773
  %v839 = vmul.f32 %v386, %v774
  %v840 = vmul.f32 %v389, %v775
  %v841 = vmul.f32 %v391, %v776
  %v842 = vmul.f32 %v394, %v777
  %v843 = vmul.f32 %v396, %v778
  %v844 = vmul.f32 %v399, %v779
  %v845 = vmul.f32 %v401, %v780
  %v846 = vmul.f32 %v404, %v781
  %v847 = vmul.f32 %v406, %v782
  %v848 = vmul.f32 %v409, %v783
  %v849 = vmul.f32 %v411, %v784
  %v850 = vmul.f32 %v414, %v785
  %v851 = vmul.f32 %v416, %v786
  %v852 = vmul.f32 %v419, %v787
  %v853 = vmul.f32 %v421, %v788
  %v854 = vmul.f32 %v424, %v789
  %v855 = vmul.f32 %v426, %v790
  %v856 = vmul.f32 %v429, %v791
  %v857 = vmul.f32 %v431, %v792
  %v858 = vmul.f32 %v434, %v793
  %v859 = vmul.f32 %v436, %v794
  %v860 = vmul.f32 %v439, %v795
  %v861 = vmul.f32 %v441, %v796
  %v862 = vmul.f32 %v444, %v797
  %v863 = vmul.f32 %v446, %v798
  %v864 = vmul.f32 %v449, %v799
  %v865 = vmul.f32 %v451, %v800
  %v866 = vmul.f32 %v454, %v801
  %v867 = vmul.f32 %v456, %v802
  %v868 = vmul.f32 %v459, %v803
  %v869 = vmul.f32 %v461, %v804
  %v870 = vmul.f32 %v464, %v805
  %v871 = vmul.f32 %v466, %v806
  %v872 = vmul.f32 %v469, %v807
  %v873 = vmul.f32 %v471, %v808
  %v874 = vmul.f32 %v474, %v809
  %v875 = vmul.f32 %v476, %v810
  %v876 = vmul.f32 %v479, %v811
  %v877 = vmul.f32 %v481, %v812
  %v878 = vmul.f32 %v484, %v813
  %v879 = vmul.f32 %v486, %v814
  %v880 = vmul.f32 %v489, %v815
  %v881 = vmul.f32 %v491, %v816
  %v882 = vmul.f32 %v494, %v817
  %v883 = vmul.f32 %v496, %v818
  %v884 = vmul.f32 %v499, %v819
  %v885 = vmul.f32 %v501, %v820
  %v886 = vmul.f32 %v504, %v821
  %v887 = vmul.f32 %v506, %v822
  %v888 = vmul.f32 %v509, %v823
  %v889 = vmul.f32 %v511, %v824
  %v890 = vmul.f32 %v514, %v825
  %v891 = vmul.f32 %v516, %v826
  %v892 = vmul.f32 %v519, %v827
  %v893 = vmul.f32 %v521, %v828
  %v894 = vmul.f32 %v524, %v829
  %v895 = vmul.f32 %v526, %v830
  %v896 = vmul.f32 %v529, %v831
  %v897 = vmul.f32 %v531, %v832
  %v898 = vmul.f32 %v534, %v833
  %v899 = vmul.f32 %v536, %v834
  %900 = vadd.xlane.f32.xlu0 %v836
  %v901 = vpop.xlane.xlu0 %900
  %902 = vadd.xlane.f32.xlu0 %v837
  %v903 = vpop.xlane.xlu0 %902
  %904 = vadd.xlane.f32.xlu0 %v838
  %v905 = vpop.xlane.xlu0 %904
  %906 = vadd.xlane.f32.xlu0 %v839
  %v907 = vpop.xlane.xlu0 %906
  %908 = vadd.xlane.f32.xlu0 %v840
  %v909 = vpop.xlane.xlu0 %908
  %910 = vadd.xlane.f32.xlu0 %v841
  %v911 = vpop.xlane.xlu0 %910
  %912 = vadd.xlane.f32.xlu0 %v842
  %v913 = vpop.xlane.xlu0 %912
  %914 = vadd.xlane.f32.xlu0 %v843
  %v915 = vpop.xlane.xlu0 %914
  %916 = vadd.xlane.f32.xlu0 %v844
  %v917 = vpop.xlane.xlu0 %916
  %918 = vadd.xlane.f32.xlu0 %v845
  %v919 = vpop.xlane.xlu0 %918
  %920 = vadd.xlane.f32.xlu0 %v846
  %v921 = vpop.xlane.xlu0 %920
  %922 = vadd.xlane.f32.xlu0 %v847
  %v923 = vpop.xlane.xlu0 %922
  %924 = vadd.xlane.f32.xlu0 %v848
  %v925 = vpop.xlane.xlu0 %924
  %926 = vadd.xlane.f32.xlu0 %v849
  %v927 = vpop.xlane.xlu0 %926
  %928 = vadd.xlane.f32.xlu0 %v850
  %v929 = vpop.xlane.xlu0 %928
  %930 = vadd.xlane.f32.xlu0 %v851
  %v931 = vpop.xlane.xlu0 %930
  %932 = vadd.xlane.f32.xlu0 %v852
  %v933 = vpop.xlane.xlu0 %932
  %934 = vadd.xlane.f32.xlu0 %v853
  %v935 = vpop.xlane.xlu0 %934
  %936 = vadd.xlane.f32.xlu0 %v854
  %v937 = vpop.xlane.xlu0 %936
  %938 = vadd.xlane.f32.xlu0 %v855
  %v939 = vpop.xlane.xlu0 %938
  %940 = vadd.xlane.f32.xlu0 %v856
  %v941 = vpop.xlane.xlu0 %940
  %942 = vadd.xlane.f32.xlu0 %v857
  %v943 = vpop.xlane.xlu0 %942
  %944 = vadd.xlane.f32.xlu0 %v858
  %v945 = vpop.xlane.xlu0 %944
  %946 = vadd.xlane.f32.xlu0 %v859
  %v947 = vpop.xlane.xlu0 %946
  %948 = vadd.xlane.f32.xlu0 %v860
  %v949 = vpop.xlane.xlu0 %948
  %950 = vadd.xlane.f32.xlu0 %v861
  %v951 = vpop.xlane.xlu0 %950
  %952 = vadd.xlane.f32.xlu0 %v862
  %v953 = vpop.xlane.xlu0 %952
  %954 = vadd.xlane.f32.xlu0 %v863
  %v955 = vpop.xlane.xlu0 %954
  %956 = vadd.xlane.f32.xlu0 %v864
  %v957 = vpop.xlane.xlu0 %956
  %958 = vadd.xlane.f32.xlu0 %v865
  %v959 = vpop.xlane.xlu0 %958
  %960 = vadd.xlane.f32.xlu0 %v866
  %v961 = vpop.xlane.xlu0 %960
  %962 = vadd.xlane.f32.xlu0 %v867
  %v963 = vpop.xlane.xlu0 %962
  %964 = vadd.xlane.f32.xlu0 %v868
  %v965 = vpop.xlane.xlu0 %964
  %966 = vadd.xlane.f32.xlu0 %v869
  %v967 = vpop.xlane.xlu0 %966
  %968 = vadd.xlane.f32.xlu0 %v870
  %v969 = vpop.xlane.xlu0 %968
  %970 = vadd.xlane.f32.xlu0 %v871
  %v971 = vpop.xlane.xlu0 %970
  %972 = vadd.xlane.f32.xlu0 %v872
  %v973 = vpop.xlane.xlu0 %972
  %974 = vadd.xlane.f32.xlu0 %v873
  %v975 = vpop.xlane.xlu0 %974
  %976 = vadd.xlane.f32.xlu0 %v874
  %v977 = vpop.xlane.xlu0 %976
  %978 = vadd.xlane.f32.xlu0 %v875
  %v979 = vpop.xlane.xlu0 %978
  %980 = vadd.xlane.f32.xlu0 %v876
  %v981 = vpop.xlane.xlu0 %980
  %982 = vadd.xlane.f32.xlu0 %v877
  %v983 = vpop.xlane.xlu0 %982
  %984 = vadd.xlane.f32.xlu0 %v878
  %v985 = vpop.xlane.xlu0 %984
  %986 = vadd.xlane.f32.xlu0 %v879
  %v987 = vpop.xlane.xlu0 %986
  %988 = vadd.xlane.f32.xlu0 %v880
  %v989 = vpop.xlane.xlu0 %988
  %990 = vadd.xlane.f32.xlu0 %v881
  %v991 = vpop.xlane.xlu0 %990
  %992 = vadd.xlane.f32.xlu0 %v882
  %v993 = vpop.xlane.xlu0 %992
  %994 = vadd.xlane.f32.xlu0 %v883
  %v995 = vpop.xlane.xlu0 %994
  %996 = vadd.xlane.f32.xlu0 %v884
  %v997 = vpop.xlane.xlu0 %996
  %998 = vadd.xlane.f32.xlu0 %v885
  %v999 = vpop.xlane.xlu0 %998
  %1000 = vadd.xlane.f32.xlu0 %v886
  %v1001 = vpop.xlane.xlu0 %1000
  %1002 = vadd.xlane.f32.xlu0 %v887
  %v1003 = vpop.xlane.xlu0 %1002
  %1004 = vadd.xlane.f32.xlu0 %v888
  %v1005 = vpop.xlane.xlu0 %1004
  %1006 = vadd.xlane.f32.xlu0 %v889
  %v1007 = vpop.xlane.xlu0 %1006
  %1008 = vadd.xlane.f32.xlu0 %v890
  %v1009 = vpop.xlane.xlu0 %1008
  %1010 = vadd.xlane.f32.xlu0 %v891
  %v1011 = vpop.xlane.xlu0 %1010
  %1012 = vadd.xlane.f32.xlu0 %v892
  %v1013 = vpop.xlane.xlu0 %1012
  %1014 = vadd.xlane.f32.xlu0 %v893
  %v1015 = vpop.xlane.xlu0 %1014
  %1016 = vadd.xlane.f32.xlu0 %v894
  %v1017 = vpop.xlane.xlu0 %1016
  %1018 = vadd.xlane.f32.xlu0 %v895
  %v1019 = vpop.xlane.xlu0 %1018
  %1020 = vadd.xlane.f32.xlu0 %v896
  %v1021 = vpop.xlane.xlu0 %1020
  %1022 = vadd.xlane.f32.xlu0 %v897
  %v1023 = vpop.xlane.xlu0 %1022
  %1024 = vadd.xlane.f32.xlu0 %v898
  %v1025 = vpop.xlane.xlu0 %1024
  %1026 = vadd.xlane.f32.xlu0 %v899
  %v1027 = vpop.xlane.xlu0 %1026
  %v1028 = vperm.slane %v835, 0
  %v1029 = vmul.f32 %v901, %v1028
  %v1030 = vmul.f32 %v903, %v1028
  %v1031 = vmul.f32 %v905, %v1028
  %v1032 = vmul.f32 %v907, %v1028
  %v1033 = vmul.f32 %v909, %v1028
  %v1034 = vmul.f32 %v911, %v1028
  %v1035 = vmul.f32 %v913, %v1028
  %v1036 = vmul.f32 %v915, %v1028
  %v1037 = vmul.f32 %v917, %v1028
  %v1038 = vmul.f32 %v919, %v1028
  %v1039 = vmul.f32 %v921, %v1028
  %v1040 = vmul.f32 %v923, %v1028
  %v1041 = vmul.f32 %v925, %v1028
  %v1042 = vmul.f32 %v927, %v1028
  %v1043 = vmul.f32 %v929, %v1028
  %v1044 = vmul.f32 %v931, %v1028
  %v1045 = vmul.f32 %v933, %v1028
  %v1046 = vmul.f32 %v935, %v1028
  %v1047 = vmul.f32 %v937, %v1028
  %v1048 = vmul.f32 %v939, %v1028
  %v1049 = vmul.f32 %v941, %v1028
  %v1050 = vmul.f32 %v943, %v1028
  %v1051 = vmul.f32 %v945, %v1028
  %v1052 = vmul.f32 %v947, %v1028
  %v1053 = vmul.f32 %v949, %v1028
  %v1054 = vmul.f32 %v951, %v1028
  %v1055 = vmul.f32 %v953, %v1028
  %v1056 = vmul.f32 %v955, %v1028
  %v1057 = vmul.f32 %v957, %v1028
  %v1058 = vmul.f32 %v959, %v1028
  %v1059 = vmul.f32 %v961, %v1028
  %v1060 = vmul.f32 %v963, %v1028
  %v1061 = vmul.f32 %v965, %v1028
  %v1062 = vmul.f32 %v967, %v1028
  %v1063 = vmul.f32 %v969, %v1028
  %v1064 = vmul.f32 %v971, %v1028
  %v1065 = vmul.f32 %v973, %v1028
  %v1066 = vmul.f32 %v975, %v1028
  %v1067 = vmul.f32 %v977, %v1028
  %v1068 = vmul.f32 %v979, %v1028
  %v1069 = vmul.f32 %v981, %v1028
  %v1070 = vmul.f32 %v983, %v1028
  %v1071 = vmul.f32 %v985, %v1028
  %v1072 = vmul.f32 %v987, %v1028
  %v1073 = vmul.f32 %v989, %v1028
  %v1074 = vmul.f32 %v991, %v1028
  %v1075 = vmul.f32 %v993, %v1028
  %v1076 = vmul.f32 %v995, %v1028
  %v1077 = vmul.f32 %v997, %v1028
  %v1078 = vmul.f32 %v999, %v1028
  %v1079 = vmul.f32 %v1001, %v1028
  %v1080 = vmul.f32 %v1003, %v1028
  %v1081 = vmul.f32 %v1005, %v1028
  %v1082 = vmul.f32 %v1007, %v1028
  %v1083 = vmul.f32 %v1009, %v1028
  %v1084 = vmul.f32 %v1011, %v1028
  %v1085 = vmul.f32 %v1013, %v1028
  %v1086 = vmul.f32 %v1015, %v1028
  %v1087 = vmul.f32 %v1017, %v1028
  %v1088 = vmul.f32 %v1019, %v1028
  %v1089 = vmul.f32 %v1021, %v1028
  %v1090 = vmul.f32 %v1023, %v1028
  %v1091 = vmul.f32 %v1025, %v1028
  %v1092 = vmul.f32 %v1027, %v1028
  %v1093 = vadd.f32 %v1029, 0.0
  %v1094 = vadd.f32 %v1030, 0.0
  %v1095 = vadd.f32 %v1031, 0.0
  %v1096 = vadd.f32 %v1032, 0.0
  %v1097 = vadd.f32 %v1033, 0.0
  %v1098 = vadd.f32 %v1034, 0.0
  %v1099 = vadd.f32 %v1035, 0.0
  %v1100 = vadd.f32 %v1036, 0.0
  %v1101 = vadd.f32 %v1037, 0.0
  %v1102 = vadd.f32 %v1038, 0.0
  %v1103 = vadd.f32 %v1039, 0.0
  %v1104 = vadd.f32 %v1040, 0.0
  %v1105 = vadd.f32 %v1041, 0.0
  %v1106 = vadd.f32 %v1042, 0.0
  %v1107 = vadd.f32 %v1043, 0.0
  %v1108 = vadd.f32 %v1044, 0.0
  %v1109 = vadd.f32 %v1045, 0.0
  %v1110 = vadd.f32 %v1046, 0.0
  %v1111 = vadd.f32 %v1047, 0.0
  %v1112 = vadd.f32 %v1048, 0.0
  %v1113 = vadd.f32 %v1049, 0.0
  %v1114 = vadd.f32 %v1050, 0.0
  %v1115 = vadd.f32 %v1051, 0.0
  %v1116 = vadd.f32 %v1052, 0.0
  %v1117 = vadd.f32 %v1053, 0.0
  %v1118 = vadd.f32 %v1054, 0.0
  %v1119 = vadd.f32 %v1055, 0.0
  %v1120 = vadd.f32 %v1056, 0.0
  %v1121 = vadd.f32 %v1057, 0.0
  %v1122 = vadd.f32 %v1058, 0.0
  %v1123 = vadd.f32 %v1059, 0.0
  %v1124 = vadd.f32 %v1060, 0.0
  %v1125 = vadd.f32 %v1061, 0.0
  %v1126 = vadd.f32 %v1062, 0.0
  %v1127 = vadd.f32 %v1063, 0.0
  %v1128 = vadd.f32 %v1064, 0.0
  %v1129 = vadd.f32 %v1065, 0.0
  %v1130 = vadd.f32 %v1066, 0.0
  %v1131 = vadd.f32 %v1067, 0.0
  %v1132 = vadd.f32 %v1068, 0.0
  %v1133 = vadd.f32 %v1069, 0.0
  %v1134 = vadd.f32 %v1070, 0.0
  %v1135 = vadd.f32 %v1071, 0.0
  %v1136 = vadd.f32 %v1072, 0.0
  %v1137 = vadd.f32 %v1073, 0.0
  %v1138 = vadd.f32 %v1074, 0.0
  %v1139 = vadd.f32 %v1075, 0.0
  %v1140 = vadd.f32 %v1076, 0.0
  %v1141 = vadd.f32 %v1077, 0.0
  %v1142 = vadd.f32 %v1078, 0.0
  %v1143 = vadd.f32 %v1079, 0.0
  %v1144 = vadd.f32 %v1080, 0.0
  %v1145 = vadd.f32 %v1081, 0.0
  %v1146 = vadd.f32 %v1082, 0.0
  %v1147 = vadd.f32 %v1083, 0.0
  %v1148 = vadd.f32 %v1084, 0.0
  %v1149 = vadd.f32 %v1085, 0.0
  %v1150 = vadd.f32 %v1086, 0.0
  %v1151 = vadd.f32 %v1087, 0.0
  %v1152 = vadd.f32 %v1088, 0.0
  %v1153 = vadd.f32 %v1089, 0.0
  %v1154 = vadd.f32 %v1090, 0.0
  %v1155 = vadd.f32 %v1091, 0.0
  %v1156 = vadd.f32 %v1092, 0.0
  %v1157 = vmul.f32 %v548, %v771
  %v1158 = vmul.f32 %v550, %v772
  %v1159 = vmul.f32 %v553, %v773
  %v1160 = vmul.f32 %v555, %v774
  %v1161 = vmul.f32 %v558, %v775
  %v1162 = vmul.f32 %v560, %v776
  %v1163 = vmul.f32 %v563, %v777
  %v1164 = vmul.f32 %v565, %v778
  %v1165 = vmul.f32 %v568, %v779
  %v1166 = vmul.f32 %v570, %v780
  %v1167 = vmul.f32 %v573, %v781
  %v1168 = vmul.f32 %v575, %v782
  %v1169 = vmul.f32 %v578, %v783
  %v1170 = vmul.f32 %v580, %v784
  %v1171 = vmul.f32 %v583, %v785
  %v1172 = vmul.f32 %v585, %v786
  %v1173 = vmul.f32 %v588, %v787
  %v1174 = vmul.f32 %v590, %v788
  %v1175 = vmul.f32 %v593, %v789
  %v1176 = vmul.f32 %v595, %v790
  %v1177 = vmul.f32 %v598, %v791
  %v1178 = vmul.f32 %v600, %v792
  %v1179 = vmul.f32 %v603, %v793
  %v1180 = vmul.f32 %v605, %v794
  %v1181 = vmul.f32 %v608, %v795
  %v1182 = vmul.f32 %v610, %v796
  %v1183 = vmul.f32 %v613, %v797
  %v1184 = vmul.f32 %v615, %v798
  %v1185 = vmul.f32 %v618, %v799
  %v1186 = vmul.f32 %v620, %v800
  %v1187 = vmul.f32 %v623, %v801
  %v1188 = vmul.f32 %v625, %v802
  %v1189 = vmul.f32 %v628, %v803
  %v1190 = vmul.f32 %v630, %v804
  %v1191 = vmul.f32 %v633, %v805
  %v1192 = vmul.f32 %v635, %v806
  %v1193 = vmul.f32 %v638, %v807
  %v1194 = vmul.f32 %v640, %v808
  %v1195 = vmul.f32 %v643, %v809
  %v1196 = vmul.f32 %v645, %v810
  %v1197 = vmul.f32 %v648, %v811
  %v1198 = vmul.f32 %v650, %v812
  %v1199 = vmul.f32 %v653, %v813
  %v1200 = vmul.f32 %v655, %v814
  %v1201 = vmul.f32 %v658, %v815
  %v1202 = vmul.f32 %v660, %v816
  %v1203 = vmul.f32 %v663, %v817
  %v1204 = vmul.f32 %v665, %v818
  %v1205 = vmul.f32 %v668, %v819
  %v1206 = vmul.f32 %v670, %v820
  %v1207 = vmul.f32 %v673, %v821
  %v1208 = vmul.f32 %v675, %v822
  %v1209 = vmul.f32 %v678, %v823
  %v1210 = vmul.f32 %v680, %v824
  %v1211 = vmul.f32 %v683, %v825
  %v1212 = vmul.f32 %v685, %v826
  %v1213 = vmul.f32 %v688, %v827
  %v1214 = vmul.f32 %v690, %v828
  %v1215 = vmul.f32 %v693, %v829
  %v1216 = vmul.f32 %v695, %v830
  %v1217 = vmul.f32 %v698, %v831
  %v1218 = vmul.f32 %v700, %v832
  %v1219 = vmul.f32 %v703, %v833
  %v1220 = vmul.f32 %v705, %v834
  %1221 = vadd.xlane.f32.xlu0 %v1157
  %v1222 = vpop.xlane.xlu0 %1221
  %1223 = vadd.xlane.f32.xlu0 %v1158
  %v1224 = vpop.xlane.xlu0 %1223
  %1225 = vadd.xlane.f32.xlu0 %v1159
  %v1226 = vpop.xlane.xlu0 %1225
  %1227 = vadd.xlane.f32.xlu0 %v1160
  %v1228 = vpop.xlane.xlu0 %1227
  %1229 = vadd.xlane.f32.xlu0 %v1161
  %v1230 = vpop.xlane.xlu0 %1229
  %1231 = vadd.xlane.f32.xlu0 %v1162
  %v1232 = vpop.xlane.xlu0 %1231
  %1233 = vadd.xlane.f32.xlu0 %v1163
  %v1234 = vpop.xlane.xlu0 %1233
  %1235 = vadd.xlane.f32.xlu0 %v1164
  %v1236 = vpop.xlane.xlu0 %1235
  %1237 = vadd.xlane.f32.xlu0 %v1165
  %v1238 = vpop.xlane.xlu0 %1237
  %1239 = vadd.xlane.f32.xlu0 %v1166
  %v1240 = vpop.xlane.xlu0 %1239
  %1241 = vadd.xlane.f32.xlu0 %v1167
  %v1242 = vpop.xlane.xlu0 %1241
  %1243 = vadd.xlane.f32.xlu0 %v1168
  %v1244 = vpop.xlane.xlu0 %1243
  %1245 = vadd.xlane.f32.xlu0 %v1169
  %v1246 = vpop.xlane.xlu0 %1245
  %1247 = vadd.xlane.f32.xlu0 %v1170
  %v1248 = vpop.xlane.xlu0 %1247
  %1249 = vadd.xlane.f32.xlu0 %v1171
  %v1250 = vpop.xlane.xlu0 %1249
  %1251 = vadd.xlane.f32.xlu0 %v1172
  %v1252 = vpop.xlane.xlu0 %1251
  %1253 = vadd.xlane.f32.xlu0 %v1173
  %v1254 = vpop.xlane.xlu0 %1253
  %1255 = vadd.xlane.f32.xlu0 %v1174
  %v1256 = vpop.xlane.xlu0 %1255
  %1257 = vadd.xlane.f32.xlu0 %v1175
  %v1258 = vpop.xlane.xlu0 %1257
  %1259 = vadd.xlane.f32.xlu0 %v1176
  %v1260 = vpop.xlane.xlu0 %1259
  %1261 = vadd.xlane.f32.xlu0 %v1177
  %v1262 = vpop.xlane.xlu0 %1261
  %1263 = vadd.xlane.f32.xlu0 %v1178
  %v1264 = vpop.xlane.xlu0 %1263
  %1265 = vadd.xlane.f32.xlu0 %v1179
  %v1266 = vpop.xlane.xlu0 %1265
  %1267 = vadd.xlane.f32.xlu0 %v1180
  %v1268 = vpop.xlane.xlu0 %1267
  %1269 = vadd.xlane.f32.xlu0 %v1181
  %v1270 = vpop.xlane.xlu0 %1269
  %1271 = vadd.xlane.f32.xlu0 %v1182
  %v1272 = vpop.xlane.xlu0 %1271
  %1273 = vadd.xlane.f32.xlu0 %v1183
  %v1274 = vpop.xlane.xlu0 %1273
  %1275 = vadd.xlane.f32.xlu0 %v1184
  %v1276 = vpop.xlane.xlu0 %1275
  %1277 = vadd.xlane.f32.xlu0 %v1185
  %v1278 = vpop.xlane.xlu0 %1277
  %1279 = vadd.xlane.f32.xlu0 %v1186
  %v1280 = vpop.xlane.xlu0 %1279
  %1281 = vadd.xlane.f32.xlu0 %v1187
  %v1282 = vpop.xlane.xlu0 %1281
  %1283 = vadd.xlane.f32.xlu0 %v1188
  %v1284 = vpop.xlane.xlu0 %1283
  %1285 = vadd.xlane.f32.xlu0 %v1189
  %v1286 = vpop.xlane.xlu0 %1285
  %1287 = vadd.xlane.f32.xlu0 %v1190
  %v1288 = vpop.xlane.xlu0 %1287
  %1289 = vadd.xlane.f32.xlu0 %v1191
  %v1290 = vpop.xlane.xlu0 %1289
  %1291 = vadd.xlane.f32.xlu0 %v1192
  %v1292 = vpop.xlane.xlu0 %1291
  %1293 = vadd.xlane.f32.xlu0 %v1193
  %v1294 = vpop.xlane.xlu0 %1293
  %1295 = vadd.xlane.f32.xlu0 %v1194
  %v1296 = vpop.xlane.xlu0 %1295
  %1297 = vadd.xlane.f32.xlu0 %v1195
  %v1298 = vpop.xlane.xlu0 %1297
  %1299 = vadd.xlane.f32.xlu0 %v1196
  %v1300 = vpop.xlane.xlu0 %1299
  %1301 = vadd.xlane.f32.xlu0 %v1197
  %v1302 = vpop.xlane.xlu0 %1301
  %1303 = vadd.xlane.f32.xlu0 %v1198
  %v1304 = vpop.xlane.xlu0 %1303
  %1305 = vadd.xlane.f32.xlu0 %v1199
  %v1306 = vpop.xlane.xlu0 %1305
  %1307 = vadd.xlane.f32.xlu0 %v1200
  %v1308 = vpop.xlane.xlu0 %1307
  %1309 = vadd.xlane.f32.xlu0 %v1201
  %v1310 = vpop.xlane.xlu0 %1309
  %1311 = vadd.xlane.f32.xlu0 %v1202
  %v1312 = vpop.xlane.xlu0 %1311
  %1313 = vadd.xlane.f32.xlu0 %v1203
  %v1314 = vpop.xlane.xlu0 %1313
  %1315 = vadd.xlane.f32.xlu0 %v1204
  %v1316 = vpop.xlane.xlu0 %1315
  %1317 = vadd.xlane.f32.xlu0 %v1205
  %v1318 = vpop.xlane.xlu0 %1317
  %1319 = vadd.xlane.f32.xlu0 %v1206
  %v1320 = vpop.xlane.xlu0 %1319
  %1321 = vadd.xlane.f32.xlu0 %v1207
  %v1322 = vpop.xlane.xlu0 %1321
  %1323 = vadd.xlane.f32.xlu0 %v1208
  %v1324 = vpop.xlane.xlu0 %1323
  %1325 = vadd.xlane.f32.xlu0 %v1209
  %v1326 = vpop.xlane.xlu0 %1325
  %1327 = vadd.xlane.f32.xlu0 %v1210
  %v1328 = vpop.xlane.xlu0 %1327
  %1329 = vadd.xlane.f32.xlu0 %v1211
  %v1330 = vpop.xlane.xlu0 %1329
  %1331 = vadd.xlane.f32.xlu0 %v1212
  %v1332 = vpop.xlane.xlu0 %1331
  %1333 = vadd.xlane.f32.xlu0 %v1213
  %v1334 = vpop.xlane.xlu0 %1333
  %1335 = vadd.xlane.f32.xlu0 %v1214
  %v1336 = vpop.xlane.xlu0 %1335
  %1337 = vadd.xlane.f32.xlu0 %v1215
  %v1338 = vpop.xlane.xlu0 %1337
  %1339 = vadd.xlane.f32.xlu0 %v1216
  %v1340 = vpop.xlane.xlu0 %1339
  %1341 = vadd.xlane.f32.xlu0 %v1217
  %v1342 = vpop.xlane.xlu0 %1341
  %1343 = vadd.xlane.f32.xlu0 %v1218
  %v1344 = vpop.xlane.xlu0 %1343
  %1345 = vadd.xlane.f32.xlu0 %v1219
  %v1346 = vpop.xlane.xlu0 %1345
  %1347 = vadd.xlane.f32.xlu0 %v1220
  %v1348 = vpop.xlane.xlu0 %1347
  %v1349 = vperm.slane %v835, 1
  %v1350 = vmul.f32 %v1222, %v1349
  %v1351 = vmul.f32 %v1224, %v1349
  %v1352 = vmul.f32 %v1226, %v1349
  %v1353 = vmul.f32 %v1228, %v1349
  %v1354 = vmul.f32 %v1230, %v1349
  %v1355 = vmul.f32 %v1232, %v1349
  %v1356 = vmul.f32 %v1234, %v1349
  %v1357 = vmul.f32 %v1236, %v1349
  %v1358 = vmul.f32 %v1238, %v1349
  %v1359 = vmul.f32 %v1240, %v1349
  %v1360 = vmul.f32 %v1242, %v1349
  %v1361 = vmul.f32 %v1244, %v1349
  %v1362 = vmul.f32 %v1246, %v1349
  %v1363 = vmul.f32 %v1248, %v1349
  %v1364 = vmul.f32 %v1250, %v1349
  %v1365 = vmul.f32 %v1252, %v1349
  %v1366 = vmul.f32 %v1254, %v1349
  %v1367 = vmul.f32 %v1256, %v1349
  %v1368 = vmul.f32 %v1258, %v1349
  %v1369 = vmul.f32 %v1260, %v1349
  %v1370 = vmul.f32 %v1262, %v1349
  %v1371 = vmul.f32 %v1264, %v1349
  %v1372 = vmul.f32 %v1266, %v1349
  %v1373 = vmul.f32 %v1268, %v1349
  %v1374 = vmul.f32 %v1270, %v1349
  %v1375 = vmul.f32 %v1272, %v1349
  %v1376 = vmul.f32 %v1274, %v1349
  %v1377 = vmul.f32 %v1276, %v1349
  %v1378 = vmul.f32 %v1278, %v1349
  %v1379 = vmul.f32 %v1280, %v1349
  %v1380 = vmul.f32 %v1282, %v1349
  %v1381 = vmul.f32 %v1284, %v1349
  %v1382 = vmul.f32 %v1286, %v1349
  %v1383 = vmul.f32 %v1288, %v1349
  %v1384 = vmul.f32 %v1290, %v1349
  %v1385 = vmul.f32 %v1292, %v1349
  %v1386 = vmul.f32 %v1294, %v1349
  %v1387 = vmul.f32 %v1296, %v1349
  %v1388 = vmul.f32 %v1298, %v1349
  %v1389 = vmul.f32 %v1300, %v1349
  %v1390 = vmul.f32 %v1302, %v1349
  %v1391 = vmul.f32 %v1304, %v1349
  %v1392 = vmul.f32 %v1306, %v1349
  %v1393 = vmul.f32 %v1308, %v1349
  %v1394 = vmul.f32 %v1310, %v1349
  %v1395 = vmul.f32 %v1312, %v1349
  %v1396 = vmul.f32 %v1314, %v1349
  %v1397 = vmul.f32 %v1316, %v1349
  %v1398 = vmul.f32 %v1318, %v1349
  %v1399 = vmul.f32 %v1320, %v1349
  %v1400 = vmul.f32 %v1322, %v1349
  %v1401 = vmul.f32 %v1324, %v1349
  %v1402 = vmul.f32 %v1326, %v1349
  %v1403 = vmul.f32 %v1328, %v1349
  %v1404 = vmul.f32 %v1330, %v1349
  %v1405 = vmul.f32 %v1332, %v1349
  %v1406 = vmul.f32 %v1334, %v1349
  %v1407 = vmul.f32 %v1336, %v1349
  %v1408 = vmul.f32 %v1338, %v1349
  %v1409 = vmul.f32 %v1340, %v1349
  %v1410 = vmul.f32 %v1342, %v1349
  %v1411 = vmul.f32 %v1344, %v1349
  %v1412 = vmul.f32 %v1346, %v1349
  %v1413 = vmul.f32 %v1348, %v1349
  %v1414 = vadd.f32 %v1093, %v1350
  %v1415 = vadd.f32 %v1094, %v1351
  %v1416 = vadd.f32 %v1095, %v1352
  %v1417 = vadd.f32 %v1096, %v1353
  %v1418 = vadd.f32 %v1097, %v1354
  %v1419 = vadd.f32 %v1098, %v1355
  %v1420 = vadd.f32 %v1099, %v1356
  %v1421 = vadd.f32 %v1100, %v1357
  %v1422 = vadd.f32 %v1101, %v1358
  %v1423 = vadd.f32 %v1102, %v1359
  %v1424 = vadd.f32 %v1103, %v1360
  %v1425 = vadd.f32 %v1104, %v1361
  %v1426 = vadd.f32 %v1105, %v1362
  %v1427 = vadd.f32 %v1106, %v1363
  %v1428 = vadd.f32 %v1107, %v1364
  %v1429 = vadd.f32 %v1108, %v1365
  %v1430 = vadd.f32 %v1109, %v1366
  %v1431 = vadd.f32 %v1110, %v1367
  %v1432 = vadd.f32 %v1111, %v1368
  %v1433 = vadd.f32 %v1112, %v1369
  %v1434 = vadd.f32 %v1113, %v1370
  %v1435 = vadd.f32 %v1114, %v1371
  %v1436 = vadd.f32 %v1115, %v1372
  %v1437 = vadd.f32 %v1116, %v1373
  %v1438 = vadd.f32 %v1117, %v1374
  %v1439 = vadd.f32 %v1118, %v1375
  %v1440 = vadd.f32 %v1119, %v1376
  %v1441 = vadd.f32 %v1120, %v1377
  %v1442 = vadd.f32 %v1121, %v1378
  %v1443 = vadd.f32 %v1122, %v1379
  %v1444 = vadd.f32 %v1123, %v1380
  %v1445 = vadd.f32 %v1124, %v1381
  %v1446 = vadd.f32 %v1125, %v1382
  %v1447 = vadd.f32 %v1126, %v1383
  %v1448 = vadd.f32 %v1127, %v1384
  %v1449 = vadd.f32 %v1128, %v1385
  %v1450 = vadd.f32 %v1129, %v1386
  %v1451 = vadd.f32 %v1130, %v1387
  %v1452 = vadd.f32 %v1131, %v1388
  %v1453 = vadd.f32 %v1132, %v1389
  %v1454 = vadd.f32 %v1133, %v1390
  %v1455 = vadd.f32 %v1134, %v1391
  %v1456 = vadd.f32 %v1135, %v1392
  %v1457 = vadd.f32 %v1136, %v1393
  %v1458 = vadd.f32 %v1137, %v1394
  %v1459 = vadd.f32 %v1138, %v1395
  %v1460 = vadd.f32 %v1139, %v1396
  %v1461 = vadd.f32 %v1140, %v1397
  %v1462 = vadd.f32 %v1141, %v1398
  %v1463 = vadd.f32 %v1142, %v1399
  %v1464 = vadd.f32 %v1143, %v1400
  %v1465 = vadd.f32 %v1144, %v1401
  %v1466 = vadd.f32 %v1145, %v1402
  %v1467 = vadd.f32 %v1146, %v1403
  %v1468 = vadd.f32 %v1147, %v1404
  %v1469 = vadd.f32 %v1148, %v1405
  %v1470 = vadd.f32 %v1149, %v1406
  %v1471 = vadd.f32 %v1150, %v1407
  %v1472 = vadd.f32 %v1151, %v1408
  %v1473 = vadd.f32 %v1152, %v1409
  %v1474 = vadd.f32 %v1153, %v1410
  %v1475 = vadd.f32 %v1154, %v1411
  %v1476 = vadd.f32 %v1155, %v1412
  %v1477 = vadd.f32 %v1156, %v1413
  %1478 = vst [vmem:[%s4] sm:$0xff] %v1414
  %1479 = vst [vmem:[%s4 + $0x8] sm:$0xff] %v1415
  %1480 = vst [vmem:[%s4 + $0x10] sm:$0xff] %v1416
  %1481 = vst [vmem:[%s4 + $0x18] sm:$0xff] %v1417
  %1482 = vst [vmem:[%s4 + $0x20] sm:$0xff] %v1418
  %1483 = vst [vmem:[%s4 + $0x28] sm:$0xff] %v1419
  %1484 = vst [vmem:[%s4 + $0x30] sm:$0xff] %v1420
  %1485 = vst [vmem:[%s4 + $0x38] sm:$0xff] %v1421
  %1486 = vst [vmem:[%s4 + $0x40] sm:$0xff] %v1422
  %1487 = vst [vmem:[%s4 + $0x48] sm:$0xff] %v1423
  %1488 = vst [vmem:[%s4 + $0x50] sm:$0xff] %v1424
  %1489 = vst [vmem:[%s4 + $0x58] sm:$0xff] %v1425
  %1490 = vst [vmem:[%s4 + $0x60] sm:$0xff] %v1426
  %1491 = vst [vmem:[%s4 + $0x68] sm:$0xff] %v1427
  %1492 = vst [vmem:[%s4 + $0x70] sm:$0xff] %v1428
  %1493 = vst [vmem:[%s4 + $0x78] sm:$0xff] %v1429
  %1494 = vst [vmem:[%s4 + $0x80] sm:$0xff] %v1430
  %1495 = vst [vmem:[%s4 + $0x88] sm:$0xff] %v1431
  %1496 = vst [vmem:[%s4 + $0x90] sm:$0xff] %v1432
  %1497 = vst [vmem:[%s4 + $0x98] sm:$0xff] %v1433
  %1498 = vst [vmem:[%s4 + $0xa0] sm:$0xff] %v1434
  %1499 = vst [vmem:[%s4 + $0xa8] sm:$0xff] %v1435
  %1500 = vst [vmem:[%s4 + $0xb0] sm:$0xff] %v1436
  %1501 = vst [vmem:[%s4 + $0xb8] sm:$0xff] %v1437
  %1502 = vst [vmem:[%s4 + $0xc0] sm:$0xff] %v1438
  %1503 = vst [vmem:[%s4 + $0xc8] sm:$0xff] %v1439
  %1504 = vst [vmem:[%s4 + $0xd0] sm:$0xff] %v1440
  %1505 = vst [vmem:[%s4 + $0xd8] sm:$0xff] %v1441
  %1506 = vst [vmem:[%s4 + $0xe0] sm:$0xff] %v1442
  %1507 = vst [vmem:[%s4 + $0xe8] sm:$0xff] %v1443
  %1508 = vst [vmem:[%s4 + $0xf0] sm:$0xff] %v1444
  %1509 = vst [vmem:[%s4 + $0xf8] sm:$0xff] %v1445
  %1510 = vst [vmem:[%s4 + $0x100] sm:$0xff] %v1446
  %1511 = vst [vmem:[%s4 + $0x108] sm:$0xff] %v1447
  %1512 = vst [vmem:[%s4 + $0x110] sm:$0xff] %v1448
  %1513 = vst [vmem:[%s4 + $0x118] sm:$0xff] %v1449
  %1514 = vst [vmem:[%s4 + $0x120] sm:$0xff] %v1450
  %1515 = vst [vmem:[%s4 + $0x128] sm:$0xff] %v1451
  %1516 = vst [vmem:[%s4 + $0x130] sm:$0xff] %v1452
  %1517 = vst [vmem:[%s4 + $0x138] sm:$0xff] %v1453
  %1518 = vst [vmem:[%s4 + $0x140] sm:$0xff] %v1454
  %1519 = vst [vmem:[%s4 + $0x148] sm:$0xff] %v1455
  %1520 = vst [vmem:[%s4 + $0x150] sm:$0xff] %v1456
  %1521 = vst [vmem:[%s4 + $0x158] sm:$0xff] %v1457
  %1522 = vst [vmem:[%s4 + $0x160] sm:$0xff] %v1458
  %1523 = vst [vmem:[%s4 + $0x168] sm:$0xff] %v1459
  %1524 = vst [vmem:[%s4 + $0x170] sm:$0xff] %v1460
  %1525 = vst [vmem:[%s4 + $0x178] sm:$0xff] %v1461
  %1526 = vst [vmem:[%s4 + $0x180] sm:$0xff] %v1462
  %1527 = vst [vmem:[%s4 + $0x188] sm:$0xff] %v1463
  %1528 = vst [vmem:[%s4 + $0x190] sm:$0xff] %v1464
  %1529 = vst [vmem:[%s4 + $0x198] sm:$0xff] %v1465
  %1530 = vst [vmem:[%s4 + $0x1a0] sm:$0xff] %v1466
  %1531 = vst [vmem:[%s4 + $0x1a8] sm:$0xff] %v1467
  %1532 = vst [vmem:[%s4 + $0x1b0] sm:$0xff] %v1468
  %1533 = vst [vmem:[%s4 + $0x1b8] sm:$0xff] %v1469
  %1534 = vst [vmem:[%s4 + $0x1c0] sm:$0xff] %v1470
  %1535 = vst [vmem:[%s4 + $0x1c8] sm:$0xff] %v1471
  %1536 = vst [vmem:[%s4 + $0x1d0] sm:$0xff] %v1472
  %1537 = vst [vmem:[%s4 + $0x1d8] sm:$0xff] %v1473
  %1538 = vst [vmem:[%s4 + $0x1e0] sm:$0xff] %v1474
  %1539 = vst [vmem:[%s4 + $0x1e8] sm:$0xff] %v1475
  %1540 = vst [vmem:[%s4 + $0x1f0] sm:$0xff] %v1476
  %1541 = vst [vmem:[%s4 + $0x1f8] sm:$0xff] %v1477
  // Predicated region
  $region18: #{lightgcn_forward.11} parent=0 // pred_check
    _
  $region19: #{lightgcn_forward.11} parent=0 // pred_check_branch
    %1543 = sbr.rel (0) target = $region21
  $region20: #{lightgcn_forward.11} parent=0 // pred_region
    _
  $region21: #{lightgcn_forward.11} parent=0 // pred_fallthru
    _
  // Predicated region
  $region22: #{lightgcn_forward.11} parent=0 // pred_check
    _
  $region23: #{lightgcn_forward.11} parent=0 // pred_check_branch
    %1545 = sbr.rel (0) target = $region25
  $region24: #{lightgcn_forward.11} parent=0 // pred_region
    _
  $region25: #{lightgcn_forward.11} parent=0 // pred_fallthru
    _

</llo_original>
